<compile_context>
chip_gen: v6e
topology: v6e:2x2x1
jax: 0.10.0
libtpu: 0.0.40
codegen_flags: <defaults>
</compile_context>

<pallas_src>
import functools

import jax
import jax.numpy as jnp
from jax import lax
from jax.experimental import pallas as pl
from jax.experimental.pallas import tpu as pltpu


def _round_up(x, m):
    return ((x + m - 1) // m) * m


def _conv_block_kernel(x_ref, w1_ref, w2_ref, z_ref, stats_ref, ypad_ref, *, stride):
    """Fused conv1(3x3,s1,p1) -> conv2(3x3,s=stride,p1) + partial BN stats.

    x_ref    : (1, H+4, W+4, Cpi)  bf16  one image, zero-padded by 2, lane-padded channels
    w1_ref   : (9*Cpi, Cpi)        bf16  conv1 weights, im2col layout (kh,kw,cin)-major
    w2_ref   : (9*Cpi, Cpo)        bf16  conv2 weights, im2col layout
    z_ref    : (1, Ho, Wo, Cpo)    bf16  conv2 output (pre-BN)
    stats_ref: (1, 8, Cpo)         f32   row0 = per-channel sum, row1 = per-channel sumsq
    ypad_ref : (H+2, W+2, Cpi)     bf16  scratch: conv1 output with 1-pixel zero halo
    """
    _, hp4, wp4, cpi = x_ref.shape
    H, W = hp4 - 4, wp4 - 4
    _, Ho, Wo, cpo = z_ref.shape

    xp = x_ref[0]                                         # (H+4, W+4, Cpi) bf16

    # ---- conv1: single im2col matmul (K = 9*Cpi) --------------------------------
    # conv1 out (r,c), tap (kh,kw) reads xpad[r+kh+1, c+kw+1]
    cols1 = [xp[1 + kh:1 + kh + H, 1 + kw:1 + kw + W, :]
             for kh in range(3) for kw in range(3)]
    patches1 = jnp.concatenate(cols1, axis=-1).reshape(H * W, 9 * cpi)
    y = jnp.dot(patches1, w1_ref[...], preferred_element_type=jnp.float32)
    yb = y.reshape(H, W, cpi).astype(jnp.bfloat16)

    # conv1 output with a 1-pixel zero halo: store interior, zero only the halo ring.
    ypad_ref[1:1 + H, 1:1 + W, :] = yb
    zrow = jnp.zeros((1, W + 2, cpi), jnp.bfloat16)
    zcol = jnp.zeros((H + 2, 1, cpi), jnp.bfloat16)
    ypad_ref[0:1, :, :] = zrow
    ypad_ref[H + 1:H + 2, :, :] = zrow
    ypad_ref[:, 0:1, :] = zcol
    ypad_ref[:, W + 1:W + 2, :] = zcol

    # ---- conv2: single im2col matmul, stride handled on the Ref read ------------
    cols2 = []
    for kh in range(3):
        for kw in range(3):
            if stride == 1:
                p = ypad_ref[kh:kh + Ho, kw:kw + Wo, :]
            else:
                p = ypad_ref[pl.ds(kh, Ho, stride=stride),
                             pl.ds(kw, Wo, stride=stride), :]
            cols2.append(p)
    patches2 = jnp.concatenate(cols2, axis=-1).reshape(Ho * Wo, 9 * cpi)
    z = jnp.dot(patches2, w2_ref[...], preferred_element_type=jnp.float32)  # f32

    # ---- partial BN statistics for this image (summed over pixels, per channel) --
    s1 = jnp.sum(z, axis=0, keepdims=True)                # (1, Cpo)
    s2 = jnp.sum(z * z, axis=0, keepdims=True)            # (1, Cpo)
    stats_ref[0] = jnp.concatenate(
        [s1, s2, jnp.zeros((6, cpo), jnp.float32)], axis=0)

    z_ref[0] = z.reshape(Ho, Wo, cpo).astype(jnp.bfloat16)


def _bn_relu_kernel(z_ref, scale_ref, shift_ref, o_ref):
    """Elementwise (z * scale + shift) -> ReLU with per-channel scale/shift."""
    z = z_ref[...].astype(jnp.float32)
    o_ref[...] = jnp.maximum(z * scale_ref[...] + shift_ref[...], 0.0)


@functools.partial(jax.jit, static_argnames=("stride", "eps"))
def basic_block_forward(x_nchw, w1, w2, gamma, beta, *, stride=1, eps=1e-5):
    """x_nchw: (N, Cin, H, W) f32; w1: (3,3,Cin,Cin) HWIO; w2: (3,3,Cin,Cout) HWIO.
    Returns (N, Cout, Ho, Wo) f32, matching BasicBlock.forward (training-mode BN)."""
    N, Cin, H, W = x_nchw.shape
    Cout = w2.shape[-1]
    Ho = (H + 2 - 3) // stride + 1
    Wo = (W + 2 - 3) // stride + 1
    Cpi = _round_up(Cin, 128)           # lane-padded channel widths
    Cpo = _round_up(Cout, 128)

    # ---- glue: NHWC, bf16, lane padding, 2-pixel spatial halo ----
    x = jnp.transpose(x_nchw, (0, 2, 3, 1)).astype(jnp.bfloat16)
    xpad = jnp.pad(x, ((0, 0), (2, 2), (2, 2), (0, Cpi - Cin)))

    w1p = jnp.pad(w1.astype(jnp.bfloat16),
                  ((0, 0), (0, 0), (0, Cpi - Cin), (0, Cpi - Cin))
                  ).reshape(9 * Cpi, Cpi)
    w2p = jnp.pad(w2.astype(jnp.bfloat16),
                  ((0, 0), (0, 0), (0, Cpi - Cin), (0, Cpo - Cout))
                  ).reshape(9 * Cpi, Cpo)

    # ---- kernel A: conv1 + conv2 + partial BN stats, pipelined over the batch ----
    z, stats = pl.pallas_call(
        functools.partial(_conv_block_kernel, stride=stride),
        out_shape=(jax.ShapeDtypeStruct((N, Ho, Wo, Cpo), jnp.bfloat16),
                   jax.ShapeDtypeStruct((N, 8, Cpo), jnp.float32)),
        grid=(N,),
        in_specs=[
            pl.BlockSpec((1, H + 4, W + 4, Cpi), lambda n: (n, 0, 0, 0)),
            pl.BlockSpec((9 * Cpi, Cpi), lambda n: (0, 0)),
            pl.BlockSpec((9 * Cpi, Cpo), lambda n: (0, 0)),
        ],
        out_specs=(
            pl.BlockSpec((1, Ho, Wo, Cpo), lambda n: (n, 0, 0, 0)),
            pl.BlockSpec((1, 8, Cpo), lambda n: (n, 0, 0)),
        ),
        scratch_shapes=[pltpu.VMEM((H + 2, W + 2, Cpi), jnp.bfloat16)],
        compiler_params=pltpu.CompilerParams(
            dimension_semantics=("parallel",),
            vmem_limit_bytes=48 * 1024 * 1024),
    )(xpad, w1p, w2p)

    # ---- global BN statistics (tiny per-channel math, plain JAX) ----
    count = N * Ho * Wo
    ssum = jnp.sum(stats[:, 0, :], axis=0)
    ssq = jnp.sum(stats[:, 1, :], axis=0)
    mean = ssum / count
    var = jnp.maximum(ssq / count - mean * mean, 0.0)     # biased (training-mode) var
    gamma_p = jnp.pad(gamma.astype(jnp.float32), (0, Cpo - Cout))
    beta_p = jnp.pad(beta.astype(jnp.float32), (0, Cpo - Cout))
    scale = gamma_p * lax.rsqrt(var + eps)
    shift = beta_p - mean * scale
    scale2 = scale.reshape(1, Cpo)
    shift2 = shift.reshape(1, Cpo)

    # ---- kernel B: normalize + affine + ReLU, tiled over batch and output rows ----
    TH = min(Ho, 256)
    out_full = pl.pallas_call(
        _bn_relu_kernel,
        out_shape=jax.ShapeDtypeStruct((N, Ho, Wo, Cpo), jnp.float32),
        grid=(N, pl.cdiv(Ho, TH)),
        in_specs=[
            pl.BlockSpec((1, TH, Wo, Cpo), lambda n, t: (n, t, 0, 0)),
            pl.BlockSpec((1, Cpo), lambda n, t: (0, 0)),
            pl.BlockSpec((1, Cpo), lambda n, t: (0, 0)),
        ],
        out_specs=pl.BlockSpec((1, TH, Wo, Cpo), lambda n, t: (n, t, 0, 0)),
        compiler_params=pltpu.CompilerParams(
            dimension_semantics=("parallel", "parallel"),
            vmem_limit_bytes=48 * 1024 * 1024),
    )(z, scale2, shift2)

    out = out_full[..., :Cout]                            # drop padded channels
    return jnp.transpose(out, (0, 3, 1, 2))               # back to NCHW


def _reference(x_nchw, w1, w2, gamma, beta, *, stride=1, eps=1e-5):
    """Pure-JAX f32 reference of BasicBlock.forward (training-mode BN)."""
    dn = ("NCHW", "HWIO", "NCHW")
    y = lax.conv_general_dilated(x_nchw, w1, (1, 1), ((1, 1), (1, 1)),
                                 dimension_numbers=dn)
    y = lax.conv_general_dilated(y, w2, (stride, stride), ((1, 1), (1, 1)),
                                 dimension_numbers=dn)
    mean = jnp.mean(y, axis=(0, 2, 3), keepdims=True)
    var = jnp.mean((y - mean) ** 2, axis=(0, 2, 3), keepdims=True)
    yn = (y - mean) / jnp.sqrt(var + eps)
    yn = yn * gamma.reshape(1, -1, 1, 1) + beta.reshape(1, -1, 1, 1)
    return jnp.maximum(yn, 0.0)


if __name__ == "__main__":
    # BasicBlock(inplanes=4, planes=8, stride=1) at small shapes.
    N, Cin, Cout, H, W = 2, 4, 8, 16, 16
    stride = 1

    key = jax.random.PRNGKey(0)
    kx, k1, k2, kg, kb = jax.random.split(key, 5)
    x = jax.random.normal(kx, (N, Cin, H, W), dtype=jnp.float32)
    w1 = jax.random.normal(k1, (3, 3, Cin, Cin), dtype=jnp.float32) * 0.1   # HWIO
    w2 = jax.random.normal(k2, (3, 3, Cin, Cout), dtype=jnp.float32) * 0.1  # HWIO
    gamma = 1.0 + 0.1 * jax.random.normal(kg, (Cout,), dtype=jnp.float32)
    beta = 0.05 * jax.random.normal(kb, (Cout,), dtype=jnp.float32)

    out = basic_block_forward(x, w1, w2, gamma, beta, stride=stride)
    out = jax.block_until_ready(out)

    ref = _reference(x, w1, w2, gamma, beta, stride=stride)
    assert out.shape == ref.shape == (N, Cout, H // stride, W // stride)
    # bf16 MXU operands (f32 accumulation) -> compare with bf16-level tolerance.
    assert jnp.allclose(out, ref, atol=3e-2, rtol=3e-2), "mismatch vs reference"

    print("KERNEL_OK")
</pallas_src>

<mosaic_0001>
module attributes {stable_mosaic.version = 11 : i64} {
  func.func @_conv_block_kernel(%arg0: i32, %arg1: memref<1x20x20x128xbf16, #tpu.memory_space<vmem>>, %arg2: memref<1152x128xbf16, #tpu.memory_space<vmem>>, %arg3: memref<1152x128xbf16, #tpu.memory_space<vmem>>, %arg4: memref<1x16x16x128xbf16, #tpu.memory_space<vmem>>, %arg5: memref<1x8x128xf32, #tpu.memory_space<vmem>>, %arg6: memref<18x18x128xbf16, #tpu.memory_space<vmem>>) attributes {dimension_semantics = [#tpu.dimension_semantics<parallel>], iteration_bounds = array<i64: 2>, scalar_prefetch = 0 : i64, scratch_operands = 1 : i64, tpu.core_type = #tpu.core_type<tc>, window_params = [{transform_indices = @transform_0, window_bounds = array<i64: 1, 20, 20, 128>}, {pipeline_mode = #tpu.pipeline_mode<synchronous>, transform_indices = @transform_1, window_bounds = array<i64: 1152, 128>}, {pipeline_mode = #tpu.pipeline_mode<synchronous>, transform_indices = @transform_2, window_bounds = array<i64: 1152, 128>}, {transform_indices = @transform_3, window_bounds = array<i64: 1, 16, 16, 128>}, {transform_indices = @transform_4, window_bounds = array<i64: 1, 8, 128>}]} {
    %c0 = arith.constant 0 : index
    %c0_0 = arith.constant 0 : index
    %c0_1 = arith.constant 0 : index
    %c0_2 = arith.constant 0 : index
    %0 = vector.load %arg1[%c0, %c0_0, %c0_1, %c0_2] : memref<1x20x20x128xbf16, #tpu.memory_space<vmem>>, vector<1x20x20x128xbf16>
    %1 = vector.shape_cast %0 : vector<1x20x20x128xbf16> to vector<20x20x128xbf16>
    %2 = vector.extract_strided_slice %1 {offsets = [1, 1, 0], sizes = [16, 16, 128], strides = [1, 1, 1]} : vector<20x20x128xbf16> to vector<16x16x128xbf16>
    %3 = vector.extract_strided_slice %1 {offsets = [1, 2, 0], sizes = [16, 16, 128], strides = [1, 1, 1]} : vector<20x20x128xbf16> to vector<16x16x128xbf16>
    %4 = vector.extract_strided_slice %1 {offsets = [1, 3, 0], sizes = [16, 16, 128], strides = [1, 1, 1]} : vector<20x20x128xbf16> to vector<16x16x128xbf16>
    %5 = vector.extract_strided_slice %1 {offsets = [2, 1, 0], sizes = [16, 16, 128], strides = [1, 1, 1]} : vector<20x20x128xbf16> to vector<16x16x128xbf16>
    %6 = vector.extract_strided_slice %1 {offsets = [2, 2, 0], sizes = [16, 16, 128], strides = [1, 1, 1]} : vector<20x20x128xbf16> to vector<16x16x128xbf16>
    %7 = vector.extract_strided_slice %1 {offsets = [2, 3, 0], sizes = [16, 16, 128], strides = [1, 1, 1]} : vector<20x20x128xbf16> to vector<16x16x128xbf16>
    %8 = vector.extract_strided_slice %1 {offsets = [3, 1, 0], sizes = [16, 16, 128], strides = [1, 1, 1]} : vector<20x20x128xbf16> to vector<16x16x128xbf16>
    %9 = vector.extract_strided_slice %1 {offsets = [3, 2, 0], sizes = [16, 16, 128], strides = [1, 1, 1]} : vector<20x20x128xbf16> to vector<16x16x128xbf16>
    %10 = vector.extract_strided_slice %1 {offsets = [3, 3, 0], sizes = [16, 16, 128], strides = [1, 1, 1]} : vector<20x20x128xbf16> to vector<16x16x128xbf16>
    %11 = tpu.concatenate %2, %3, %4, %5, %6, %7, %8, %9, %10 in 2 : vector<16x16x128xbf16>, vector<16x16x128xbf16>, vector<16x16x128xbf16>, vector<16x16x128xbf16>, vector<16x16x128xbf16>, vector<16x16x128xbf16>, vector<16x16x128xbf16>, vector<16x16x128xbf16>, vector<16x16x128xbf16> -> vector<16x16x1152xbf16>
    %12 = vector.shape_cast %11 : vector<16x16x1152xbf16> to vector<256x1152xbf16>
    %c0_3 = arith.constant 0 : index
    %c0_4 = arith.constant 0 : index
    %13 = vector.load %arg2[%c0_3, %c0_4] : memref<1152x128xbf16, #tpu.memory_space<vmem>>, vector<1152x128xbf16>
    %cst = arith.constant dense<0.000000e+00> : vector<256x128xf32>
    %14 = tpu.matmul %12, %13, %cst {dimension_numbers = #tpu.dot_dimension_numbers<[1], [0], [0], [1], [0, 0, 1, 1], [], []>} : vector<256x1152xbf16>, vector<1152x128xbf16>, vector<256x128xf32> -> vector<256x128xf32>
    %15 = vector.shape_cast %14 : vector<256x128xf32> to vector<16x16x128xf32>
    %16 = arith.truncf %15 : vector<16x16x128xf32> to vector<16x16x128xbf16>
    %c1 = arith.constant 1 : index
    %c1_5 = arith.constant 1 : index
    %c0_6 = arith.constant 0 : index
    %17 = vector.load %arg6[%c1, %c1_5, %c0_6] : memref<18x18x128xbf16, #tpu.memory_space<vmem>>, vector<16x16x128xbf16>
    tpu.vector_store %arg6[%c1, %c1_5, %c0_6], %16 {strides = array<i32>} : memref<18x18x128xbf16, #tpu.memory_space<vmem>>, vector<16x16x128xbf16>,
    %cst_7 = arith.constant 0.000000e+00 : bf16
    %18 = vector.broadcast %cst_7 : bf16 to vector<1x18x128xbf16>
    %cst_8 = arith.constant 0.000000e+00 : bf16
    %19 = vector.broadcast %cst_8 : bf16 to vector<18x1x128xbf16>
    %c0_9 = arith.constant 0 : index
    %c0_10 = arith.constant 0 : index
    %c0_11 = arith.constant 0 : index
    %20 = vector.load %arg6[%c0_9, %c0_10, %c0_11] : memref<18x18x128xbf16, #tpu.memory_space<vmem>>, vector<1x18x128xbf16>
    tpu.vector_store %arg6[%c0_9, %c0_10, %c0_11], %18 {strides = array<i32>} : memref<18x18x128xbf16, #tpu.memory_space<vmem>>, vector<1x18x128xbf16>,
    %c17 = arith.constant 17 : index
    %c0_12 = arith.constant 0 : index
    %c0_13 = arith.constant 0 : index
    %21 = vector.load %arg6[%c17, %c0_12, %c0_13] : memref<18x18x128xbf16, #tpu.memory_space<vmem>>, vector<1x18x128xbf16>
    tpu.vector_store %arg6[%c17, %c0_12, %c0_13], %18 {strides = array<i32>} : memref<18x18x128xbf16, #tpu.memory_space<vmem>>, vector<1x18x128xbf16>,
    %c0_14 = arith.constant 0 : index
    %c0_15 = arith.constant 0 : index
    %c0_16 = arith.constant 0 : index
    %22 = vector.load %arg6[%c0_14, %c0_15, %c0_16] : memref<18x18x128xbf16, #tpu.memory_space<vmem>>, vector<18x1x128xbf16>
    tpu.vector_store %arg6[%c0_14, %c0_15, %c0_16], %19 {strides = array<i32>} : memref<18x18x128xbf16, #tpu.memory_space<vmem>>, vector<18x1x128xbf16>,
    %c0_17 = arith.constant 0 : index
    %c17_18 = arith.constant 17 : index
    %c0_19 = arith.constant 0 : index
    %23 = vector.load %arg6[%c0_17, %c17_18, %c0_19] : memref<18x18x128xbf16, #tpu.memory_space<vmem>>, vector<18x1x128xbf16>
    tpu.vector_store %arg6[%c0_17, %c17_18, %c0_19], %19 {strides = array<i32>} : memref<18x18x128xbf16, #tpu.memory_space<vmem>>, vector<18x1x128xbf16>,
    %c0_20 = arith.constant 0 : index
    %c0_21 = arith.constant 0 : index
    %c0_22 = arith.constant 0 : index
    %24 = vector.load %arg6[%c0_20, %c0_21, %c0_22] : memref<18x18x128xbf16, #tpu.memory_space<vmem>>, vector<16x16x128xbf16>
    %c0_23 = arith.constant 0 : index
    %c1_24 = arith.constant 1 : index
    %c0_25 = arith.constant 0 : index
    %25 = vector.load %arg6[%c0_23, %c1_24, %c0_25] : memref<18x18x128xbf16, #tpu.memory_space<vmem>>, vector<16x16x128xbf16>
    %c0_26 = arith.constant 0 : index
    %c2 = arith.constant 2 : index
    %c0_27 = arith.constant 0 : index
    %26 = vector.load %arg6[%c0_26, %c2, %c0_27] : memref<18x18x128xbf16, #tpu.memory_space<vmem>>, vector<16x16x128xbf16>
    %c1_28 = arith.constant 1 : index
    %c0_29 = arith.constant 0 : index
    %c0_30 = arith.constant 0 : index
    %27 = vector.load %arg6[%c1_28, %c0_29, %c0_30] : memref<18x18x128xbf16, #tpu.memory_space<vmem>>, vector<16x16x128xbf16>
    %c1_31 = arith.constant 1 : index
    %c1_32 = arith.constant 1 : index
    %c0_33 = arith.constant 0 : index
    %28 = vector.load %arg6[%c1_31, %c1_32, %c0_33] : memref<18x18x128xbf16, #tpu.memory_space<vmem>>, vector<16x16x128xbf16>
    %c1_34 = arith.constant 1 : index
    %c2_35 = arith.constant 2 : index
    %c0_36 = arith.constant 0 : index
    %29 = vector.load %arg6[%c1_34, %c2_35, %c0_36] : memref<18x18x128xbf16, #tpu.memory_space<vmem>>, vector<16x16x128xbf16>
    %c2_37 = arith.constant 2 : index
    %c0_38 = arith.constant 0 : index
    %c0_39 = arith.constant 0 : index
    %30 = vector.load %arg6[%c2_37, %c0_38, %c0_39] : memref<18x18x128xbf16, #tpu.memory_space<vmem>>, vector<16x16x128xbf16>
    %c2_40 = arith.constant 2 : index
    %c1_41 = arith.constant 1 : index
    %c0_42 = arith.constant 0 : index
    %31 = vector.load %arg6[%c2_40, %c1_41, %c0_42] : memref<18x18x128xbf16, #tpu.memory_space<vmem>>, vector<16x16x128xbf16>
    %c2_43 = arith.constant 2 : index
    %c2_44 = arith.constant 2 : index
    %c0_45 = arith.constant 0 : index
    %32 = vector.load %arg6[%c2_43, %c2_44, %c0_45] : memref<18x18x128xbf16, #tpu.memory_space<vmem>>, vector<16x16x128xbf16>
    %33 = tpu.concatenate %24, %25, %26, %27, %28, %29, %30, %31, %32 in 2 : vector<16x16x128xbf16>, vector<16x16x128xbf16>, vector<16x16x128xbf16>, vector<16x16x128xbf16>, vector<16x16x128xbf16>, vector<16x16x128xbf16>, vector<16x16x128xbf16>, vector<16x16x128xbf16>, vector<16x16x128xbf16> -> vector<16x16x1152xbf16>
    %34 = vector.shape_cast %33 : vector<16x16x1152xbf16> to vector<256x1152xbf16>
    %c0_46 = arith.constant 0 : index
    %c0_47 = arith.constant 0 : index
    %35 = vector.load %arg3[%c0_46, %c0_47] : memref<1152x128xbf16, #tpu.memory_space<vmem>>, vector<1152x128xbf16>
    %cst_48 = arith.constant dense<0.000000e+00> : vector<256x128xf32>
    %36 = tpu.matmul %34, %35, %cst_48 {dimension_numbers = #tpu.dot_dimension_numbers<[1], [0], [0], [1], [0, 0, 1, 1], [], []>} : vector<256x1152xbf16>, vector<1152x128xbf16>, vector<256x128xf32> -> vector<256x128xf32>
    %cst_49 = arith.constant dense<0.000000e+00> : vector<128xf32>
    %37 = vector.multi_reduction <add>, %36, %cst_49 [0] : vector<256x128xf32> to vector<128xf32>
    %38 = vector.shape_cast %37 : vector<128xf32> to vector<1x128xf32>
    %39 = arith.mulf %36, %36 : vector<256x128xf32>
    %cst_50 = arith.constant dense<0.000000e+00> : vector<128xf32>
    %40 = vector.multi_reduction <add>, %39, %cst_50 [0] : vector<256x128xf32> to vector<128xf32>
    %41 = vector.shape_cast %40 : vector<128xf32> to vector<1x128xf32>
    %cst_51 = arith.constant 0.000000e+00 : f32
    %42 = vector.broadcast %cst_51 : f32 to vector<6x128xf32>
    %43 = tpu.concatenate %38, %41, %42 in 0 : vector<1x128xf32>, vector<1x128xf32>, vector<6x128xf32> -> vector<8x128xf32>
    %c0_52 = arith.constant 0 : index
    %c0_53 = arith.constant 0 : index
    %c0_54 = arith.constant 0 : index
    %44 = vector.load %arg5[%c0_52, %c0_53, %c0_54] : memref<1x8x128xf32, #tpu.memory_space<vmem>>, vector<1x8x128xf32>
    %45 = vector.shape_cast %44 : vector<1x8x128xf32> to vector<8x128xf32>
    %46 = vector.shape_cast %43 : vector<8x128xf32> to vector<1x8x128xf32>
    tpu.vector_store %arg5[%c0_52, %c0_53, %c0_54], %46 {strides = array<i32>} : memref<1x8x128xf32, #tpu.memory_space<vmem>>, vector<1x8x128xf32>,
    %47 = vector.shape_cast %36 : vector<256x128xf32> to vector<16x16x128xf32>
    %48 = arith.truncf %47 : vector<16x16x128xf32> to vector<16x16x128xbf16>
    %c0_55 = arith.constant 0 : index
    %c0_56 = arith.constant 0 : index
    %c0_57 = arith.constant 0 : index
    %c0_58 = arith.constant 0 : index
    %49 = vector.load %arg4[%c0_55, %c0_56, %c0_57, %c0_58] : memref<1x16x16x128xbf16, #tpu.memory_space<vmem>>, vector<1x16x16x128xbf16>
    %50 = vector.shape_cast %49 : vector<1x16x16x128xbf16> to vector<16x16x128xbf16>
    %51 = vector.shape_cast %48 : vector<16x16x128xbf16> to vector<1x16x16x128xbf16>
    tpu.vector_store %arg4[%c0_55, %c0_56, %c0_57, %c0_58], %51 {strides = array<i32>} : memref<1x16x16x128xbf16, #tpu.memory_space<vmem>>, vector<1x16x16x128xbf16>,
    return
  }
  func.func @transform_0(%arg0: i32) -> (i32, i32, i32, i32) {
    %c0_i32 = arith.constant 0 : i32
    %c0_i32_0 = arith.constant 0 : i32
    %c0_i32_1 = arith.constant 0 : i32
    %c0_i32_2 = arith.constant 0 : i32
    return %arg0, %c0_i32, %c0_i32_0, %c0_i32_1 : i32, i32, i32, i32
  }
  func.func @transform_1(%arg0: i32) -> (i32, i32) {
    %c0_i32 = arith.constant 0 : i32
    %c0_i32_0 = arith.constant 0 : i32
    %c0_i32_1 = arith.constant 0 : i32
    return %c0_i32, %c0_i32_0 : i32, i32
  }
  func.func @transform_2(%arg0: i32) -> (i32, i32) {
    %c0_i32 = arith.constant 0 : i32
    %c0_i32_0 = arith.constant 0 : i32
    %c0_i32_1 = arith.constant 0 : i32
    return %c0_i32, %c0_i32_0 : i32, i32
  }
  func.func @transform_3(%arg0: i32) -> (i32, i32, i32, i32) {
    %c0_i32 = arith.constant 0 : i32
    %c0_i32_0 = arith.constant 0 : i32
    %c0_i32_1 = arith.constant 0 : i32
    %c0_i32_2 = arith.constant 0 : i32
    return %arg0, %c0_i32, %c0_i32_0, %c0_i32_1 : i32, i32, i32, i32
  }
  func.func @transform_4(%arg0: i32) -> (i32, i32, i32) {
    %c0_i32 = arith.constant 0 : i32
    %c0_i32_0 = arith.constant 0 : i32
    %c0_i32_1 = arith.constant 0 : i32
    return %arg0, %c0_i32, %c0_i32_0 : i32, i32, i32
  }
}

module attributes {stable_mosaic.version = 11 : i64} {
  func.func @_bn_relu_kernel(%arg0: i32, %arg1: i32, %arg2: memref<1x16x16x128xbf16, #tpu.memory_space<vmem>>, %arg3: memref<1x128xf32, #tpu.memory_space<vmem>>, %arg4: memref<1x128xf32, #tpu.memory_space<vmem>>, %arg5: memref<1x16x16x128xf32, #tpu.memory_space<vmem>>) attributes {dimension_semantics = [#tpu.dimension_semantics<parallel>, #tpu.dimension_semantics<parallel>], iteration_bounds = array<i64: 2, 1>, scalar_prefetch = 0 : i64, scratch_operands = 0 : i64, tpu.core_type = #tpu.core_type<tc>, window_params = [{transform_indices = @transform_0, window_bounds = array<i64: 1, 16, 16, 128>}, {pipeline_mode = #tpu.pipeline_mode<synchronous>, transform_indices = @transform_1, window_bounds = array<i64: 1, 128>}, {pipeline_mode = #tpu.pipeline_mode<synchronous>, transform_indices = @transform_2, window_bounds = array<i64: 1, 128>}, {transform_indices = @transform_3, window_bounds = array<i64: 1, 16, 16, 128>}]} {
    %c0 = arith.constant 0 : index
    %c0_0 = arith.constant 0 : index
    %c0_1 = arith.constant 0 : index
    %c0_2 = arith.constant 0 : index
    %0 = vector.load %arg2[%c0, %c0_0, %c0_1, %c0_2] : memref<1x16x16x128xbf16, #tpu.memory_space<vmem>>, vector<1x16x16x128xbf16>
    %1 = arith.extf %0 : vector<1x16x16x128xbf16> to vector<1x16x16x128xf32>
    %c0_3 = arith.constant 0 : index
    %c0_4 = arith.constant 0 : index
    %2 = vector.load %arg3[%c0_3, %c0_4] : memref<1x128xf32, #tpu.memory_space<vmem>>, vector<1x128xf32>
    %3 = vector.shape_cast %2 : vector<1x128xf32> to vector<1x1x1x128xf32>
    %4 = vector.broadcast %3 : vector<1x1x1x128xf32> to vector<1x16x16x128xf32>
    %5 = arith.mulf %1, %4 : vector<1x16x16x128xf32>
    %c0_5 = arith.constant 0 : index
    %c0_6 = arith.constant 0 : index
    %6 = vector.load %arg4[%c0_5, %c0_6] : memref<1x128xf32, #tpu.memory_space<vmem>>, vector<1x128xf32>
    %7 = vector.shape_cast %6 : vector<1x128xf32> to vector<1x1x1x128xf32>
    %8 = vector.broadcast %7 : vector<1x1x1x128xf32> to vector<1x16x16x128xf32>
    %9 = arith.addf %5, %8 : vector<1x16x16x128xf32>
    %cst = arith.constant 0.000000e+00 : f32
    %10 = vector.broadcast %cst : f32 to vector<1x16x16x128xf32>
    %11 = arith.maximumf %9, %10 : vector<1x16x16x128xf32>
    %c0_7 = arith.constant 0 : index
    %c0_8 = arith.constant 0 : index
    %c0_9 = arith.constant 0 : index
    %c0_10 = arith.constant 0 : index
    %12 = vector.load %arg5[%c0_7, %c0_8, %c0_9, %c0_10] : memref<1x16x16x128xf32, #tpu.memory_space<vmem>>, vector<1x16x16x128xf32>
    tpu.vector_store %arg5[%c0_7, %c0_8, %c0_9, %c0_10], %11 {strides = array<i32>} : memref<1x16x16x128xf32, #tpu.memory_space<vmem>>, vector<1x16x16x128xf32>,
    return
  }
  func.func @transform_0(%arg0: i32, %arg1: i32) -> (i32, i32, i32, i32) {
    %c0_i32 = arith.constant 0 : i32
    %c0_i32_0 = arith.constant 0 : i32
    %c0_i32_1 = arith.constant 0 : i32
    return %arg0, %arg1, %c0_i32, %c0_i32_0 : i32, i32, i32, i32
  }
  func.func @transform_1(%arg0: i32, %arg1: i32) -> (i32, i32) {
    %c0_i32 = arith.constant 0 : i32
    %c0_i32_0 = arith.constant 0 : i32
    %c0_i32_1 = arith.constant 0 : i32
    return %c0_i32, %c0_i32_0 : i32, i32
  }
  func.func @transform_2(%arg0: i32, %arg1: i32) -> (i32, i32) {
    %c0_i32 = arith.constant 0 : i32
    %c0_i32_0 = arith.constant 0 : i32
    %c0_i32_1 = arith.constant 0 : i32
    return %c0_i32, %c0_i32_0 : i32, i32
  }
  func.func @transform_3(%arg0: i32, %arg1: i32) -> (i32, i32, i32, i32) {
    %c0_i32 = arith.constant 0 : i32
    %c0_i32_0 = arith.constant 0 : i32
    %c0_i32_1 = arith.constant 0 : i32
    return %arg0, %arg1, %c0_i32, %c0_i32_0 : i32, i32, i32, i32
  }
}

</mosaic_0001>

<llo_original>
// kernel: basic_block_forward.3
$region0: #{basic_block_forward.3}
  #allocation0 [shape = 'u32[]', space=smem, size = 0x4, offset = 0x4, fixed_abs, tag = 'smem constant byte address 0x4 - core index']
  #allocation1 [shape = 'u32[144,128]{1,0:T(1,128)}', space=vmem, size = 0x12000, scoped, tag = 'internal scratch']
  %s0 = inlined_call_operand.vmem [shape: bf16[2,16,16,128], index: 0, kind: input, shape index: {}]
  %s1 = inlined_call_operand.vmem [shape: f32[1,128], index: 1, kind: input, shape index: {}]
  %s2 = inlined_call_operand.vmem [shape: f32[1,128], index: 2, kind: input, shape index: {}]
  %s3 = inlined_call_operand.vmem [shape: f32[2,16,16,128], index: 3, kind: output, shape index: {}]
  %s4 = sld [smem:[#allocation0]]
  $region45: #{basic_block_forward.3} parent=0
    _
  %s6 = ssub.s32 1, %s4
  %s7 = scalar_select 0, %s6, %s4
  loop: start=0, step=1, limit=4
  $region2: #{basic_block_forward.3} parent=0 // loop_pre_header
    _
  $region3: #{basic_block_forward.3} parent=0 // loop_header
    %s9 = sphi 0, %s13
    %p10 = scmp.ge.s32.totalorder %s9, 4
    %s16 = sphi 0, %s28
    %s17 = sphi 0, %s24
    %s18 = sphi 0, %s16
    %s19 = sphi 0, %s17
    %s20 = sphi 0, %s18
    %s21 = sphi 0, %s19
    %s33 = sphi 0, %s35
    %s36 = sphi 0, %s33
    %s37 = sphi 0, %s36
    %s53 = sphi 0, %s37
    %s57 = sphi 0, %s57
    %s59 = sphi 0, %s57
    %s60 = sphi 0, %s59
    %s74 = sphi 0, %s60
    %s78 = sphi 0, %s78
    %s80 = sphi 0, %s78
    %s81 = sphi 0, %s80
    %s95 = sphi 0, %s81
    %s103 = sphi 0, %s105
    %s106 = sphi 0, %s103
    %s107 = sphi 0, %s106
    %s123 = sphi 0, %s107
  $region4: #{basic_block_forward.3} parent=0 // loop_header_branch
    %12 = sbr.rel (%p10) target = $region8
  $region5: #{basic_block_forward.3} parent=0 // loop_body
    %s14 = ssub.s32 %s9, 1
    %s15 = ssub.s32 %s9, 2
    %s22 = sadd.s32 1, %s17
    %p23 = scmp.ge.s32.totalorder %s22, 1
    %s24 = scalar_select %p23, 0, %s22
    %s25 = sadd.s32 1, %s16
    %s26 = scalar_select %p23, %s25, %s16
    %p27 = scmp.ge.s32.totalorder %s26, 2
    %s28 = scalar_select %p27, 0, %s26
    %s29 = ssub.s32 %s16, %s28
    %s30 = ssub.s32 %s17, %s24
    %s31 = sor.u32 %s29, %s30
    %p32 = scmp.eq.s32.totalorder %s31, 0
    %s34 = sadd.s32 %s33, 1
    %s35 = scalar_select %p32, %s33, %s34
    %p38 = pneg %p32
    %p39 = scmp.eq.s32.totalorder %s9, 1
    %p40 = por %p38, %p39
    %p41 = scmp.ne.s32.totalorder %s33, %s36
    %p42 = scmp.eq.s32.totalorder %s9, 0
    %p43 = por %p41, %p42
    %p44 = scmp.ne.s32.totalorder %s33, %s36
    %p45 = scmp.eq.s32.totalorder %s14, 1
    %p46 = por %p44, %p45
    %p47 = scmp.ne.s32.totalorder %s36, %s37
    %p48 = scmp.eq.s32.totalorder %s14, 0
    %p49 = por %p47, %p48
    %p50 = scmp.ne.s32.totalorder %s36, %s37
    %p51 = scmp.eq.s32.totalorder %s15, 1
    %p52 = por %p50, %p51
    %p54 = scmp.ne.s32.totalorder %s37, %s53
    %p55 = scmp.eq.s32.totalorder %s15, 0
    %p56 = por %p54, %p55
    %s58 = sadd.s32 %s57, 1
    %p61 = scmp.eq.s32.totalorder %s9, 1
    %p62 = scmp.ne.s32.totalorder %s57, %s59
    %p63 = scmp.eq.s32.totalorder %s9, 0
    %p64 = por %p62, %p63
    %p65 = scmp.ne.s32.totalorder %s57, %s59
    %p66 = scmp.eq.s32.totalorder %s14, 1
    %p67 = por %p65, %p66
    %p68 = scmp.ne.s32.totalorder %s59, %s60
    %p69 = scmp.eq.s32.totalorder %s14, 0
    %p70 = por %p68, %p69
    %p71 = scmp.ne.s32.totalorder %s59, %s60
    %p72 = scmp.eq.s32.totalorder %s15, 1
    %p73 = por %p71, %p72
    %p75 = scmp.ne.s32.totalorder %s60, %s74
    %p76 = scmp.eq.s32.totalorder %s15, 0
    %p77 = por %p75, %p76
    %s79 = sadd.s32 %s78, 1
    %p82 = scmp.eq.s32.totalorder %s9, 1
    %p83 = scmp.ne.s32.totalorder %s78, %s80
    %p84 = scmp.eq.s32.totalorder %s9, 0
    %p85 = por %p83, %p84
    %p86 = scmp.ne.s32.totalorder %s78, %s80
    %p87 = scmp.eq.s32.totalorder %s14, 1
    %p88 = por %p86, %p87
    %p89 = scmp.ne.s32.totalorder %s80, %s81
    %p90 = scmp.eq.s32.totalorder %s14, 0
    %p91 = por %p89, %p90
    %p92 = scmp.ne.s32.totalorder %s80, %s81
    %p93 = scmp.eq.s32.totalorder %s15, 1
    %p94 = por %p92, %p93
    %p96 = scmp.ne.s32.totalorder %s81, %s95
    %p97 = scmp.eq.s32.totalorder %s15, 0
    %p98 = por %p96, %p97
    %s99 = ssub.s32 %s16, %s28
    %s100 = ssub.s32 %s17, %s24
    %s101 = sor.u32 %s99, %s100
    %p102 = scmp.eq.s32.totalorder %s101, 0
    %s104 = sadd.s32 %s103, 1
    %s105 = scalar_select %p102, %s103, %s104
    %p108 = pneg %p102
    %p109 = scmp.eq.s32.totalorder %s9, 1
    %p110 = por %p108, %p109
    %p111 = scmp.ne.s32.totalorder %s103, %s106
    %p112 = scmp.eq.s32.totalorder %s9, 0
    %p113 = por %p111, %p112
    %p114 = scmp.ne.s32.totalorder %s103, %s106
    %p115 = scmp.eq.s32.totalorder %s14, 1
    %p116 = por %p114, %p115
    %p117 = scmp.ne.s32.totalorder %s106, %s107
    %p118 = scmp.eq.s32.totalorder %s14, 0
    %p119 = por %p117, %p118
    %p120 = scmp.ne.s32.totalorder %s106, %s107
    %p121 = scmp.eq.s32.totalorder %s15, 1
    %p122 = por %p120, %p121
    %p124 = scmp.ne.s32.totalorder %s107, %s123
    %p125 = scmp.eq.s32.totalorder %s15, 0
    %p126 = por %p124, %p125
    %p127 = scmp.le.s32.totalorder 1, %s9
    %p128 = scmp.lt.s32.totalorder %s9, 3
    %p129 = pnand %p127, %p128
    %p130 = pneg %p129
    // Predicated region
    $region9: #{basic_block_forward.3} parent=5 // pred_check
      _
    $region10: #{basic_block_forward.3} parent=5 // pred_check_branch
      %132 = sbr.rel (%p129) target = $region12
    $region11: #{basic_block_forward.3} parent=5 // pred_region
      %s133 = ssub.s32 %s9, 1
      // Predicated region
      $region13: #{basic_block_forward.3} parent=11 // pred_check
        %p134 = pneg %p70
      $region14: #{basic_block_forward.3} parent=11 // pred_check_branch
        %136 = sbr.rel (%p134) target = $region16
      $region15: #{basic_block_forward.3} parent=11 // pred_region
        _
      $region16: #{basic_block_forward.3} parent=11 // pred_fallthru
        _
      // Predicated region
      $region17: #{basic_block_forward.3} parent=11 // pred_check
        %p137 = pneg %p91
      $region18: #{basic_block_forward.3} parent=11 // pred_check_branch
        %139 = sbr.rel (%p137) target = $region20
      $region19: #{basic_block_forward.3} parent=11 // pred_region
        _
      $region20: #{basic_block_forward.3} parent=11 // pred_fallthru
        _
    $region12: #{basic_block_forward.3} parent=5 // pred_fallthru
      _
    %p140 = scmp.lt.s32.totalorder %s9, 2
    // Predicated region
    $region21: #{basic_block_forward.3} parent=5 // pred_check
      %p141 = pneg %p140
    $region22: #{basic_block_forward.3} parent=5 // pred_check_branch
      %143 = sbr.rel (%p141) target = $region24
    $region23: #{basic_block_forward.3} parent=5 // pred_region
      // Predicated region
      $region25: #{basic_block_forward.3} parent=23 // pred_check
        %p144 = pneg %p43
      $region26: #{basic_block_forward.3} parent=23 // pred_check_branch
        %146 = sbr.rel (%p144) target = $region28
      $region27: #{basic_block_forward.3} parent=23 // pred_region
        %s147 = smul.u32 16, %s17
        %p148 = scmp.lt.s32.totalorder %s16, 1
        %s149 = scalar_select %p148, %s16, 1
        %p150 = scmp.lt.s32.totalorder %s147, 15
        %s151 = scalar_select %p150, %s147, 15
        %s152 = smul.addr %s151, 2
        %s153 = smul.addr %s149, 32
        %s154 = sadd.s32 %s152, %s153
        %s155 = smul.addr %s154, 4
        %s156 = scalar_lea.vmem %s0, %s155
        %s157 = smul.u32 16, %s17
      $region28: #{basic_block_forward.3} parent=23 // pred_fallthru
        _
    $region24: #{basic_block_forward.3} parent=5 // pred_fallthru
      _
    %p158 = scmp.le.s32.totalorder 1, %s9
    %p159 = scmp.lt.s32.totalorder %s9, 3
    %p160 = pnand %p158, %p159
    %p161 = pneg %p160
    // Predicated region
    $region29: #{basic_block_forward.3} parent=5 // pred_check
      _
    $region30: #{basic_block_forward.3} parent=5 // pred_check_branch
      %163 = sbr.rel (%p160) target = $region32
    $region31: #{basic_block_forward.3} parent=5 // pred_region
      %s164 = ssub.s32 %s9, 1
      %s165 = smul.u32 16, %s19
      %p166 = scmp.lt.s32.totalorder %s18, 1
      %s167 = scalar_select %p166, %s18, 1
      %p168 = scmp.lt.s32.totalorder %s165, 15
      %s169 = scalar_select %p168, %s165, 15
      %s170 = smul.addr %s169, 2
      %s171 = smul.addr %s167, 32
      %s172 = sadd.s32 %s170, %s171
      %s173 = smul.addr %s172, 4
      %s174 = scalar_lea.vmem %s0, %s173
      %p175 = pneg %p49
      %p176 = pneg %p46
      %p177 = pneg %p70
      %p178 = pneg %p67
      %p179 = pneg %p91
      %p180 = pneg %p88
      %p181 = pneg %p119
      %p182 = pneg %p116
      %s183 = smul.u32 16, %s19
      %p184 = scmp.lt.s32.totalorder %s18, 1
      %s185 = scalar_select %p184, %s18, 1
      %p186 = scmp.lt.s32.totalorder %s183, 15
      %s187 = scalar_select %p186, %s183, 15
      %s188 = smul.addr %s187, 2
      %s189 = smul.addr %s185, 32
      %s190 = sadd.s32 %s188, %s189
      %s191 = smul.addr %s190, 8
      %s192 = scalar_lea.vmem %s3, %s191
      %s193 = smul.u32 16, %s19
      %p194 = scmp.lt.s32.totalorder %s18, 1
      %s195 = scalar_select %p194, %s18, 1
      %p196 = scmp.lt.s32.totalorder %s193, 15
      %s197 = scalar_select %p196, %s193, 15
      %s198 = smul.addr %s197, 2
      %s199 = smul.addr %s195, 32
      %s200 = sadd.s32 %s198, %s199
      %s201 = smul.addr %s200, 4
      %s202 = scalar_lea.vmem %s0, %s201
      %s203 = smul.u32 16, %s19
      %s204 = smul.u32 16, %s19
      %p205 = scmp.lt.s32.totalorder %s18, 1
      %s206 = scalar_select %p205, %s18, 1
      %p207 = scmp.lt.s32.totalorder %s204, 15
      %s208 = scalar_select %p207, %s204, 15
      %s209 = smul.addr %s208, 2
      %s210 = smul.addr %s206, 32
      %s211 = sadd.s32 %s209, %s210
      %s212 = smul.addr %s211, 8
      %s213 = scalar_lea.vmem %s3, %s212
      %s214 = smul.u32 16, %s19
      %v215 = vld [vmem:[%s202] sm:$0xf]
      %v216 = vld [vmem:[%s202 + $0x4] sm:$0xf]
      %v217 = vld [vmem:[%s202 + $0x8] sm:$0xf]
      %v218 = vld [vmem:[%s202 + $0xc] sm:$0xf]
      %v219 = vld [vmem:[%s202 + $0x10] sm:$0xf]
      %v220 = vld [vmem:[%s202 + $0x14] sm:$0xf]
      %v221 = vld [vmem:[%s202 + $0x18] sm:$0xf]
      %v222 = vld [vmem:[%s202 + $0x1c] sm:$0xf]
      %v223 = vld [vmem:[%s202 + $0x20] sm:$0xf]
      %v224 = vld [vmem:[%s202 + $0x24] sm:$0xf]
      %v225 = vld [vmem:[%s202 + $0x28] sm:$0xf]
      %v226 = vld [vmem:[%s202 + $0x2c] sm:$0xf]
      %v227 = vld [vmem:[%s202 + $0x30] sm:$0xf]
      %v228 = vld [vmem:[%s202 + $0x34] sm:$0xf]
      %v229 = vld [vmem:[%s202 + $0x38] sm:$0xf]
      %v230 = vld [vmem:[%s202 + $0x3c] sm:$0xf]
      %v231 = vld [vmem:[%s202 + $0x40] sm:$0xf]
      %v232 = vld [vmem:[%s202 + $0x44] sm:$0xf]
      %v233 = vld [vmem:[%s202 + $0x48] sm:$0xf]
      %v234 = vld [vmem:[%s202 + $0x4c] sm:$0xf]
      %v235 = vld [vmem:[%s202 + $0x50] sm:$0xf]
      %v236 = vld [vmem:[%s202 + $0x54] sm:$0xf]
      %v237 = vld [vmem:[%s202 + $0x58] sm:$0xf]
      %v238 = vld [vmem:[%s202 + $0x5c] sm:$0xf]
      %v239 = vld [vmem:[%s202 + $0x60] sm:$0xf]
      %v240 = vld [vmem:[%s202 + $0x64] sm:$0xf]
      %v241 = vld [vmem:[%s202 + $0x68] sm:$0xf]
      %v242 = vld [vmem:[%s202 + $0x6c] sm:$0xf]
      %v243 = vld [vmem:[%s202 + $0x70] sm:$0xf]
      %v244 = vld [vmem:[%s202 + $0x74] sm:$0xf]
      %v245 = vld [vmem:[%s202 + $0x78] sm:$0xf]
      %v246 = vld [vmem:[%s202 + $0x7c] sm:$0xf]
      %v247 = vunpack.c.l.bf16 %v215
      %v248 = vunpack.c.l.bf16 %v216
      %v249 = vunpack.c.l.bf16 %v217
      %v250 = vunpack.c.l.bf16 %v218
      %v251 = vunpack.c.l.bf16 %v219
      %v252 = vunpack.c.l.bf16 %v220
      %v253 = vunpack.c.l.bf16 %v221
      %v254 = vunpack.c.l.bf16 %v222
      %v255 = vunpack.c.l.bf16 %v223
      %v256 = vunpack.c.l.bf16 %v224
      %v257 = vunpack.c.l.bf16 %v225
      %v258 = vunpack.c.l.bf16 %v226
      %v259 = vunpack.c.l.bf16 %v227
      %v260 = vunpack.c.l.bf16 %v228
      %v261 = vunpack.c.l.bf16 %v229
      %v262 = vunpack.c.l.bf16 %v230
      %v263 = vunpack.c.l.bf16 %v231
      %v264 = vunpack.c.l.bf16 %v232
      %v265 = vunpack.c.l.bf16 %v233
      %v266 = vunpack.c.l.bf16 %v234
      %v267 = vunpack.c.l.bf16 %v235
      %v268 = vunpack.c.l.bf16 %v236
      %v269 = vunpack.c.l.bf16 %v237
      %v270 = vunpack.c.l.bf16 %v238
      %v271 = vunpack.c.l.bf16 %v239
      %v272 = vunpack.c.l.bf16 %v240
      %v273 = vunpack.c.l.bf16 %v241
      %v274 = vunpack.c.l.bf16 %v242
      %v275 = vunpack.c.l.bf16 %v243
      %v276 = vunpack.c.l.bf16 %v244
      %v277 = vunpack.c.l.bf16 %v245
      %v278 = vunpack.c.l.bf16 %v246
      %v279 = vld [vmem:[%s1] sm:$0x1]
      %v281 = vlaneseq
      %v282 = vshrl.u32 %v281, 7
      %v283 = vsub.s32 0, %v282
      %v284 = vrot.slane %v279, %v283
      %v286 = vmul.f32 %v247, %v284
      %v287 = vmul.f32 %v248, %v284
      %v288 = vmul.f32 %v249, %v284
      %v289 = vmul.f32 %v250, %v284
      %v290 = vmul.f32 %v251, %v284
      %v291 = vmul.f32 %v252, %v284
      %v292 = vmul.f32 %v253, %v284
      %v293 = vmul.f32 %v254, %v284
      %v294 = vmul.f32 %v255, %v284
      %v295 = vmul.f32 %v256, %v284
      %v296 = vmul.f32 %v257, %v284
      %v297 = vmul.f32 %v258, %v284
      %v298 = vmul.f32 %v259, %v284
      %v299 = vmul.f32 %v260, %v284
      %v300 = vmul.f32 %v261, %v284
      %v301 = vmul.f32 %v262, %v284
      %v302 = vmul.f32 %v263, %v284
      %v303 = vmul.f32 %v264, %v284
      %v304 = vmul.f32 %v265, %v284
      %v305 = vmul.f32 %v266, %v284
      %v306 = vmul.f32 %v267, %v284
      %v307 = vmul.f32 %v268, %v284
      %v308 = vmul.f32 %v269, %v284
      %v309 = vmul.f32 %v270, %v284
      %v310 = vmul.f32 %v271, %v284
      %v311 = vmul.f32 %v272, %v284
      %v312 = vmul.f32 %v273, %v284
      %v313 = vmul.f32 %v274, %v284
      %v314 = vmul.f32 %v275, %v284
      %v315 = vmul.f32 %v276, %v284
      %v316 = vmul.f32 %v277, %v284
      %v317 = vmul.f32 %v278, %v284
      %v318 = vld [vmem:[%s2] sm:$0x1]
      %v320 = vlaneseq
      %v321 = vshrl.u32 %v320, 7
      %v322 = vsub.s32 0, %v321
      %v323 = vrot.slane %v318, %v322
      %v325 = vadd.f32 %v286, %v323
      %v326 = vadd.f32 %v287, %v323
      %v327 = vadd.f32 %v288, %v323
      %v328 = vadd.f32 %v289, %v323
      %v329 = vadd.f32 %v290, %v323
      %v330 = vadd.f32 %v291, %v323
      %v331 = vadd.f32 %v292, %v323
      %v332 = vadd.f32 %v293, %v323
      %v333 = vadd.f32 %v294, %v323
      %v334 = vadd.f32 %v295, %v323
      %v335 = vadd.f32 %v296, %v323
      %v336 = vadd.f32 %v297, %v323
      %v337 = vadd.f32 %v298, %v323
      %v338 = vadd.f32 %v299, %v323
      %v339 = vadd.f32 %v300, %v323
      %v340 = vadd.f32 %v301, %v323
      %v341 = vadd.f32 %v302, %v323
      %v342 = vadd.f32 %v303, %v323
      %v343 = vadd.f32 %v304, %v323
      %v344 = vadd.f32 %v305, %v323
      %v345 = vadd.f32 %v306, %v323
      %v346 = vadd.f32 %v307, %v323
      %v347 = vadd.f32 %v308, %v323
      %v348 = vadd.f32 %v309, %v323
      %v349 = vadd.f32 %v310, %v323
      %v350 = vadd.f32 %v311, %v323
      %v351 = vadd.f32 %v312, %v323
      %v352 = vadd.f32 %v313, %v323
      %v353 = vadd.f32 %v314, %v323
      %v354 = vadd.f32 %v315, %v323
      %v355 = vadd.f32 %v316, %v323
      %v356 = vadd.f32 %v317, %v323
      %v357 = vmax.f32 %v325, 0.0
      %v358 = vmax.f32 %v326, 0.0
      %v359 = vmax.f32 %v327, 0.0
      %v360 = vmax.f32 %v328, 0.0
      %v361 = vmax.f32 %v329, 0.0
      %v362 = vmax.f32 %v330, 0.0
      %v363 = vmax.f32 %v331, 0.0
      %v364 = vmax.f32 %v332, 0.0
      %v365 = vmax.f32 %v333, 0.0
      %v366 = vmax.f32 %v334, 0.0
      %v367 = vmax.f32 %v335, 0.0
      %v368 = vmax.f32 %v336, 0.0
      %v369 = vmax.f32 %v337, 0.0
      %v370 = vmax.f32 %v338, 0.0
      %v371 = vmax.f32 %v339, 0.0
      %v372 = vmax.f32 %v340, 0.0
      %v373 = vmax.f32 %v341, 0.0
      %v374 = vmax.f32 %v342, 0.0
      %v375 = vmax.f32 %v343, 0.0
      %v376 = vmax.f32 %v344, 0.0
      %v377 = vmax.f32 %v345, 0.0
      %v378 = vmax.f32 %v346, 0.0
      %v379 = vmax.f32 %v347, 0.0
      %v380 = vmax.f32 %v348, 0.0
      %v381 = vmax.f32 %v349, 0.0
      %v382 = vmax.f32 %v350, 0.0
      %v383 = vmax.f32 %v351, 0.0
      %v384 = vmax.f32 %v352, 0.0
      %v385 = vmax.f32 %v353, 0.0
      %v386 = vmax.f32 %v354, 0.0
      %v387 = vmax.f32 %v355, 0.0
      %v388 = vmax.f32 %v356, 0.0
      %389 = vst [vmem:[%s213] sm:$0xff] %v357
      %390 = vst [vmem:[%s213 + $0x8] sm:$0xff] %v358
      %391 = vst [vmem:[%s213 + $0x10] sm:$0xff] %v359
      %392 = vst [vmem:[%s213 + $0x18] sm:$0xff] %v360
      %393 = vst [vmem:[%s213 + $0x20] sm:$0xff] %v361
      %394 = vst [vmem:[%s213 + $0x28] sm:$0xff] %v362
      %395 = vst [vmem:[%s213 + $0x30] sm:$0xff] %v363
      %396 = vst [vmem:[%s213 + $0x38] sm:$0xff] %v364
      %397 = vst [vmem:[%s213 + $0x40] sm:$0xff] %v365
      %398 = vst [vmem:[%s213 + $0x48] sm:$0xff] %v366
      %399 = vst [vmem:[%s213 + $0x50] sm:$0xff] %v367
      %400 = vst [vmem:[%s213 + $0x58] sm:$0xff] %v368
      %401 = vst [vmem:[%s213 + $0x60] sm:$0xff] %v369
      %402 = vst [vmem:[%s213 + $0x68] sm:$0xff] %v370
      %403 = vst [vmem:[%s213 + $0x70] sm:$0xff] %v371
      %404 = vst [vmem:[%s213 + $0x78] sm:$0xff] %v372
      %405 = vst [vmem:[%s213 + $0x80] sm:$0xff] %v373
      %406 = vst [vmem:[%s213 + $0x88] sm:$0xff] %v374
      %407 = vst [vmem:[%s213 + $0x90] sm:$0xff] %v375
      %408 = vst [vmem:[%s213 + $0x98] sm:$0xff] %v376
      %409 = vst [vmem:[%s213 + $0xa0] sm:$0xff] %v377
      %410 = vst [vmem:[%s213 + $0xa8] sm:$0xff] %v378
      %411 = vst [vmem:[%s213 + $0xb0] sm:$0xff] %v379
      %412 = vst [vmem:[%s213 + $0xb8] sm:$0xff] %v380
      %413 = vst [vmem:[%s213 + $0xc0] sm:$0xff] %v381
      %414 = vst [vmem:[%s213 + $0xc8] sm:$0xff] %v382
      %415 = vst [vmem:[%s213 + $0xd0] sm:$0xff] %v383
      %416 = vst [vmem:[%s213 + $0xd8] sm:$0xff] %v384
      %417 = vst [vmem:[%s213 + $0xe0] sm:$0xff] %v385
      %418 = vst [vmem:[%s213 + $0xe8] sm:$0xff] %v386
      %419 = vst [vmem:[%s213 + $0xf0] sm:$0xff] %v387
      %420 = vst [vmem:[%s213 + $0xf8] sm:$0xff] %v388
      %s421 = smul.u32 16, %s19
      %p422 = scmp.lt.s32.totalorder %s18, 1
      %s423 = scalar_select %p422, %s18, 1
      %p424 = scmp.lt.s32.totalorder %s421, 15
      %s425 = scalar_select %p424, %s421, 15
      %s426 = smul.addr %s425, 2
      %s427 = smul.addr %s423, 32
      %s428 = sadd.s32 %s426, %s427
      %s429 = smul.addr %s428, 8
      %s430 = scalar_lea.vmem %s3, %s429
      // Predicated region
      $region33: #{basic_block_forward.3} parent=31 // pred_check
        %p431 = pneg %p116
      $region34: #{basic_block_forward.3} parent=31 // pred_check_branch
        %433 = sbr.rel (%p431) target = $region36
      $region35: #{basic_block_forward.3} parent=31 // pred_region
        %s434 = smul.u32 16, %s19
      $region36: #{basic_block_forward.3} parent=31 // pred_fallthru
        _
    $region32: #{basic_block_forward.3} parent=5 // pred_fallthru
      _
    %p435 = scmp.le.s32.totalorder 2, %s9
    // Predicated region
    $region37: #{basic_block_forward.3} parent=5 // pred_check
      %p436 = pneg %p435
    $region38: #{basic_block_forward.3} parent=5 // pred_check_branch
      %438 = sbr.rel (%p436) target = $region40
    $region39: #{basic_block_forward.3} parent=5 // pred_region
      %s439 = ssub.s32 %s9, 2
      // Predicated region
      $region41: #{basic_block_forward.3} parent=39 // pred_check
        %p440 = pneg %p122
      $region42: #{basic_block_forward.3} parent=39 // pred_check_branch
        %442 = sbr.rel (%p440) target = $region44
      $region43: #{basic_block_forward.3} parent=39 // pred_region
        %s443 = smul.u32 16, %s21
        %p444 = scmp.lt.s32.totalorder %s20, 1
        %s445 = scalar_select %p444, %s20, 1
        %p446 = scmp.lt.s32.totalorder %s443, 15
        %s447 = scalar_select %p446, %s443, 15
        %s448 = smul.addr %s447, 2
        %s449 = smul.addr %s445, 32
        %s450 = sadd.s32 %s448, %s449
        %s451 = smul.addr %s450, 8
        %s452 = scalar_lea.vmem %s3, %s451
      $region44: #{basic_block_forward.3} parent=39 // pred_fallthru
        _
    $region40: #{basic_block_forward.3} parent=5 // pred_fallthru
      _
  $region6: #{basic_block_forward.3} parent=0 // loop_footer
    %s13 = sadd.s32 1, %s9
  $region7: #{basic_block_forward.3} parent=0 // loop_footer_branch
    %8 = sbr.rel target = $region3
  $region8: #{basic_block_forward.3} parent=0 // loop_exit
    _

// kernel: basic_block_forward.2
$region0: #{basic_block_forward.2}
  #allocation0 [shape = 'u32[]', space=smem, size = 0x4, offset = 0x4, fixed_abs, tag = 'smem constant byte address 0x4 - core index']
  #allocation1 [shape = 'u32[144,128]{1,0:T(1,128)}', space=vmem, size = 0x12000, scoped, tag = 'internal scratch']
  #allocation2 [shape = 'bf16[18,18,128]{2,1,0:T(8,128)(2,1)}', space=vmem, size = 0x1b000, scoped, tag = 'scratch operand']
  %s0 = inlined_call_operand.vmem [shape: bf16[2,20,20,128], index: 0, kind: input, shape index: {}]
  %s1 = inlined_call_operand.vmem [shape: bf16[1152,128], index: 1, kind: input, shape index: {}]
  %s2 = inlined_call_operand.vmem [shape: bf16[1152,128], index: 2, kind: input, shape index: {}]
  %s3 = inlined_call_operand.vmem [shape: bf16[2,16,16,128], index: 3, kind: output, shape index: {0}]
  %s4 = inlined_call_operand.vmem [shape: f32[2,8,128], index: 4, kind: output, shape index: {1}]
  %5 = xla_tuple %s3, %s4
  %s6 = sld [smem:[#allocation0]]
  $region53: #{basic_block_forward.2} parent=0
    _
  %s8 = ssub.s32 1, %s6
  %s9 = scalar_select 0, %s8, %s6
  loop: start=0, step=1, limit=4
  $region2: #{basic_block_forward.2} parent=0 // loop_pre_header
    _
  $region3: #{basic_block_forward.2} parent=0 // loop_header
    %s11 = sphi 0, %s15
    %p12 = scmp.ge.s32.totalorder %s11, 4
    %s21 = sphi 0, %s23
    %s24 = sphi 0, %s21
    %s25 = sphi 0, %s24
    %s41 = sphi 0, %s25
    %s45 = sphi 0, %s45
    %s47 = sphi 0, %s45
    %s48 = sphi 0, %s47
    %s62 = sphi 0, %s48
    %s66 = sphi 0, %s66
    %s68 = sphi 0, %s66
    %s69 = sphi 0, %s68
    %s83 = sphi 0, %s69
    %s89 = sphi 0, %s91
    %s92 = sphi 0, %s89
    %s93 = sphi 0, %s92
    %s109 = sphi 0, %s93
    %s115 = sphi 0, %s117
    %s118 = sphi 0, %s115
    %s119 = sphi 0, %s118
    %s135 = sphi 0, %s119
  $region4: #{basic_block_forward.2} parent=0 // loop_header_branch
    %14 = sbr.rel (%p12) target = $region8
  $region5: #{basic_block_forward.2} parent=0 // loop_body
    %s16 = ssub.s32 %s11, 1
    %s17 = ssub.s32 %s11, 2
    %s18 = sadd.s32 %s11, 1
    %s19 = ssub.s32 %s11, %s18
    %p20 = scmp.eq.s32.totalorder %s19, 0
    %s22 = sadd.s32 %s21, 1
    %s23 = scalar_select %p20, %s21, %s22
    %p26 = pneg %p20
    %p27 = scmp.eq.s32.totalorder %s11, 1
    %p28 = por %p26, %p27
    %p29 = scmp.ne.s32.totalorder %s21, %s24
    %p30 = scmp.eq.s32.totalorder %s11, 0
    %p31 = por %p29, %p30
    %p32 = scmp.ne.s32.totalorder %s21, %s24
    %p33 = scmp.eq.s32.totalorder %s16, 1
    %p34 = por %p32, %p33
    %p35 = scmp.ne.s32.totalorder %s24, %s25
    %p36 = scmp.eq.s32.totalorder %s16, 0
    %p37 = por %p35, %p36
    %p38 = scmp.ne.s32.totalorder %s24, %s25
    %p39 = scmp.eq.s32.totalorder %s17, 1
    %p40 = por %p38, %p39
    %p42 = scmp.ne.s32.totalorder %s25, %s41
    %p43 = scmp.eq.s32.totalorder %s17, 0
    %p44 = por %p42, %p43
    %s46 = sadd.s32 %s45, 1
    %p49 = scmp.eq.s32.totalorder %s11, 1
    %p50 = scmp.ne.s32.totalorder %s45, %s47
    %p51 = scmp.eq.s32.totalorder %s11, 0
    %p52 = por %p50, %p51
    %p53 = scmp.ne.s32.totalorder %s45, %s47
    %p54 = scmp.eq.s32.totalorder %s16, 1
    %p55 = por %p53, %p54
    %p56 = scmp.ne.s32.totalorder %s47, %s48
    %p57 = scmp.eq.s32.totalorder %s16, 0
    %p58 = por %p56, %p57
    %p59 = scmp.ne.s32.totalorder %s47, %s48
    %p60 = scmp.eq.s32.totalorder %s17, 1
    %p61 = por %p59, %p60
    %p63 = scmp.ne.s32.totalorder %s48, %s62
    %p64 = scmp.eq.s32.totalorder %s17, 0
    %p65 = por %p63, %p64
    %s67 = sadd.s32 %s66, 1
    %p70 = scmp.eq.s32.totalorder %s11, 1
    %p71 = scmp.ne.s32.totalorder %s66, %s68
    %p72 = scmp.eq.s32.totalorder %s11, 0
    %p73 = por %p71, %p72
    %p74 = scmp.ne.s32.totalorder %s66, %s68
    %p75 = scmp.eq.s32.totalorder %s16, 1
    %p76 = por %p74, %p75
    %p77 = scmp.ne.s32.totalorder %s68, %s69
    %p78 = scmp.eq.s32.totalorder %s16, 0
    %p79 = por %p77, %p78
    %p80 = scmp.ne.s32.totalorder %s68, %s69
    %p81 = scmp.eq.s32.totalorder %s17, 1
    %p82 = por %p80, %p81
    %p84 = scmp.ne.s32.totalorder %s69, %s83
    %p85 = scmp.eq.s32.totalorder %s17, 0
    %p86 = por %p84, %p85
    %s87 = ssub.s32 %s11, %s18
    %p88 = scmp.eq.s32.totalorder %s87, 0
    %s90 = sadd.s32 %s89, 1
    %s91 = scalar_select %p88, %s89, %s90
    %p94 = pneg %p88
    %p95 = scmp.eq.s32.totalorder %s11, 1
    %p96 = por %p94, %p95
    %p97 = scmp.ne.s32.totalorder %s89, %s92
    %p98 = scmp.eq.s32.totalorder %s11, 0
    %p99 = por %p97, %p98
    %p100 = scmp.ne.s32.totalorder %s89, %s92
    %p101 = scmp.eq.s32.totalorder %s16, 1
    %p102 = por %p100, %p101
    %p103 = scmp.ne.s32.totalorder %s92, %s93
    %p104 = scmp.eq.s32.totalorder %s16, 0
    %p105 = por %p103, %p104
    %p106 = scmp.ne.s32.totalorder %s92, %s93
    %p107 = scmp.eq.s32.totalorder %s17, 1
    %p108 = por %p106, %p107
    %p110 = scmp.ne.s32.totalorder %s93, %s109
    %p111 = scmp.eq.s32.totalorder %s17, 0
    %p112 = por %p110, %p111
    %s113 = ssub.s32 %s11, %s18
    %p114 = scmp.eq.s32.totalorder %s113, 0
    %s116 = sadd.s32 %s115, 1
    %s117 = scalar_select %p114, %s115, %s116
    %p120 = pneg %p114
    %p121 = scmp.eq.s32.totalorder %s11, 1
    %p122 = por %p120, %p121
    %p123 = scmp.ne.s32.totalorder %s115, %s118
    %p124 = scmp.eq.s32.totalorder %s11, 0
    %p125 = por %p123, %p124
    %p126 = scmp.ne.s32.totalorder %s115, %s118
    %p127 = scmp.eq.s32.totalorder %s16, 1
    %p128 = por %p126, %p127
    %p129 = scmp.ne.s32.totalorder %s118, %s119
    %p130 = scmp.eq.s32.totalorder %s16, 0
    %p131 = por %p129, %p130
    %p132 = scmp.ne.s32.totalorder %s118, %s119
    %p133 = scmp.eq.s32.totalorder %s17, 1
    %p134 = por %p132, %p133
    %p136 = scmp.ne.s32.totalorder %s119, %s135
    %p137 = scmp.eq.s32.totalorder %s17, 0
    %p138 = por %p136, %p137
    %p139 = scmp.le.s32.totalorder 1, %s11
    %p140 = scmp.lt.s32.totalorder %s11, 3
    %p141 = pnand %p139, %p140
    %p142 = pneg %p141
    // Predicated region
    $region9: #{basic_block_forward.2} parent=5 // pred_check
      _
    $region10: #{basic_block_forward.2} parent=5 // pred_check_branch
      %144 = sbr.rel (%p141) target = $region12
    $region11: #{basic_block_forward.2} parent=5 // pred_region
      %s145 = ssub.s32 %s11, 1
      // Predicated region
      $region13: #{basic_block_forward.2} parent=11 // pred_check
        %p146 = pneg %p58
      $region14: #{basic_block_forward.2} parent=11 // pred_check_branch
        %148 = sbr.rel (%p146) target = $region16
      $region15: #{basic_block_forward.2} parent=11 // pred_region
        _
      $region16: #{basic_block_forward.2} parent=11 // pred_fallthru
        _
      // Predicated region
      $region17: #{basic_block_forward.2} parent=11 // pred_check
        %p149 = pneg %p79
      $region18: #{basic_block_forward.2} parent=11 // pred_check_branch
        %151 = sbr.rel (%p149) target = $region20
      $region19: #{basic_block_forward.2} parent=11 // pred_region
        _
      $region20: #{basic_block_forward.2} parent=11 // pred_fallthru
        _
    $region12: #{basic_block_forward.2} parent=5 // pred_fallthru
      _
    %p152 = scmp.lt.s32.totalorder %s11, 2
    // Predicated region
    $region21: #{basic_block_forward.2} parent=5 // pred_check
      %p153 = pneg %p152
    $region22: #{basic_block_forward.2} parent=5 // pred_check_branch
      %155 = sbr.rel (%p153) target = $region24
    $region23: #{basic_block_forward.2} parent=5 // pred_region
      // Predicated region
      $region25: #{basic_block_forward.2} parent=23 // pred_check
        %p156 = pneg %p31
      $region26: #{basic_block_forward.2} parent=23 // pred_check_branch
        %158 = sbr.rel (%p156) target = $region28
      $region27: #{basic_block_forward.2} parent=23 // pred_region
        %p159 = scmp.lt.s32.totalorder %s11, 1
        %s160 = scalar_select %p159, %s11, 1
        %s161 = smul.addr %s160, 60
        %s162 = smul.addr %s161, 4
        %s163 = scalar_lea.vmem %s0, %s162
      $region28: #{basic_block_forward.2} parent=23 // pred_fallthru
        _
    $region24: #{basic_block_forward.2} parent=5 // pred_fallthru
      _
    %p164 = scmp.le.s32.totalorder 1, %s11
    %p165 = scmp.lt.s32.totalorder %s11, 3
    %p166 = pnand %p164, %p165
    %p167 = pneg %p166
    // Predicated region
    $region29: #{basic_block_forward.2} parent=5 // pred_check
      _
    $region30: #{basic_block_forward.2} parent=5 // pred_check_branch
      %169 = sbr.rel (%p166) target = $region32
    $region31: #{basic_block_forward.2} parent=5 // pred_region
      %s170 = ssub.s32 %s11, 1
      %p171 = scmp.lt.s32.totalorder %s16, 1
      %s172 = scalar_select %p171, %s16, 1
      %s173 = smul.addr %s172, 60
      %s174 = smul.addr %s173, 4
      %s175 = scalar_lea.vmem %s0, %s174
      %p176 = pneg %p37
      %p177 = pneg %p34
      %p178 = pneg %p58
      %p179 = pneg %p55
      %p180 = pneg %p79
      %p181 = pneg %p76
      %p182 = pneg %p105
      %p183 = pneg %p102
      %p184 = scmp.lt.s32.totalorder %s16, 1
      %s185 = scalar_select %p184, %s16, 1
      %s186 = smul.addr %s185, 32
      %s187 = smul.addr %s186, 4
      %s188 = scalar_lea.vmem %s3, %s187
      %p189 = pneg %p131
      %p190 = pneg %p128
      %p191 = scmp.lt.s32.totalorder %s16, 1
      %s192 = scalar_select %p191, %s16, 1
      %s193 = smul.addr %s192, 8
      %s194 = scalar_lea.vmem %s4, %s193
      %p195 = scmp.lt.s32.totalorder %s16, 1
      %s196 = scalar_select %p195, %s16, 1
      %s197 = smul.addr %s196, 60
      %s198 = smul.addr %s197, 4
      %s199 = scalar_lea.vmem %s0, %s198
      %p200 = scmp.lt.s32.totalorder %s16, 1
      %s201 = scalar_select %p200, %s16, 1
      %s202 = smul.addr %s201, 32
      %s203 = smul.addr %s202, 4
      %s204 = scalar_lea.vmem %s3, %s203
      %p205 = scmp.lt.s32.totalorder %s16, 1
      %s206 = scalar_select %p205, %s16, 1
      %s207 = smul.addr %s206, 8
      %s208 = scalar_lea.vmem %s4, %s207
      %v210 = vld [vmem:[%s199 + $0xc] sm:$0xf]
      %v211 = vld [vmem:[%s199 + $0x10] sm:$0xf]
      %v212 = vld [vmem:[%s199 + $0x14] sm:$0x3]
      %v213 = vld [vmem:[%s199 + $0x18] sm:$0xf]
      %v214 = vld [vmem:[%s199 + $0x1c] sm:$0xf]
      %v215 = vld [vmem:[%s199 + $0x20] sm:$0x3]
      %v216 = vld [vmem:[%s199 + $0x24] sm:$0xf]
      %v217 = vld [vmem:[%s199 + $0x28] sm:$0xf]
      %v218 = vld [vmem:[%s199 + $0x2c] sm:$0x3]
      %v219 = vld [vmem:[%s199 + $0x30] sm:$0xf]
      %v220 = vld [vmem:[%s199 + $0x34] sm:$0xf]
      %v221 = vld [vmem:[%s199 + $0x38] sm:$0x3]
      %v222 = vld [vmem:[%s199 + $0x3c] sm:$0xf]
      %v223 = vld [vmem:[%s199 + $0x40] sm:$0xf]
      %v224 = vld [vmem:[%s199 + $0x44] sm:$0x3]
      %v225 = vld [vmem:[%s199 + $0x48] sm:$0xf]
      %v226 = vld [vmem:[%s199 + $0x4c] sm:$0xf]
      %v227 = vld [vmem:[%s199 + $0x50] sm:$0x3]
      %v228 = vld [vmem:[%s199 + $0x54] sm:$0xf]
      %v229 = vld [vmem:[%s199 + $0x58] sm:$0xf]
      %v230 = vld [vmem:[%s199 + $0x5c] sm:$0x3]
      %v231 = vld [vmem:[%s199 + $0x60] sm:$0xf]
      %v232 = vld [vmem:[%s199 + $0x64] sm:$0xf]
      %v233 = vld [vmem:[%s199 + $0x68] sm:$0x3]
      %v234 = vld [vmem:[%s199 + $0x6c] sm:$0xf]
      %v235 = vld [vmem:[%s199 + $0x70] sm:$0xf]
      %v236 = vld [vmem:[%s199 + $0x74] sm:$0x3]
      %v237 = vld [vmem:[%s199 + $0x78] sm:$0xf]
      %v238 = vld [vmem:[%s199 + $0x7c] sm:$0xf]
      %v239 = vld [vmem:[%s199 + $0x80] sm:$0x3]
      %v240 = vld [vmem:[%s199 + $0x84] sm:$0xf]
      %v241 = vld [vmem:[%s199 + $0x88] sm:$0xf]
      %v242 = vld [vmem:[%s199 + $0x8c] sm:$0x3]
      %v243 = vld [vmem:[%s199 + $0x90] sm:$0xf]
      %v244 = vld [vmem:[%s199 + $0x94] sm:$0xf]
      %v245 = vld [vmem:[%s199 + $0x98] sm:$0x3]
      %v246 = vld [vmem:[%s199 + $0x9c] sm:$0xf]
      %v247 = vld [vmem:[%s199 + $0xa0] sm:$0xf]
      %v248 = vld [vmem:[%s199 + $0xa4] sm:$0x3]
      %v249 = vld [vmem:[%s199 + $0xa8] sm:$0xf]
      %v250 = vld [vmem:[%s199 + $0xac] sm:$0xf]
      %v251 = vld [vmem:[%s199 + $0xb0] sm:$0x3]
      %v252 = vld [vmem:[%s199 + $0xb4] sm:$0xf]
      %v253 = vld [vmem:[%s199 + $0xb8] sm:$0xf]
      %v254 = vld [vmem:[%s199 + $0xbc] sm:$0x3]
      %v255 = vld [vmem:[%s199 + $0xc0] sm:$0xf]
      %v256 = vld [vmem:[%s199 + $0xc4] sm:$0xf]
      %v257 = vld [vmem:[%s199 + $0xc8] sm:$0x3]
      %v258 = vld [vmem:[%s199 + $0xcc] sm:$0xf]
      %v259 = vld [vmem:[%s199 + $0xd0] sm:$0xf]
      %v260 = vld [vmem:[%s199 + $0xd4] sm:$0x3]
      %v261 = vld [vmem:[%s199 + $0xd8] sm:$0xf]
      %v262 = vld [vmem:[%s199 + $0xdc] sm:$0xf]
      %v263 = vld [vmem:[%s199 + $0xe0] sm:$0x3]
      %v312 = vunpack.c.l.b16 %v210
      %v313 = vunpack.c.l.b16 %v211
      %v314 = vunpack.c.l.b16 %v212
      %v315 = vunpack.c.l.b16 %v213
      %v316 = vunpack.c.l.b16 %v214
      %v317 = vunpack.c.l.b16 %v215
      %v318 = vunpack.c.l.b16 %v216
      %v319 = vunpack.c.l.b16 %v217
      %v320 = vunpack.c.l.b16 %v218
      %v321 = vunpack.c.l.b16 %v219
      %v322 = vunpack.c.l.b16 %v220
      %v323 = vunpack.c.l.b16 %v221
      %v324 = vunpack.c.l.b16 %v222
      %v325 = vunpack.c.l.b16 %v223
      %v326 = vunpack.c.l.b16 %v224
      %v327 = vunpack.c.l.b16 %v225
      %v328 = vunpack.c.l.b16 %v226
      %v329 = vunpack.c.l.b16 %v227
      %v330 = vunpack.c.l.b16 %v228
      %v331 = vunpack.c.l.b16 %v229
      %v332 = vunpack.c.l.b16 %v230
      %v333 = vunpack.c.l.b16 %v231
      %v334 = vunpack.c.l.b16 %v232
      %v335 = vunpack.c.l.b16 %v233
      %v336 = vunpack.c.l.b16 %v234
      %v337 = vunpack.c.l.b16 %v235
      %v338 = vunpack.c.l.b16 %v236
      %v339 = vunpack.c.l.b16 %v237
      %v340 = vunpack.c.l.b16 %v238
      %v341 = vunpack.c.l.b16 %v239
      %v342 = vunpack.c.l.b16 %v240
      %v343 = vunpack.c.l.b16 %v241
      %v344 = vunpack.c.l.b16 %v242
      %v345 = vunpack.c.l.b16 %v243
      %v346 = vunpack.c.l.b16 %v244
      %v347 = vunpack.c.l.b16 %v245
      %v348 = vunpack.c.l.b16 %v246
      %v349 = vunpack.c.l.b16 %v247
      %v350 = vunpack.c.l.b16 %v248
      %v351 = vunpack.c.l.b16 %v249
      %v352 = vunpack.c.l.b16 %v250
      %v353 = vunpack.c.l.b16 %v251
      %v354 = vunpack.c.l.b16 %v252
      %v355 = vunpack.c.l.b16 %v253
      %v356 = vunpack.c.l.b16 %v254
      %v357 = vunpack.c.l.b16 %v255
      %v358 = vunpack.c.l.b16 %v256
      %v359 = vunpack.c.l.b16 %v257
      %v360 = vpack.c.b16 %v313, %v312
      %v361 = vpack.c.b16 %v314, %v314
      %v362 = vpack.c.b16 %v316, %v315
      %v363 = vpack.c.b16 %v317, %v317
      %v364 = vpack.c.b16 %v319, %v318
      %v365 = vpack.c.b16 %v320, %v320
      %v366 = vpack.c.b16 %v322, %v321
      %v367 = vpack.c.b16 %v323, %v323
      %v368 = vpack.c.b16 %v325, %v324
      %v369 = vpack.c.b16 %v326, %v326
      %v370 = vpack.c.b16 %v328, %v327
      %v371 = vpack.c.b16 %v329, %v329
      %v372 = vpack.c.b16 %v331, %v330
      %v373 = vpack.c.b16 %v332, %v332
      %v374 = vpack.c.b16 %v334, %v333
      %v375 = vpack.c.b16 %v335, %v335
      %v376 = vpack.c.b16 %v337, %v336
      %v377 = vpack.c.b16 %v338, %v338
      %v378 = vpack.c.b16 %v340, %v339
      %v379 = vpack.c.b16 %v341, %v341
      %v380 = vpack.c.b16 %v343, %v342
      %v381 = vpack.c.b16 %v344, %v344
      %v382 = vpack.c.b16 %v346, %v345
      %v383 = vpack.c.b16 %v347, %v347
      %v384 = vpack.c.b16 %v349, %v348
      %v385 = vpack.c.b16 %v350, %v350
      %v386 = vpack.c.b16 %v352, %v351
      %v387 = vpack.c.b16 %v353, %v353
      %v388 = vpack.c.b16 %v355, %v354
      %v389 = vpack.c.b16 %v356, %v356
      %v390 = vpack.c.b16 %v358, %v357
      %v391 = vpack.c.b16 %v359, %v359
      %vm392 = vsmask.f32 7424
      %v394 = vshrl.u32 %v360, 16
      %v396 = vshll.u32 %v360, 16
      %v398 = vrot.slane %v396, 1
      %v399 = vor.u32 %v394, %v398
      %v401 = vshll.u32 %v361, 16
      %v403 = vrot.slane %v401, 1
      %v404 = vsel %vm392, %v399, %v403
      %v405 = vshrl.u32 %v361, 16
      %v408 = vshrl.u32 %v362, 16
      %v410 = vshll.u32 %v362, 16
      %v412 = vrot.slane %v410, 1
      %v413 = vor.u32 %v408, %v412
      %v415 = vshll.u32 %v363, 16
      %v417 = vrot.slane %v415, 1
      %v418 = vsel %vm392, %v413, %v417
      %v419 = vshrl.u32 %v363, 16
      %v422 = vshrl.u32 %v364, 16
      %v424 = vshll.u32 %v364, 16
      %v426 = vrot.slane %v424, 1
      %v427 = vor.u32 %v422, %v426
      %v429 = vshll.u32 %v365, 16
      %v431 = vrot.slane %v429, 1
      %v432 = vsel %vm392, %v427, %v431
      %v433 = vshrl.u32 %v365, 16
      %v436 = vshrl.u32 %v366, 16
      %v438 = vshll.u32 %v366, 16
      %v440 = vrot.slane %v438, 1
      %v441 = vor.u32 %v436, %v440
      %v443 = vshll.u32 %v367, 16
      %v445 = vrot.slane %v443, 1
      %v446 = vsel %vm392, %v441, %v445
      %v447 = vshrl.u32 %v367, 16
      %v450 = vshrl.u32 %v368, 16
      %v452 = vshll.u32 %v368, 16
      %v454 = vrot.slane %v452, 1
      %v455 = vor.u32 %v450, %v454
      %v457 = vshll.u32 %v369, 16
      %v459 = vrot.slane %v457, 1
      %v460 = vsel %vm392, %v455, %v459
      %v461 = vshrl.u32 %v369, 16
      %v464 = vshrl.u32 %v370, 16
      %v466 = vshll.u32 %v370, 16
      %v468 = vrot.slane %v466, 1
      %v469 = vor.u32 %v464, %v468
      %v471 = vshll.u32 %v371, 16
      %v473 = vrot.slane %v471, 1
      %v474 = vsel %vm392, %v469, %v473
      %v475 = vshrl.u32 %v371, 16
      %v478 = vshrl.u32 %v372, 16
      %v480 = vshll.u32 %v372, 16
      %v482 = vrot.slane %v480, 1
      %v483 = vor.u32 %v478, %v482
      %v485 = vshll.u32 %v373, 16
      %v487 = vrot.slane %v485, 1
      %v488 = vsel %vm392, %v483, %v487
      %v489 = vshrl.u32 %v373, 16
      %v492 = vshrl.u32 %v374, 16
      %v494 = vshll.u32 %v374, 16
      %v496 = vrot.slane %v494, 1
      %v497 = vor.u32 %v492, %v496
      %v499 = vshll.u32 %v375, 16
      %v501 = vrot.slane %v499, 1
      %v502 = vsel %vm392, %v497, %v501
      %v503 = vshrl.u32 %v375, 16
      %v506 = vshrl.u32 %v376, 16
      %v508 = vshll.u32 %v376, 16
      %v510 = vrot.slane %v508, 1
      %v511 = vor.u32 %v506, %v510
      %v513 = vshll.u32 %v377, 16
      %v515 = vrot.slane %v513, 1
      %v516 = vsel %vm392, %v511, %v515
      %v517 = vshrl.u32 %v377, 16
      %v520 = vshrl.u32 %v378, 16
      %v522 = vshll.u32 %v378, 16
      %v524 = vrot.slane %v522, 1
      %v525 = vor.u32 %v520, %v524
      %v527 = vshll.u32 %v379, 16
      %v529 = vrot.slane %v527, 1
      %v530 = vsel %vm392, %v525, %v529
      %v531 = vshrl.u32 %v379, 16
      %v534 = vshrl.u32 %v380, 16
      %v536 = vshll.u32 %v380, 16
      %v538 = vrot.slane %v536, 1
      %v539 = vor.u32 %v534, %v538
      %v541 = vshll.u32 %v381, 16
      %v543 = vrot.slane %v541, 1
      %v544 = vsel %vm392, %v539, %v543
      %v545 = vshrl.u32 %v381, 16
      %v548 = vshrl.u32 %v382, 16
      %v550 = vshll.u32 %v382, 16
      %v552 = vrot.slane %v550, 1
      %v553 = vor.u32 %v548, %v552
      %v555 = vshll.u32 %v383, 16
      %v557 = vrot.slane %v555, 1
      %v558 = vsel %vm392, %v553, %v557
      %v559 = vshrl.u32 %v383, 16
      %v562 = vshrl.u32 %v384, 16
      %v564 = vshll.u32 %v384, 16
      %v566 = vrot.slane %v564, 1
      %v567 = vor.u32 %v562, %v566
      %v569 = vshll.u32 %v385, 16
      %v571 = vrot.slane %v569, 1
      %v572 = vsel %vm392, %v567, %v571
      %v573 = vshrl.u32 %v385, 16
      %v576 = vshrl.u32 %v386, 16
      %v578 = vshll.u32 %v386, 16
      %v580 = vrot.slane %v578, 1
      %v581 = vor.u32 %v576, %v580
      %v583 = vshll.u32 %v387, 16
      %v585 = vrot.slane %v583, 1
      %v586 = vsel %vm392, %v581, %v585
      %v587 = vshrl.u32 %v387, 16
      %v590 = vshrl.u32 %v388, 16
      %v592 = vshll.u32 %v388, 16
      %v594 = vrot.slane %v592, 1
      %v595 = vor.u32 %v590, %v594
      %v597 = vshll.u32 %v389, 16
      %v599 = vrot.slane %v597, 1
      %v600 = vsel %vm392, %v595, %v599
      %v601 = vshrl.u32 %v389, 16
      %v604 = vshrl.u32 %v390, 16
      %v606 = vshll.u32 %v390, 16
      %v608 = vrot.slane %v606, 1
      %v609 = vor.u32 %v604, %v608
      %v611 = vshll.u32 %v391, 16
      %v613 = vrot.slane %v611, 1
      %v614 = vsel %vm392, %v609, %v613
      %v615 = vshrl.u32 %v391, 16
      %vm617 = vcmask 1046528
      %v618 = vrot.slane %v360, 1
      %v619 = vrot.slane %v361, 1
      %v620 = vsel %vm617, %v618, %v619
      %v621 = vrot.slane %v362, 1
      %v622 = vrot.slane %v363, 1
      %v623 = vsel %vm617, %v621, %v622
      %v624 = vrot.slane %v364, 1
      %v625 = vrot.slane %v365, 1
      %v626 = vsel %vm617, %v624, %v625
      %v627 = vrot.slane %v366, 1
      %v628 = vrot.slane %v367, 1
      %v629 = vsel %vm617, %v627, %v628
      %v630 = vrot.slane %v368, 1
      %v631 = vrot.slane %v369, 1
      %v632 = vsel %vm617, %v630, %v631
      %v633 = vrot.slane %v370, 1
      %v634 = vrot.slane %v371, 1
      %v635 = vsel %vm617, %v633, %v634
      %v636 = vrot.slane %v372, 1
      %v637 = vrot.slane %v373, 1
      %v638 = vsel %vm617, %v636, %v637
      %v639 = vrot.slane %v374, 1
      %v640 = vrot.slane %v375, 1
      %v641 = vsel %vm617, %v639, %v640
      %v642 = vrot.slane %v376, 1
      %v643 = vrot.slane %v377, 1
      %v644 = vsel %vm617, %v642, %v643
      %v645 = vrot.slane %v378, 1
      %v646 = vrot.slane %v379, 1
      %v647 = vsel %vm617, %v645, %v646
      %v648 = vrot.slane %v380, 1
      %v649 = vrot.slane %v381, 1
      %v650 = vsel %vm617, %v648, %v649
      %v651 = vrot.slane %v382, 1
      %v652 = vrot.slane %v383, 1
      %v653 = vsel %vm617, %v651, %v652
      %v654 = vrot.slane %v384, 1
      %v655 = vrot.slane %v385, 1
      %v656 = vsel %vm617, %v654, %v655
      %v657 = vrot.slane %v386, 1
      %v658 = vrot.slane %v387, 1
      %v659 = vsel %vm617, %v657, %v658
      %v660 = vrot.slane %v388, 1
      %v661 = vrot.slane %v389, 1
      %v662 = vsel %vm617, %v660, %v661
      %v663 = vrot.slane %v390, 1
      %v664 = vrot.slane %v391, 1
      %v665 = vsel %vm617, %v663, %v664
      %v669 = vunpack.c.l.b16 %v258
      %v670 = vunpack.c.l.b16 %v259
      %v671 = vunpack.c.l.b16 %v260
      %v672 = vpack.c.b16 %v670, %v669
      %v673 = vpack.c.b16 %v671, %v671
      %v675 = vshrl.u32 %v672, 16
      %v677 = vshll.u32 %v672, 16
      %v679 = vrot.slane %v677, 1
      %v680 = vor.u32 %v675, %v679
      %v682 = vshll.u32 %v673, 16
      %v684 = vrot.slane %v682, 1
      %v685 = vsel %vm392, %v680, %v684
      %v686 = vshrl.u32 %v673, 16
      %v688 = vrot.slane %v672, 1
      %v689 = vrot.slane %v673, 1
      %v690 = vsel %vm617, %v688, %v689
      %v694 = vunpack.c.l.b16 %v261
      %v695 = vunpack.c.l.b16 %v262
      %v696 = vunpack.c.l.b16 %v263
      %v697 = vpack.c.b16 %v695, %v694
      %v698 = vpack.c.b16 %v696, %v696
      %v700 = vshrl.u32 %v697, 16
      %v702 = vshll.u32 %v697, 16
      %v704 = vrot.slane %v702, 1
      %v705 = vor.u32 %v700, %v704
      %v707 = vshll.u32 %v698, 16
      %v709 = vrot.slane %v707, 1
      %v710 = vsel %vm392, %v705, %v709
      %v711 = vshrl.u32 %v698, 16
      %v713 = vrot.slane %v697, 1
      %v714 = vrot.slane %v698, 1
      %v715 = vsel %vm617, %v713, %v714
      %v717 = vshrl.u32 %v404, 16
      %v719 = vshll.u32 %v404, 16
      %v721 = vrot.slane %v719, 1
      %v722 = vor.u32 %v717, %v721
      %v724 = vshll.u32 %v405, 16
      %v726 = vrot.slane %v724, 1
      %v727 = vsel %vm392, %v722, %v726
      %v729 = vshrl.u32 %v620, 16
      %v731 = vshll.u32 %v620, 16
      %v733 = vrot.slane %v731, 1
      %v734 = vor.u32 %v729, %v733
      %v736 = vshll.u32 %v619, 16
      %v738 = vrot.slane %v736, 1
      %v739 = vsel %vm392, %v734, %v738
      %v741 = vshrl.u32 %v418, 16
      %v743 = vshll.u32 %v418, 16
      %v745 = vrot.slane %v743, 1
      %v746 = vor.u32 %v741, %v745
      %v748 = vshll.u32 %v419, 16
      %v750 = vrot.slane %v748, 1
      %v751 = vsel %vm392, %v746, %v750
      %v753 = vshrl.u32 %v623, 16
      %v755 = vshll.u32 %v623, 16
      %v757 = vrot.slane %v755, 1
      %v758 = vor.u32 %v753, %v757
      %v760 = vshll.u32 %v622, 16
      %v762 = vrot.slane %v760, 1
      %v763 = vsel %vm392, %v758, %v762
      %v765 = vshrl.u32 %v432, 16
      %v767 = vshll.u32 %v432, 16
      %v769 = vrot.slane %v767, 1
      %v770 = vor.u32 %v765, %v769
      %v772 = vshll.u32 %v433, 16
      %v774 = vrot.slane %v772, 1
      %v775 = vsel %vm392, %v770, %v774
      %v777 = vshrl.u32 %v626, 16
      %v779 = vshll.u32 %v626, 16
      %v781 = vrot.slane %v779, 1
      %v782 = vor.u32 %v777, %v781
      %v784 = vshll.u32 %v625, 16
      %v786 = vrot.slane %v784, 1
      %v787 = vsel %vm392, %v782, %v786
      %v789 = vshrl.u32 %v446, 16
      %v791 = vshll.u32 %v446, 16
      %v793 = vrot.slane %v791, 1
      %v794 = vor.u32 %v789, %v793
      %v796 = vshll.u32 %v447, 16
      %v798 = vrot.slane %v796, 1
      %v799 = vsel %vm392, %v794, %v798
      %v801 = vshrl.u32 %v629, 16
      %v803 = vshll.u32 %v629, 16
      %v805 = vrot.slane %v803, 1
      %v806 = vor.u32 %v801, %v805
      %v808 = vshll.u32 %v628, 16
      %v810 = vrot.slane %v808, 1
      %v811 = vsel %vm392, %v806, %v810
      %v813 = vshrl.u32 %v460, 16
      %v815 = vshll.u32 %v460, 16
      %v817 = vrot.slane %v815, 1
      %v818 = vor.u32 %v813, %v817
      %v820 = vshll.u32 %v461, 16
      %v822 = vrot.slane %v820, 1
      %v823 = vsel %vm392, %v818, %v822
      %v825 = vshrl.u32 %v632, 16
      %v827 = vshll.u32 %v632, 16
      %v829 = vrot.slane %v827, 1
      %v830 = vor.u32 %v825, %v829
      %v832 = vshll.u32 %v631, 16
      %v834 = vrot.slane %v832, 1
      %v835 = vsel %vm392, %v830, %v834
      %v837 = vshrl.u32 %v474, 16
      %v839 = vshll.u32 %v474, 16
      %v841 = vrot.slane %v839, 1
      %v842 = vor.u32 %v837, %v841
      %v844 = vshll.u32 %v475, 16
      %v846 = vrot.slane %v844, 1
      %v847 = vsel %vm392, %v842, %v846
      %v849 = vshrl.u32 %v635, 16
      %v851 = vshll.u32 %v635, 16
      %v853 = vrot.slane %v851, 1
      %v854 = vor.u32 %v849, %v853
      %v856 = vshll.u32 %v634, 16
      %v858 = vrot.slane %v856, 1
      %v859 = vsel %vm392, %v854, %v858
      %v861 = vshrl.u32 %v488, 16
      %v863 = vshll.u32 %v488, 16
      %v865 = vrot.slane %v863, 1
      %v866 = vor.u32 %v861, %v865
      %v868 = vshll.u32 %v489, 16
      %v870 = vrot.slane %v868, 1
      %v871 = vsel %vm392, %v866, %v870
      %v873 = vshrl.u32 %v638, 16
      %v875 = vshll.u32 %v638, 16
      %v877 = vrot.slane %v875, 1
      %v878 = vor.u32 %v873, %v877
      %v880 = vshll.u32 %v637, 16
      %v882 = vrot.slane %v880, 1
      %v883 = vsel %vm392, %v878, %v882
      %v885 = vshrl.u32 %v502, 16
      %v887 = vshll.u32 %v502, 16
      %v889 = vrot.slane %v887, 1
      %v890 = vor.u32 %v885, %v889
      %v892 = vshll.u32 %v503, 16
      %v894 = vrot.slane %v892, 1
      %v895 = vsel %vm392, %v890, %v894
      %v897 = vshrl.u32 %v641, 16
      %v899 = vshll.u32 %v641, 16
      %v901 = vrot.slane %v899, 1
      %v902 = vor.u32 %v897, %v901
      %v904 = vshll.u32 %v640, 16
      %v906 = vrot.slane %v904, 1
      %v907 = vsel %vm392, %v902, %v906
      %v909 = vshrl.u32 %v516, 16
      %v911 = vshll.u32 %v516, 16
      %v913 = vrot.slane %v911, 1
      %v914 = vor.u32 %v909, %v913
      %v916 = vshll.u32 %v517, 16
      %v918 = vrot.slane %v916, 1
      %v919 = vsel %vm392, %v914, %v918
      %v921 = vshrl.u32 %v644, 16
      %v923 = vshll.u32 %v644, 16
      %v925 = vrot.slane %v923, 1
      %v926 = vor.u32 %v921, %v925
      %v928 = vshll.u32 %v643, 16
      %v930 = vrot.slane %v928, 1
      %v931 = vsel %vm392, %v926, %v930
      %v933 = vshrl.u32 %v530, 16
      %v935 = vshll.u32 %v530, 16
      %v937 = vrot.slane %v935, 1
      %v938 = vor.u32 %v933, %v937
      %v940 = vshll.u32 %v531, 16
      %v942 = vrot.slane %v940, 1
      %v943 = vsel %vm392, %v938, %v942
      %v945 = vshrl.u32 %v647, 16
      %v947 = vshll.u32 %v647, 16
      %v949 = vrot.slane %v947, 1
      %v950 = vor.u32 %v945, %v949
      %v952 = vshll.u32 %v646, 16
      %v954 = vrot.slane %v952, 1
      %v955 = vsel %vm392, %v950, %v954
      %v957 = vshrl.u32 %v544, 16
      %v959 = vshll.u32 %v544, 16
      %v961 = vrot.slane %v959, 1
      %v962 = vor.u32 %v957, %v961
      %v964 = vshll.u32 %v545, 16
      %v966 = vrot.slane %v964, 1
      %v967 = vsel %vm392, %v962, %v966
      %v969 = vshrl.u32 %v650, 16
      %v971 = vshll.u32 %v650, 16
      %v973 = vrot.slane %v971, 1
      %v974 = vor.u32 %v969, %v973
      %v976 = vshll.u32 %v649, 16
      %v978 = vrot.slane %v976, 1
      %v979 = vsel %vm392, %v974, %v978
      %v981 = vshrl.u32 %v558, 16
      %v983 = vshll.u32 %v558, 16
      %v985 = vrot.slane %v983, 1
      %v986 = vor.u32 %v981, %v985
      %v988 = vshll.u32 %v559, 16
      %v990 = vrot.slane %v988, 1
      %v991 = vsel %vm392, %v986, %v990
      %v993 = vshrl.u32 %v653, 16
      %v995 = vshll.u32 %v653, 16
      %v997 = vrot.slane %v995, 1
      %v998 = vor.u32 %v993, %v997
      %v1000 = vshll.u32 %v652, 16
      %v1002 = vrot.slane %v1000, 1
      %v1003 = vsel %vm392, %v998, %v1002
      %v1005 = vshrl.u32 %v572, 16
      %v1007 = vshll.u32 %v572, 16
      %v1009 = vrot.slane %v1007, 1
      %v1010 = vor.u32 %v1005, %v1009
      %v1012 = vshll.u32 %v573, 16
      %v1014 = vrot.slane %v1012, 1
      %v1015 = vsel %vm392, %v1010, %v1014
      %v1017 = vshrl.u32 %v656, 16
      %v1019 = vshll.u32 %v656, 16
      %v1021 = vrot.slane %v1019, 1
      %v1022 = vor.u32 %v1017, %v1021
      %v1024 = vshll.u32 %v655, 16
      %v1026 = vrot.slane %v1024, 1
      %v1027 = vsel %vm392, %v1022, %v1026
      %v1029 = vshrl.u32 %v586, 16
      %v1031 = vshll.u32 %v586, 16
      %v1033 = vrot.slane %v1031, 1
      %v1034 = vor.u32 %v1029, %v1033
      %v1036 = vshll.u32 %v587, 16
      %v1038 = vrot.slane %v1036, 1
      %v1039 = vsel %vm392, %v1034, %v1038
      %v1041 = vshrl.u32 %v659, 16
      %v1043 = vshll.u32 %v659, 16
      %v1045 = vrot.slane %v1043, 1
      %v1046 = vor.u32 %v1041, %v1045
      %v1048 = vshll.u32 %v658, 16
      %v1050 = vrot.slane %v1048, 1
      %v1051 = vsel %vm392, %v1046, %v1050
      %v1053 = vshrl.u32 %v600, 16
      %v1055 = vshll.u32 %v600, 16
      %v1057 = vrot.slane %v1055, 1
      %v1058 = vor.u32 %v1053, %v1057
      %v1060 = vshll.u32 %v601, 16
      %v1062 = vrot.slane %v1060, 1
      %v1063 = vsel %vm392, %v1058, %v1062
      %v1065 = vshrl.u32 %v662, 16
      %v1067 = vshll.u32 %v662, 16
      %v1069 = vrot.slane %v1067, 1
      %v1070 = vor.u32 %v1065, %v1069
      %v1072 = vshll.u32 %v661, 16
      %v1074 = vrot.slane %v1072, 1
      %v1075 = vsel %vm392, %v1070, %v1074
      %v1077 = vshrl.u32 %v614, 16
      %v1079 = vshll.u32 %v614, 16
      %v1081 = vrot.slane %v1079, 1
      %v1082 = vor.u32 %v1077, %v1081
      %v1084 = vshll.u32 %v615, 16
      %v1086 = vrot.slane %v1084, 1
      %v1087 = vsel %vm392, %v1082, %v1086
      %v1089 = vshrl.u32 %v665, 16
      %v1091 = vshll.u32 %v665, 16
      %v1093 = vrot.slane %v1091, 1
      %v1094 = vor.u32 %v1089, %v1093
      %v1096 = vshll.u32 %v664, 16
      %v1098 = vrot.slane %v1096, 1
      %v1099 = vsel %vm392, %v1094, %v1098
      %v1101 = vshrl.u32 %v685, 16
      %v1103 = vshll.u32 %v685, 16
      %v1105 = vrot.slane %v1103, 1
      %v1106 = vor.u32 %v1101, %v1105
      %v1108 = vshll.u32 %v686, 16
      %v1110 = vrot.slane %v1108, 1
      %v1111 = vsel %vm392, %v1106, %v1110
      %v1113 = vshrl.u32 %v690, 16
      %v1115 = vshll.u32 %v690, 16
      %v1117 = vrot.slane %v1115, 1
      %v1118 = vor.u32 %v1113, %v1117
      %v1120 = vshll.u32 %v689, 16
      %v1122 = vrot.slane %v1120, 1
      %v1123 = vsel %vm392, %v1118, %v1122
      %v1125 = vshrl.u32 %v710, 16
      %v1127 = vshll.u32 %v710, 16
      %v1129 = vrot.slane %v1127, 1
      %v1130 = vor.u32 %v1125, %v1129
      %v1132 = vshll.u32 %v711, 16
      %v1134 = vrot.slane %v1132, 1
      %v1135 = vsel %vm392, %v1130, %v1134
      %v1137 = vshrl.u32 %v715, 16
      %v1139 = vshll.u32 %v715, 16
      %v1141 = vrot.slane %v1139, 1
      %v1142 = vor.u32 %v1137, %v1141
      %v1144 = vshll.u32 %v714, 16
      %v1146 = vrot.slane %v1144, 1
      %v1147 = vsel %vm392, %v1142, %v1146
      %v1202 = vld [vmem:[%s1] sm:$0xf]
      %v1203 = vld [vmem:[%s1 + $0x4] sm:$0xf]
      %v1204 = vld [vmem:[%s1 + $0x8] sm:$0xf]
      %v1205 = vld [vmem:[%s1 + $0xc] sm:$0xf]
      %v1206 = vld [vmem:[%s1 + $0x10] sm:$0xf]
      %v1207 = vld [vmem:[%s1 + $0x14] sm:$0xf]
      %v1208 = vld [vmem:[%s1 + $0x18] sm:$0xf]
      %v1209 = vld [vmem:[%s1 + $0x1c] sm:$0xf]
      %v1210 = vld [vmem:[%s1 + $0x20] sm:$0xf]
      %v1211 = vld [vmem:[%s1 + $0x24] sm:$0xf]
      %v1212 = vld [vmem:[%s1 + $0x28] sm:$0xf]
      %v1213 = vld [vmem:[%s1 + $0x2c] sm:$0xf]
      %v1214 = vld [vmem:[%s1 + $0x30] sm:$0xf]
      %v1215 = vld [vmem:[%s1 + $0x34] sm:$0xf]
      %v1216 = vld [vmem:[%s1 + $0x38] sm:$0xf]
      %v1217 = vld [vmem:[%s1 + $0x3c] sm:$0xf]
      %v1218 = vld [vmem:[%s1 + $0x40] sm:$0xf]
      %v1219 = vld [vmem:[%s1 + $0x44] sm:$0xf]
      %v1220 = vld [vmem:[%s1 + $0x48] sm:$0xf]
      %v1221 = vld [vmem:[%s1 + $0x4c] sm:$0xf]
      %v1222 = vld [vmem:[%s1 + $0x50] sm:$0xf]
      %v1223 = vld [vmem:[%s1 + $0x54] sm:$0xf]
      %v1224 = vld [vmem:[%s1 + $0x58] sm:$0xf]
      %v1225 = vld [vmem:[%s1 + $0x5c] sm:$0xf]
      %v1226 = vld [vmem:[%s1 + $0x60] sm:$0xf]
      %v1227 = vld [vmem:[%s1 + $0x64] sm:$0xf]
      %v1228 = vld [vmem:[%s1 + $0x68] sm:$0xf]
      %v1229 = vld [vmem:[%s1 + $0x6c] sm:$0xf]
      %v1230 = vld [vmem:[%s1 + $0x70] sm:$0xf]
      %v1231 = vld [vmem:[%s1 + $0x74] sm:$0xf]
      %v1232 = vld [vmem:[%s1 + $0x78] sm:$0xf]
      %v1233 = vld [vmem:[%s1 + $0x7c] sm:$0xf]
      %v1234 = vld [vmem:[%s1 + $0x80] sm:$0xf]
      %v1235 = vld [vmem:[%s1 + $0x84] sm:$0xf]
      %v1236 = vld [vmem:[%s1 + $0x88] sm:$0xf]
      %v1237 = vld [vmem:[%s1 + $0x8c] sm:$0xf]
      %v1238 = vld [vmem:[%s1 + $0x90] sm:$0xf]
      %v1239 = vld [vmem:[%s1 + $0x94] sm:$0xf]
      %v1240 = vld [vmem:[%s1 + $0x98] sm:$0xf]
      %v1241 = vld [vmem:[%s1 + $0x9c] sm:$0xf]
      %v1242 = vld [vmem:[%s1 + $0xa0] sm:$0xf]
      %v1243 = vld [vmem:[%s1 + $0xa4] sm:$0xf]
      %v1244 = vld [vmem:[%s1 + $0xa8] sm:$0xf]
      %v1245 = vld [vmem:[%s1 + $0xac] sm:$0xf]
      %v1246 = vld [vmem:[%s1 + $0xb0] sm:$0xf]
      %v1247 = vld [vmem:[%s1 + $0xb4] sm:$0xf]
      %v1248 = vld [vmem:[%s1 + $0xb8] sm:$0xf]
      %v1249 = vld [vmem:[%s1 + $0xbc] sm:$0xf]
      %v1250 = vld [vmem:[%s1 + $0xc0] sm:$0xf]
      %v1251 = vld [vmem:[%s1 + $0xc4] sm:$0xf]
      %v1252 = vld [vmem:[%s1 + $0xc8] sm:$0xf]
      %v1253 = vld [vmem:[%s1 + $0xcc] sm:$0xf]
      %v1254 = vld [vmem:[%s1 + $0xd0] sm:$0xf]
      %v1255 = vld [vmem:[%s1 + $0xd4] sm:$0xf]
      %v1256 = vld [vmem:[%s1 + $0xd8] sm:$0xf]
      %v1257 = vld [vmem:[%s1 + $0xdc] sm:$0xf]
      %v1258 = vld [vmem:[%s1 + $0xe0] sm:$0xf]
      %v1259 = vld [vmem:[%s1 + $0xe4] sm:$0xf]
      %v1260 = vld [vmem:[%s1 + $0xe8] sm:$0xf]
      %v1261 = vld [vmem:[%s1 + $0xec] sm:$0xf]
      %v1262 = vld [vmem:[%s1 + $0xf0] sm:$0xf]
      %v1263 = vld [vmem:[%s1 + $0xf4] sm:$0xf]
      %v1264 = vld [vmem:[%s1 + $0xf8] sm:$0xf]
      %v1265 = vld [vmem:[%s1 + $0xfc] sm:$0xf]
      %v1266 = vld [vmem:[%s1 + $0x100] sm:$0xf]
      %v1267 = vld [vmem:[%s1 + $0x104] sm:$0xf]
      %v1268 = vld [vmem:[%s1 + $0x108] sm:$0xf]
      %v1269 = vld [vmem:[%s1 + $0x10c] sm:$0xf]
      %v1270 = vld [vmem:[%s1 + $0x110] sm:$0xf]
      %v1271 = vld [vmem:[%s1 + $0x114] sm:$0xf]
      %v1272 = vld [vmem:[%s1 + $0x118] sm:$0xf]
      %v1273 = vld [vmem:[%s1 + $0x11c] sm:$0xf]
      %v1274 = vld [vmem:[%s1 + $0x120] sm:$0xf]
      %v1275 = vld [vmem:[%s1 + $0x124] sm:$0xf]
      %v1276 = vld [vmem:[%s1 + $0x128] sm:$0xf]
      %v1277 = vld [vmem:[%s1 + $0x12c] sm:$0xf]
      %v1278 = vld [vmem:[%s1 + $0x130] sm:$0xf]
      %v1279 = vld [vmem:[%s1 + $0x134] sm:$0xf]
      %v1280 = vld [vmem:[%s1 + $0x138] sm:$0xf]
      %v1281 = vld [vmem:[%s1 + $0x13c] sm:$0xf]
      %v1282 = vld [vmem:[%s1 + $0x140] sm:$0xf]
      %v1283 = vld [vmem:[%s1 + $0x144] sm:$0xf]
      %v1284 = vld [vmem:[%s1 + $0x148] sm:$0xf]
      %v1285 = vld [vmem:[%s1 + $0x14c] sm:$0xf]
      %v1286 = vld [vmem:[%s1 + $0x150] sm:$0xf]
      %v1287 = vld [vmem:[%s1 + $0x154] sm:$0xf]
      %v1288 = vld [vmem:[%s1 + $0x158] sm:$0xf]
      %v1289 = vld [vmem:[%s1 + $0x15c] sm:$0xf]
      %v1290 = vld [vmem:[%s1 + $0x160] sm:$0xf]
      %v1291 = vld [vmem:[%s1 + $0x164] sm:$0xf]
      %v1292 = vld [vmem:[%s1 + $0x168] sm:$0xf]
      %v1293 = vld [vmem:[%s1 + $0x16c] sm:$0xf]
      %v1294 = vld [vmem:[%s1 + $0x170] sm:$0xf]
      %v1295 = vld [vmem:[%s1 + $0x174] sm:$0xf]
      %v1296 = vld [vmem:[%s1 + $0x178] sm:$0xf]
      %v1297 = vld [vmem:[%s1 + $0x17c] sm:$0xf]
      %v1298 = vld [vmem:[%s1 + $0x180] sm:$0xf]
      %v1299 = vld [vmem:[%s1 + $0x184] sm:$0xf]
      %v1300 = vld [vmem:[%s1 + $0x188] sm:$0xf]
      %v1301 = vld [vmem:[%s1 + $0x18c] sm:$0xf]
      %v1302 = vld [vmem:[%s1 + $0x190] sm:$0xf]
      %v1303 = vld [vmem:[%s1 + $0x194] sm:$0xf]
      %v1304 = vld [vmem:[%s1 + $0x198] sm:$0xf]
      %v1305 = vld [vmem:[%s1 + $0x19c] sm:$0xf]
      %v1306 = vld [vmem:[%s1 + $0x1a0] sm:$0xf]
      %v1307 = vld [vmem:[%s1 + $0x1a4] sm:$0xf]
      %v1308 = vld [vmem:[%s1 + $0x1a8] sm:$0xf]
      %v1309 = vld [vmem:[%s1 + $0x1ac] sm:$0xf]
      %v1310 = vld [vmem:[%s1 + $0x1b0] sm:$0xf]
      %v1311 = vld [vmem:[%s1 + $0x1b4] sm:$0xf]
      %v1312 = vld [vmem:[%s1 + $0x1b8] sm:$0xf]
      %v1313 = vld [vmem:[%s1 + $0x1bc] sm:$0xf]
      %v1314 = vld [vmem:[%s1 + $0x1c0] sm:$0xf]
      %v1315 = vld [vmem:[%s1 + $0x1c4] sm:$0xf]
      %v1316 = vld [vmem:[%s1 + $0x1c8] sm:$0xf]
      %v1317 = vld [vmem:[%s1 + $0x1cc] sm:$0xf]
      %v1318 = vld [vmem:[%s1 + $0x1d0] sm:$0xf]
      %v1319 = vld [vmem:[%s1 + $0x1d4] sm:$0xf]
      %v1320 = vld [vmem:[%s1 + $0x1d8] sm:$0xf]
      %v1321 = vld [vmem:[%s1 + $0x1dc] sm:$0xf]
      %v1322 = vld [vmem:[%s1 + $0x1e0] sm:$0xf]
      %v1323 = vld [vmem:[%s1 + $0x1e4] sm:$0xf]
      %v1324 = vld [vmem:[%s1 + $0x1e8] sm:$0xf]
      %v1325 = vld [vmem:[%s1 + $0x1ec] sm:$0xf]
      %v1326 = vld [vmem:[%s1 + $0x1f0] sm:$0xf]
      %v1327 = vld [vmem:[%s1 + $0x1f4] sm:$0xf]
      %v1328 = vld [vmem:[%s1 + $0x1f8] sm:$0xf]
      %v1329 = vld [vmem:[%s1 + $0x1fc] sm:$0xf]
      %v1330 = vld [vmem:[%s1 + $0x200] sm:$0xf]
      %v1331 = vld [vmem:[%s1 + $0x204] sm:$0xf]
      %v1332 = vld [vmem:[%s1 + $0x208] sm:$0xf]
      %v1333 = vld [vmem:[%s1 + $0x20c] sm:$0xf]
      %v1334 = vld [vmem:[%s1 + $0x210] sm:$0xf]
      %v1335 = vld [vmem:[%s1 + $0x214] sm:$0xf]
      %v1336 = vld [vmem:[%s1 + $0x218] sm:$0xf]
      %v1337 = vld [vmem:[%s1 + $0x21c] sm:$0xf]
      %v1338 = vld [vmem:[%s1 + $0x220] sm:$0xf]
      %v1339 = vld [vmem:[%s1 + $0x224] sm:$0xf]
      %v1340 = vld [vmem:[%s1 + $0x228] sm:$0xf]
      %v1341 = vld [vmem:[%s1 + $0x22c] sm:$0xf]
      %v1342 = vld [vmem:[%s1 + $0x230] sm:$0xf]
      %v1343 = vld [vmem:[%s1 + $0x234] sm:$0xf]
      %v1344 = vld [vmem:[%s1 + $0x238] sm:$0xf]
      %v1345 = vld [vmem:[%s1 + $0x23c] sm:$0xf]
      %v1490 = vunpack.c.l.b16 %v1202
      %v1491 = vunpack.c.l.b16 %v1203
      %v1492 = vunpack.c.l.b16 %v1204
      %v1493 = vunpack.c.l.b16 %v1205
      %v1494 = vunpack.c.l.b16 %v1206
      %v1495 = vunpack.c.l.b16 %v1207
      %v1496 = vunpack.c.l.b16 %v1208
      %v1497 = vunpack.c.l.b16 %v1209
      %v1498 = vunpack.c.l.b16 %v1210
      %v1499 = vunpack.c.l.b16 %v1211
      %v1500 = vunpack.c.l.b16 %v1212
      %v1501 = vunpack.c.l.b16 %v1213
      %v1502 = vunpack.c.l.b16 %v1214
      %v1503 = vunpack.c.l.b16 %v1215
      %v1504 = vunpack.c.l.b16 %v1216
      %v1505 = vunpack.c.l.b16 %v1217
      %v1506 = vunpack.c.l.b16 %v1218
      %v1507 = vunpack.c.l.b16 %v1219
      %v1508 = vunpack.c.l.b16 %v1220
      %v1509 = vunpack.c.l.b16 %v1221
      %v1510 = vunpack.c.l.b16 %v1222
      %v1511 = vunpack.c.l.b16 %v1223
      %v1512 = vunpack.c.l.b16 %v1224
      %v1513 = vunpack.c.l.b16 %v1225
      %v1514 = vunpack.c.l.b16 %v1226
      %v1515 = vunpack.c.l.b16 %v1227
      %v1516 = vunpack.c.l.b16 %v1228
      %v1517 = vunpack.c.l.b16 %v1229
      %v1518 = vunpack.c.l.b16 %v1230
      %v1519 = vunpack.c.l.b16 %v1231
      %v1520 = vunpack.c.l.b16 %v1232
      %v1521 = vunpack.c.l.b16 %v1233
      %v1522 = vunpack.c.l.b16 %v1234
      %v1523 = vunpack.c.l.b16 %v1235
      %v1524 = vunpack.c.l.b16 %v1236
      %v1525 = vunpack.c.l.b16 %v1237
      %v1526 = vunpack.c.l.b16 %v1238
      %v1527 = vunpack.c.l.b16 %v1239
      %v1528 = vunpack.c.l.b16 %v1240
      %v1529 = vunpack.c.l.b16 %v1241
      %v1530 = vunpack.c.l.b16 %v1242
      %v1531 = vunpack.c.l.b16 %v1243
      %v1532 = vunpack.c.l.b16 %v1244
      %v1533 = vunpack.c.l.b16 %v1245
      %v1534 = vunpack.c.l.b16 %v1246
      %v1535 = vunpack.c.l.b16 %v1247
      %v1536 = vunpack.c.l.b16 %v1248
      %v1537 = vunpack.c.l.b16 %v1249
      %v1538 = vunpack.c.l.b16 %v1250
      %v1539 = vunpack.c.l.b16 %v1251
      %v1540 = vunpack.c.l.b16 %v1252
      %v1541 = vunpack.c.l.b16 %v1253
      %v1542 = vunpack.c.l.b16 %v1254
      %v1543 = vunpack.c.l.b16 %v1255
      %v1544 = vunpack.c.l.b16 %v1256
      %v1545 = vunpack.c.l.b16 %v1257
      %v1546 = vunpack.c.l.b16 %v1258
      %v1547 = vunpack.c.l.b16 %v1259
      %v1548 = vunpack.c.l.b16 %v1260
      %v1549 = vunpack.c.l.b16 %v1261
      %v1550 = vunpack.c.l.b16 %v1262
      %v1551 = vunpack.c.l.b16 %v1263
      %v1552 = vunpack.c.l.b16 %v1264
      %v1553 = vunpack.c.l.b16 %v1265
      %v1554 = vunpack.c.l.b16 %v1266
      %v1555 = vunpack.c.l.b16 %v1267
      %v1556 = vunpack.c.l.b16 %v1268
      %v1557 = vunpack.c.l.b16 %v1269
      %v1558 = vunpack.c.l.b16 %v1270
      %v1559 = vunpack.c.l.b16 %v1271
      %v1560 = vunpack.c.l.b16 %v1272
      %v1561 = vunpack.c.l.b16 %v1273
      %v1562 = vunpack.c.l.b16 %v1274
      %v1563 = vunpack.c.l.b16 %v1275
      %v1564 = vunpack.c.l.b16 %v1276
      %v1565 = vunpack.c.l.b16 %v1277
      %v1566 = vunpack.c.l.b16 %v1278
      %v1567 = vunpack.c.l.b16 %v1279
      %v1568 = vunpack.c.l.b16 %v1280
      %v1569 = vunpack.c.l.b16 %v1281
      %v1570 = vunpack.c.l.b16 %v1282
      %v1571 = vunpack.c.l.b16 %v1283
      %v1572 = vunpack.c.l.b16 %v1284
      %v1573 = vunpack.c.l.b16 %v1285
      %v1574 = vunpack.c.l.b16 %v1286
      %v1575 = vunpack.c.l.b16 %v1287
      %v1576 = vunpack.c.l.b16 %v1288
      %v1577 = vunpack.c.l.b16 %v1289
      %v1578 = vunpack.c.l.b16 %v1290
      %v1579 = vunpack.c.l.b16 %v1291
      %v1580 = vunpack.c.l.b16 %v1292
      %v1581 = vunpack.c.l.b16 %v1293
      %v1582 = vunpack.c.l.b16 %v1294
      %v1583 = vunpack.c.l.b16 %v1295
      %v1584 = vunpack.c.l.b16 %v1296
      %v1585 = vunpack.c.l.b16 %v1297
      %v1586 = vunpack.c.l.b16 %v1298
      %v1587 = vunpack.c.l.b16 %v1299
      %v1588 = vunpack.c.l.b16 %v1300
      %v1589 = vunpack.c.l.b16 %v1301
      %v1590 = vunpack.c.l.b16 %v1302
      %v1591 = vunpack.c.l.b16 %v1303
      %v1592 = vunpack.c.l.b16 %v1304
      %v1593 = vunpack.c.l.b16 %v1305
      %v1594 = vunpack.c.l.b16 %v1306
      %v1595 = vunpack.c.l.b16 %v1307
      %v1596 = vunpack.c.l.b16 %v1308
      %v1597 = vunpack.c.l.b16 %v1309
      %v1598 = vunpack.c.l.b16 %v1310
      %v1599 = vunpack.c.l.b16 %v1311
      %v1600 = vunpack.c.l.b16 %v1312
      %v1601 = vunpack.c.l.b16 %v1313
      %v1602 = vunpack.c.l.b16 %v1314
      %v1603 = vunpack.c.l.b16 %v1315
      %v1604 = vunpack.c.l.b16 %v1316
      %v1605 = vunpack.c.l.b16 %v1317
      %v1606 = vunpack.c.l.b16 %v1318
      %v1607 = vunpack.c.l.b16 %v1319
      %v1608 = vunpack.c.l.b16 %v1320
      %v1609 = vunpack.c.l.b16 %v1321
      %v1610 = vunpack.c.l.b16 %v1322
      %v1611 = vunpack.c.l.b16 %v1323
      %v1612 = vunpack.c.l.b16 %v1324
      %v1613 = vunpack.c.l.b16 %v1325
      %v1614 = vunpack.c.l.b16 %v1326
      %v1615 = vunpack.c.l.b16 %v1327
      %v1616 = vunpack.c.l.b16 %v1328
      %v1617 = vunpack.c.l.b16 %v1329
      %v1618 = vunpack.c.l.b16 %v1330
      %v1619 = vunpack.c.l.b16 %v1331
      %v1620 = vunpack.c.l.b16 %v1332
      %v1621 = vunpack.c.l.b16 %v1333
      %v1622 = vunpack.c.l.b16 %v1334
      %v1623 = vunpack.c.l.b16 %v1335
      %v1624 = vunpack.c.l.b16 %v1336
      %v1625 = vunpack.c.l.b16 %v1337
      %v1626 = vunpack.c.l.b16 %v1338
      %v1627 = vunpack.c.l.b16 %v1339
      %v1628 = vunpack.c.l.b16 %v1340
      %v1629 = vunpack.c.l.b16 %v1341
      %v1630 = vunpack.c.l.b16 %v1342
      %v1631 = vunpack.c.l.b16 %v1343
      %v1632 = vunpack.c.l.b16 %v1344
      %v1633 = vunpack.c.l.b16 %v1345
      %v1634 = vpack.c.b16 %v1491, %v1490
      %v1635 = vpack.c.b16 %v1493, %v1492
      %v1636 = vpack.c.b16 %v1495, %v1494
      %v1637 = vpack.c.b16 %v1497, %v1496
      %v1638 = vpack.c.b16 %v1499, %v1498
      %v1639 = vpack.c.b16 %v1501, %v1500
      %v1640 = vpack.c.b16 %v1503, %v1502
      %v1641 = vpack.c.b16 %v1505, %v1504
      %v1642 = vpack.c.b16 %v1507, %v1506
      %v1643 = vpack.c.b16 %v1509, %v1508
      %v1644 = vpack.c.b16 %v1511, %v1510
      %v1645 = vpack.c.b16 %v1513, %v1512
      %v1646 = vpack.c.b16 %v1515, %v1514
      %v1647 = vpack.c.b16 %v1517, %v1516
      %v1648 = vpack.c.b16 %v1519, %v1518
      %v1649 = vpack.c.b16 %v1521, %v1520
      %v1650 = vpack.c.b16 %v1523, %v1522
      %v1651 = vpack.c.b16 %v1525, %v1524
      %v1652 = vpack.c.b16 %v1527, %v1526
      %v1653 = vpack.c.b16 %v1529, %v1528
      %v1654 = vpack.c.b16 %v1531, %v1530
      %v1655 = vpack.c.b16 %v1533, %v1532
      %v1656 = vpack.c.b16 %v1535, %v1534
      %v1657 = vpack.c.b16 %v1537, %v1536
      %v1658 = vpack.c.b16 %v1539, %v1538
      %v1659 = vpack.c.b16 %v1541, %v1540
      %v1660 = vpack.c.b16 %v1543, %v1542
      %v1661 = vpack.c.b16 %v1545, %v1544
      %v1662 = vpack.c.b16 %v1547, %v1546
      %v1663 = vpack.c.b16 %v1549, %v1548
      %v1664 = vpack.c.b16 %v1551, %v1550
      %v1665 = vpack.c.b16 %v1553, %v1552
      %v1666 = vpack.c.b16 %v1555, %v1554
      %v1667 = vpack.c.b16 %v1557, %v1556
      %v1668 = vpack.c.b16 %v1559, %v1558
      %v1669 = vpack.c.b16 %v1561, %v1560
      %v1670 = vpack.c.b16 %v1563, %v1562
      %v1671 = vpack.c.b16 %v1565, %v1564
      %v1672 = vpack.c.b16 %v1567, %v1566
      %v1673 = vpack.c.b16 %v1569, %v1568
      %v1674 = vpack.c.b16 %v1571, %v1570
      %v1675 = vpack.c.b16 %v1573, %v1572
      %v1676 = vpack.c.b16 %v1575, %v1574
      %v1677 = vpack.c.b16 %v1577, %v1576
      %v1678 = vpack.c.b16 %v1579, %v1578
      %v1679 = vpack.c.b16 %v1581, %v1580
      %v1680 = vpack.c.b16 %v1583, %v1582
      %v1681 = vpack.c.b16 %v1585, %v1584
      %v1682 = vpack.c.b16 %v1587, %v1586
      %v1683 = vpack.c.b16 %v1589, %v1588
      %v1684 = vpack.c.b16 %v1591, %v1590
      %v1685 = vpack.c.b16 %v1593, %v1592
      %v1686 = vpack.c.b16 %v1595, %v1594
      %v1687 = vpack.c.b16 %v1597, %v1596
      %v1688 = vpack.c.b16 %v1599, %v1598
      %v1689 = vpack.c.b16 %v1601, %v1600
      %v1690 = vpack.c.b16 %v1603, %v1602
      %v1691 = vpack.c.b16 %v1605, %v1604
      %v1692 = vpack.c.b16 %v1607, %v1606
      %v1693 = vpack.c.b16 %v1609, %v1608
      %v1694 = vpack.c.b16 %v1611, %v1610
      %v1695 = vpack.c.b16 %v1613, %v1612
      %v1696 = vpack.c.b16 %v1615, %v1614
      %v1697 = vpack.c.b16 %v1617, %v1616
      %v1698 = vpack.c.b16 %v1619, %v1618
      %v1699 = vpack.c.b16 %v1621, %v1620
      %v1700 = vpack.c.b16 %v1623, %v1622
      %v1701 = vpack.c.b16 %v1625, %v1624
      %v1702 = vpack.c.b16 %v1627, %v1626
      %v1703 = vpack.c.b16 %v1629, %v1628
      %v1704 = vpack.c.b16 %v1631, %v1630
      %v1705 = vpack.c.b16 %v1633, %v1632
      %1778 = vmatprep.subr.bf16.mxu0 0
      %1779 = vmatpush1.bf16.msra.mxu0 %v1641
      %1780 = vmatprep.subr.bf16.mxu0 0
      %1781 = vmatpush1.bf16.msra.mxu0 %v1640
      %1782 = vmatprep.subr.bf16.mxu0 0
      %1783 = vmatpush1.bf16.msra.mxu0 %v1639
      %1784 = vmatprep.subr.bf16.mxu0 0
      %1785 = vmatpush1.bf16.msra.mxu0 %v1638
      %1786 = vmatprep.subr.bf16.mxu0 0
      %1787 = vmatpush1.bf16.msra.mxu0 %v1637
      %1788 = vmatprep.subr.bf16.mxu0 0
      %1789 = vmatpush1.bf16.msra.mxu0 %v1636
      %1790 = vmatprep.subr.bf16.mxu0 0
      %1791 = vmatpush1.bf16.msra.mxu0 %v1635
      %1792 = vmatprep.subr.bf16.mxu0 0
      %1793 = vmatpush1.bf16.msra.mxu0 %v1634
      %1794 = vmatprep.subr.bf16.mxu0 0
      %1795 = vmatpush2.bf16.msra.mxu0 %v1649
      %1796 = vmatprep.subr.bf16.mxu0 0
      %1797 = vmatpush2.bf16.msra.mxu0 %v1648
      %1798 = vmatprep.subr.bf16.mxu0 0
      %1799 = vmatpush2.bf16.msra.mxu0 %v1647
      %1800 = vmatprep.subr.bf16.mxu0 0
      %1801 = vmatpush2.bf16.msra.mxu0 %v1646
      %1802 = vmatprep.subr.bf16.mxu0 0
      %1803 = vmatpush2.bf16.msra.mxu0 %v1645
      %1804 = vmatprep.subr.bf16.mxu0 0
      %1805 = vmatpush2.bf16.msra.mxu0 %v1644
      %1806 = vmatprep.subr.bf16.mxu0 0
      %1807 = vmatpush2.bf16.msra.mxu0 %v1643
      %1808 = vmatprep.subr.bf16.mxu0 0
      %1809 = vmatpush2.bf16.msra.mxu0 %v1642
      %1810 = vmatprep.mubr.bf16.mxu0 %v727
      %1811 = vmatmul.mubr.bf16.gmra.mxu0 %v404
      %v1812 = vpop.f32.mrf.mxu0
      %v1813 = vadd.f32 0.0, %v1812
      %v1814 = vpop.f32.mrf.mxu0
      %v1815 = vpop.f32.mrf.mxu0
      %v1816 = vadd.f32 0.0, %v1815
      %v1817 = vpop.f32.mrf.mxu0
      %1818 = vmatprep.mubr.bf16.mxu0 %v751
      %1819 = vmatmul.mubr.bf16.gmra.mxu0 %v418
      %v1820 = vpop.f32.mrf.mxu0
      %v1821 = vadd.f32 0.0, %v1820
      %v1822 = vpop.f32.mrf.mxu0
      %v1823 = vpop.f32.mrf.mxu0
      %v1824 = vadd.f32 0.0, %v1823
      %v1825 = vpop.f32.mrf.mxu0
      %1826 = vmatprep.mubr.bf16.mxu0 %v775
      %1827 = vmatmul.mubr.bf16.gmra.mxu0 %v432
      %v1828 = vpop.f32.mrf.mxu0
      %v1829 = vadd.f32 0.0, %v1828
      %v1830 = vpop.f32.mrf.mxu0
      %v1831 = vpop.f32.mrf.mxu0
      %v1832 = vadd.f32 0.0, %v1831
      %v1833 = vpop.f32.mrf.mxu0
      %1834 = vmatprep.mubr.bf16.mxu0 %v799
      %1835 = vmatmul.mubr.bf16.gmra.mxu0 %v446
      %v1836 = vpop.f32.mrf.mxu0
      %v1837 = vadd.f32 0.0, %v1836
      %v1838 = vpop.f32.mrf.mxu0
      %v1839 = vpop.f32.mrf.mxu0
      %v1840 = vadd.f32 0.0, %v1839
      %v1841 = vpop.f32.mrf.mxu0
      %1842 = vmatprep.mubr.bf16.mxu0 %v823
      %1843 = vmatmul.mubr.bf16.gmra.mxu0 %v460
      %v1844 = vpop.f32.mrf.mxu0
      %v1845 = vadd.f32 0.0, %v1844
      %v1846 = vpop.f32.mrf.mxu0
      %v1847 = vpop.f32.mrf.mxu0
      %v1848 = vadd.f32 0.0, %v1847
      %v1849 = vpop.f32.mrf.mxu0
      %1850 = vmatprep.mubr.bf16.mxu0 %v847
      %1851 = vmatmul.mubr.bf16.gmra.mxu0 %v474
      %v1852 = vpop.f32.mrf.mxu0
      %v1853 = vadd.f32 0.0, %v1852
      %v1854 = vpop.f32.mrf.mxu0
      %v1855 = vpop.f32.mrf.mxu0
      %v1856 = vadd.f32 0.0, %v1855
      %v1857 = vpop.f32.mrf.mxu0
      %1858 = vmatprep.mubr.bf16.mxu0 %v871
      %1859 = vmatmul.mubr.bf16.gmra.mxu0 %v488
      %v1860 = vpop.f32.mrf.mxu0
      %v1861 = vadd.f32 0.0, %v1860
      %v1862 = vpop.f32.mrf.mxu0
      %v1863 = vpop.f32.mrf.mxu0
      %v1864 = vadd.f32 0.0, %v1863
      %v1865 = vpop.f32.mrf.mxu0
      %1866 = vmatprep.mubr.bf16.mxu0 %v895
      %1867 = vmatmul.mubr.bf16.gmra.mxu0 %v502
      %v1868 = vpop.f32.mrf.mxu0
      %v1869 = vadd.f32 0.0, %v1868
      %v1870 = vpop.f32.mrf.mxu0
      %v1871 = vpop.f32.mrf.mxu0
      %v1872 = vadd.f32 0.0, %v1871
      %v1873 = vpop.f32.mrf.mxu0
      %1874 = vmatprep.mubr.bf16.mxu0 %v919
      %1875 = vmatmul.mubr.bf16.gmra.mxu0 %v516
      %v1876 = vpop.f32.mrf.mxu0
      %v1877 = vadd.f32 0.0, %v1876
      %v1878 = vpop.f32.mrf.mxu0
      %v1879 = vpop.f32.mrf.mxu0
      %v1880 = vadd.f32 0.0, %v1879
      %v1881 = vpop.f32.mrf.mxu0
      %1882 = vmatprep.mubr.bf16.mxu0 %v943
      %1883 = vmatmul.mubr.bf16.gmra.mxu0 %v530
      %v1884 = vpop.f32.mrf.mxu0
      %v1885 = vadd.f32 0.0, %v1884
      %v1886 = vpop.f32.mrf.mxu0
      %v1887 = vpop.f32.mrf.mxu0
      %v1888 = vadd.f32 0.0, %v1887
      %v1889 = vpop.f32.mrf.mxu0
      %1890 = vmatprep.mubr.bf16.mxu0 %v967
      %1891 = vmatmul.mubr.bf16.gmra.mxu0 %v544
      %v1892 = vpop.f32.mrf.mxu0
      %v1893 = vadd.f32 0.0, %v1892
      %v1894 = vpop.f32.mrf.mxu0
      %v1895 = vpop.f32.mrf.mxu0
      %v1896 = vadd.f32 0.0, %v1895
      %v1897 = vpop.f32.mrf.mxu0
      %1898 = vmatprep.mubr.bf16.mxu0 %v991
      %1899 = vmatmul.mubr.bf16.gmra.mxu0 %v558
      %v1900 = vpop.f32.mrf.mxu0
      %v1901 = vadd.f32 0.0, %v1900
      %v1902 = vpop.f32.mrf.mxu0
      %v1903 = vpop.f32.mrf.mxu0
      %v1904 = vadd.f32 0.0, %v1903
      %v1905 = vpop.f32.mrf.mxu0
      %1906 = vmatprep.mubr.bf16.mxu0 %v1015
      %1907 = vmatmul.mubr.bf16.gmra.mxu0 %v572
      %v1908 = vpop.f32.mrf.mxu0
      %v1909 = vadd.f32 0.0, %v1908
      %v1910 = vpop.f32.mrf.mxu0
      %v1911 = vpop.f32.mrf.mxu0
      %v1912 = vadd.f32 0.0, %v1911
      %v1913 = vpop.f32.mrf.mxu0
      %1914 = vmatprep.mubr.bf16.mxu0 %v1039
      %1915 = vmatmul.mubr.bf16.gmra.mxu0 %v586
      %v1916 = vpop.f32.mrf.mxu0
      %v1917 = vadd.f32 0.0, %v1916
      %v1918 = vpop.f32.mrf.mxu0
      %v1919 = vpop.f32.mrf.mxu0
      %v1920 = vadd.f32 0.0, %v1919
      %v1921 = vpop.f32.mrf.mxu0
      %1922 = vmatprep.mubr.bf16.mxu0 %v1063
      %1923 = vmatmul.mubr.bf16.gmra.mxu0 %v600
      %v1924 = vpop.f32.mrf.mxu0
      %v1925 = vadd.f32 0.0, %v1924
      %v1926 = vpop.f32.mrf.mxu0
      %v1927 = vpop.f32.mrf.mxu0
      %v1928 = vadd.f32 0.0, %v1927
      %v1929 = vpop.f32.mrf.mxu0
      %1930 = vmatprep.mubr.bf16.mxu0 %v1087
      %1931 = vmatmul.mubr.bf16.gmra.mxu0 %v614
      %v1932 = vpop.f32.mrf.mxu0
      %v1933 = vadd.f32 0.0, %v1932
      %v1934 = vpop.f32.mrf.mxu0
      %v1935 = vpop.f32.mrf.mxu0
      %v1936 = vadd.f32 0.0, %v1935
      %v1937 = vpop.f32.mrf.mxu0
      %1938 = vdwg.mxu0
      %1939 = vmatprep.subr.bf16.mxu0 0
      %1940 = vmatpush1.bf16.msra.mxu0 %v1657
      %1941 = vmatprep.subr.bf16.mxu0 0
      %1942 = vmatpush1.bf16.msra.mxu0 %v1656
      %1943 = vmatprep.subr.bf16.mxu0 0
      %1944 = vmatpush1.bf16.msra.mxu0 %v1655
      %1945 = vmatprep.subr.bf16.mxu0 0
      %1946 = vmatpush1.bf16.msra.mxu0 %v1654
      %1947 = vmatprep.subr.bf16.mxu0 0
      %1948 = vmatpush1.bf16.msra.mxu0 %v1653
      %1949 = vmatprep.subr.bf16.mxu0 0
      %1950 = vmatpush1.bf16.msra.mxu0 %v1652
      %1951 = vmatprep.subr.bf16.mxu0 0
      %1952 = vmatpush1.bf16.msra.mxu0 %v1651
      %1953 = vmatprep.subr.bf16.mxu0 0
      %1954 = vmatpush1.bf16.msra.mxu0 %v1650
      %1955 = vmatprep.subr.bf16.mxu0 0
      %1956 = vmatpush2.bf16.msra.mxu0 %v1665
      %1957 = vmatprep.subr.bf16.mxu0 0
      %1958 = vmatpush2.bf16.msra.mxu0 %v1664
      %1959 = vmatprep.subr.bf16.mxu0 0
      %1960 = vmatpush2.bf16.msra.mxu0 %v1663
      %1961 = vmatprep.subr.bf16.mxu0 0
      %1962 = vmatpush2.bf16.msra.mxu0 %v1662
      %1963 = vmatprep.subr.bf16.mxu0 0
      %1964 = vmatpush2.bf16.msra.mxu0 %v1661
      %1965 = vmatprep.subr.bf16.mxu0 0
      %1966 = vmatpush2.bf16.msra.mxu0 %v1660
      %1967 = vmatprep.subr.bf16.mxu0 0
      %1968 = vmatpush2.bf16.msra.mxu0 %v1659
      %1969 = vmatprep.subr.bf16.mxu0 0
      %1970 = vmatpush2.bf16.msra.mxu0 %v1658
      %1971 = vmatprep.mubr.bf16.mxu0 %v418
      %1972 = vmatmul.mubr.bf16.gmra.mxu0 %v739
      %v1973 = vpop.f32.mrf.mxu0
      %v1974 = vadd.f32 %v1813, %v1973
      %v1975 = vpop.f32.mrf.mxu0
      %v1976 = vpop.f32.mrf.mxu0
      %v1977 = vadd.f32 %v1816, %v1976
      %v1978 = vpop.f32.mrf.mxu0
      %1979 = vmatprep.mubr.bf16.mxu0 %v432
      %1980 = vmatmul.mubr.bf16.gmra.mxu0 %v763
      %v1981 = vpop.f32.mrf.mxu0
      %v1982 = vadd.f32 %v1821, %v1981
      %v1983 = vpop.f32.mrf.mxu0
      %v1984 = vpop.f32.mrf.mxu0
      %v1985 = vadd.f32 %v1824, %v1984
      %v1986 = vpop.f32.mrf.mxu0
      %1987 = vmatprep.mubr.bf16.mxu0 %v446
      %1988 = vmatmul.mubr.bf16.gmra.mxu0 %v787
      %v1989 = vpop.f32.mrf.mxu0
      %v1990 = vadd.f32 %v1829, %v1989
      %v1991 = vpop.f32.mrf.mxu0
      %v1992 = vpop.f32.mrf.mxu0
      %v1993 = vadd.f32 %v1832, %v1992
      %v1994 = vpop.f32.mrf.mxu0
      %1995 = vmatprep.mubr.bf16.mxu0 %v460
      %1996 = vmatmul.mubr.bf16.gmra.mxu0 %v811
      %v1997 = vpop.f32.mrf.mxu0
      %v1998 = vadd.f32 %v1837, %v1997
      %v1999 = vpop.f32.mrf.mxu0
      %v2000 = vpop.f32.mrf.mxu0
      %v2001 = vadd.f32 %v1840, %v2000
      %v2002 = vpop.f32.mrf.mxu0
      %2003 = vmatprep.mubr.bf16.mxu0 %v474
      %2004 = vmatmul.mubr.bf16.gmra.mxu0 %v835
      %v2005 = vpop.f32.mrf.mxu0
      %v2006 = vadd.f32 %v1845, %v2005
      %v2007 = vpop.f32.mrf.mxu0
      %v2008 = vpop.f32.mrf.mxu0
      %v2009 = vadd.f32 %v1848, %v2008
      %v2010 = vpop.f32.mrf.mxu0
      %2011 = vmatprep.mubr.bf16.mxu0 %v488
      %2012 = vmatmul.mubr.bf16.gmra.mxu0 %v859
      %v2013 = vpop.f32.mrf.mxu0
      %v2014 = vadd.f32 %v1853, %v2013
      %v2015 = vpop.f32.mrf.mxu0
      %v2016 = vpop.f32.mrf.mxu0
      %v2017 = vadd.f32 %v1856, %v2016
      %v2018 = vpop.f32.mrf.mxu0
      %2019 = vmatprep.mubr.bf16.mxu0 %v502
      %2020 = vmatmul.mubr.bf16.gmra.mxu0 %v883
      %v2021 = vpop.f32.mrf.mxu0
      %v2022 = vadd.f32 %v1861, %v2021
      %v2023 = vpop.f32.mrf.mxu0
      %v2024 = vpop.f32.mrf.mxu0
      %v2025 = vadd.f32 %v1864, %v2024
      %v2026 = vpop.f32.mrf.mxu0
      %2027 = vmatprep.mubr.bf16.mxu0 %v516
      %2028 = vmatmul.mubr.bf16.gmra.mxu0 %v907
      %v2029 = vpop.f32.mrf.mxu0
      %v2030 = vadd.f32 %v1869, %v2029
      %v2031 = vpop.f32.mrf.mxu0
      %v2032 = vpop.f32.mrf.mxu0
      %v2033 = vadd.f32 %v1872, %v2032
      %v2034 = vpop.f32.mrf.mxu0
      %2035 = vmatprep.mubr.bf16.mxu0 %v530
      %2036 = vmatmul.mubr.bf16.gmra.mxu0 %v931
      %v2037 = vpop.f32.mrf.mxu0
      %v2038 = vadd.f32 %v1877, %v2037
      %v2039 = vpop.f32.mrf.mxu0
      %v2040 = vpop.f32.mrf.mxu0
      %v2041 = vadd.f32 %v1880, %v2040
      %v2042 = vpop.f32.mrf.mxu0
      %2043 = vmatprep.mubr.bf16.mxu0 %v544
      %2044 = vmatmul.mubr.bf16.gmra.mxu0 %v955
      %v2045 = vpop.f32.mrf.mxu0
      %v2046 = vadd.f32 %v1885, %v2045
      %v2047 = vpop.f32.mrf.mxu0
      %v2048 = vpop.f32.mrf.mxu0
      %v2049 = vadd.f32 %v1888, %v2048
      %v2050 = vpop.f32.mrf.mxu0
      %2051 = vmatprep.mubr.bf16.mxu0 %v558
      %2052 = vmatmul.mubr.bf16.gmra.mxu0 %v979
      %v2053 = vpop.f32.mrf.mxu0
      %v2054 = vadd.f32 %v1893, %v2053
      %v2055 = vpop.f32.mrf.mxu0
      %v2056 = vpop.f32.mrf.mxu0
      %v2057 = vadd.f32 %v1896, %v2056
      %v2058 = vpop.f32.mrf.mxu0
      %2059 = vmatprep.mubr.bf16.mxu0 %v572
      %2060 = vmatmul.mubr.bf16.gmra.mxu0 %v1003
      %v2061 = vpop.f32.mrf.mxu0
      %v2062 = vadd.f32 %v1901, %v2061
      %v2063 = vpop.f32.mrf.mxu0
      %v2064 = vpop.f32.mrf.mxu0
      %v2065 = vadd.f32 %v1904, %v2064
      %v2066 = vpop.f32.mrf.mxu0
      %2067 = vmatprep.mubr.bf16.mxu0 %v586
      %2068 = vmatmul.mubr.bf16.gmra.mxu0 %v1027
      %v2069 = vpop.f32.mrf.mxu0
      %v2070 = vadd.f32 %v1909, %v2069
      %v2071 = vpop.f32.mrf.mxu0
      %v2072 = vpop.f32.mrf.mxu0
      %v2073 = vadd.f32 %v1912, %v2072
      %v2074 = vpop.f32.mrf.mxu0
      %2075 = vmatprep.mubr.bf16.mxu0 %v600
      %2076 = vmatmul.mubr.bf16.gmra.mxu0 %v1051
      %v2077 = vpop.f32.mrf.mxu0
      %v2078 = vadd.f32 %v1917, %v2077
      %v2079 = vpop.f32.mrf.mxu0
      %v2080 = vpop.f32.mrf.mxu0
      %v2081 = vadd.f32 %v1920, %v2080
      %v2082 = vpop.f32.mrf.mxu0
      %2083 = vmatprep.mubr.bf16.mxu0 %v614
      %2084 = vmatmul.mubr.bf16.gmra.mxu0 %v1075
      %v2085 = vpop.f32.mrf.mxu0
      %v2086 = vadd.f32 %v1925, %v2085
      %v2087 = vpop.f32.mrf.mxu0
      %v2088 = vpop.f32.mrf.mxu0
      %v2089 = vadd.f32 %v1928, %v2088
      %v2090 = vpop.f32.mrf.mxu0
      %2091 = vmatprep.mubr.bf16.mxu0 %v685
      %2092 = vmatmul.mubr.bf16.gmra.mxu0 %v1099
      %v2093 = vpop.f32.mrf.mxu0
      %v2094 = vadd.f32 %v1933, %v2093
      %v2095 = vpop.f32.mrf.mxu0
      %v2096 = vpop.f32.mrf.mxu0
      %v2097 = vadd.f32 %v1936, %v2096
      %v2098 = vpop.f32.mrf.mxu0
      %2099 = vdwg.mxu0
      %2100 = vmatprep.subr.bf16.mxu0 0
      %2101 = vmatpush1.bf16.msra.mxu0 %v1673
      %2102 = vmatprep.subr.bf16.mxu0 0
      %2103 = vmatpush1.bf16.msra.mxu0 %v1672
      %2104 = vmatprep.subr.bf16.mxu0 0
      %2105 = vmatpush1.bf16.msra.mxu0 %v1671
      %2106 = vmatprep.subr.bf16.mxu0 0
      %2107 = vmatpush1.bf16.msra.mxu0 %v1670
      %2108 = vmatprep.subr.bf16.mxu0 0
      %2109 = vmatpush1.bf16.msra.mxu0 %v1669
      %2110 = vmatprep.subr.bf16.mxu0 0
      %2111 = vmatpush1.bf16.msra.mxu0 %v1668
      %2112 = vmatprep.subr.bf16.mxu0 0
      %2113 = vmatpush1.bf16.msra.mxu0 %v1667
      %2114 = vmatprep.subr.bf16.mxu0 0
      %2115 = vmatpush1.bf16.msra.mxu0 %v1666
      %2116 = vmatprep.subr.bf16.mxu0 0
      %2117 = vmatpush2.bf16.msra.mxu0 %v1681
      %2118 = vmatprep.subr.bf16.mxu0 0
      %2119 = vmatpush2.bf16.msra.mxu0 %v1680
      %2120 = vmatprep.subr.bf16.mxu0 0
      %2121 = vmatpush2.bf16.msra.mxu0 %v1679
      %2122 = vmatprep.subr.bf16.mxu0 0
      %2123 = vmatpush2.bf16.msra.mxu0 %v1678
      %2124 = vmatprep.subr.bf16.mxu0 0
      %2125 = vmatpush2.bf16.msra.mxu0 %v1677
      %2126 = vmatprep.subr.bf16.mxu0 0
      %2127 = vmatpush2.bf16.msra.mxu0 %v1676
      %2128 = vmatprep.subr.bf16.mxu0 0
      %2129 = vmatpush2.bf16.msra.mxu0 %v1675
      %2130 = vmatprep.subr.bf16.mxu0 0
      %2131 = vmatpush2.bf16.msra.mxu0 %v1674
      %2132 = vmatprep.mubr.bf16.mxu0 %v763
      %2133 = vmatmul.mubr.bf16.gmra.mxu0 %v751
      %v2134 = vpop.f32.mrf.mxu0
      %v2135 = vadd.f32 %v1974, %v2134
      %v2136 = vpop.f32.mrf.mxu0
      %v2137 = vpop.f32.mrf.mxu0
      %v2138 = vadd.f32 %v1977, %v2137
      %v2139 = vpop.f32.mrf.mxu0
      %2140 = vmatprep.mubr.bf16.mxu0 %v787
      %2141 = vmatmul.mubr.bf16.gmra.mxu0 %v775
      %v2142 = vpop.f32.mrf.mxu0
      %v2143 = vadd.f32 %v1982, %v2142
      %v2144 = vpop.f32.mrf.mxu0
      %v2145 = vpop.f32.mrf.mxu0
      %v2146 = vadd.f32 %v1985, %v2145
      %v2147 = vpop.f32.mrf.mxu0
      %2148 = vmatprep.mubr.bf16.mxu0 %v811
      %2149 = vmatmul.mubr.bf16.gmra.mxu0 %v799
      %v2150 = vpop.f32.mrf.mxu0
      %v2151 = vadd.f32 %v1990, %v2150
      %v2152 = vpop.f32.mrf.mxu0
      %v2153 = vpop.f32.mrf.mxu0
      %v2154 = vadd.f32 %v1993, %v2153
      %v2155 = vpop.f32.mrf.mxu0
      %2156 = vmatprep.mubr.bf16.mxu0 %v835
      %2157 = vmatmul.mubr.bf16.gmra.mxu0 %v823
      %v2158 = vpop.f32.mrf.mxu0
      %v2159 = vadd.f32 %v1998, %v2158
      %v2160 = vpop.f32.mrf.mxu0
      %v2161 = vpop.f32.mrf.mxu0
      %v2162 = vadd.f32 %v2001, %v2161
      %v2163 = vpop.f32.mrf.mxu0
      %2164 = vmatprep.mubr.bf16.mxu0 %v859
      %2165 = vmatmul.mubr.bf16.gmra.mxu0 %v847
      %v2166 = vpop.f32.mrf.mxu0
      %v2167 = vadd.f32 %v2006, %v2166
      %v2168 = vpop.f32.mrf.mxu0
      %v2169 = vpop.f32.mrf.mxu0
      %v2170 = vadd.f32 %v2009, %v2169
      %v2171 = vpop.f32.mrf.mxu0
      %2172 = vmatprep.mubr.bf16.mxu0 %v883
      %2173 = vmatmul.mubr.bf16.gmra.mxu0 %v871
      %v2174 = vpop.f32.mrf.mxu0
      %v2175 = vadd.f32 %v2014, %v2174
      %v2176 = vpop.f32.mrf.mxu0
      %v2177 = vpop.f32.mrf.mxu0
      %v2178 = vadd.f32 %v2017, %v2177
      %v2179 = vpop.f32.mrf.mxu0
      %2180 = vmatprep.mubr.bf16.mxu0 %v907
      %2181 = vmatmul.mubr.bf16.gmra.mxu0 %v895
      %v2182 = vpop.f32.mrf.mxu0
      %v2183 = vadd.f32 %v2022, %v2182
      %v2184 = vpop.f32.mrf.mxu0
      %v2185 = vpop.f32.mrf.mxu0
      %v2186 = vadd.f32 %v2025, %v2185
      %v2187 = vpop.f32.mrf.mxu0
      %2188 = vmatprep.mubr.bf16.mxu0 %v931
      %2189 = vmatmul.mubr.bf16.gmra.mxu0 %v919
      %v2190 = vpop.f32.mrf.mxu0
      %v2191 = vadd.f32 %v2030, %v2190
      %v2192 = vpop.f32.mrf.mxu0
      %v2193 = vpop.f32.mrf.mxu0
      %v2194 = vadd.f32 %v2033, %v2193
      %v2195 = vpop.f32.mrf.mxu0
      %2196 = vmatprep.mubr.bf16.mxu0 %v955
      %2197 = vmatmul.mubr.bf16.gmra.mxu0 %v943
      %v2198 = vpop.f32.mrf.mxu0
      %v2199 = vadd.f32 %v2038, %v2198
      %v2200 = vpop.f32.mrf.mxu0
      %v2201 = vpop.f32.mrf.mxu0
      %v2202 = vadd.f32 %v2041, %v2201
      %v2203 = vpop.f32.mrf.mxu0
      %2204 = vmatprep.mubr.bf16.mxu0 %v979
      %2205 = vmatmul.mubr.bf16.gmra.mxu0 %v967
      %v2206 = vpop.f32.mrf.mxu0
      %v2207 = vadd.f32 %v2046, %v2206
      %v2208 = vpop.f32.mrf.mxu0
      %v2209 = vpop.f32.mrf.mxu0
      %v2210 = vadd.f32 %v2049, %v2209
      %v2211 = vpop.f32.mrf.mxu0
      %2212 = vmatprep.mubr.bf16.mxu0 %v1003
      %2213 = vmatmul.mubr.bf16.gmra.mxu0 %v991
      %v2214 = vpop.f32.mrf.mxu0
      %v2215 = vadd.f32 %v2054, %v2214
      %v2216 = vpop.f32.mrf.mxu0
      %v2217 = vpop.f32.mrf.mxu0
      %v2218 = vadd.f32 %v2057, %v2217
      %v2219 = vpop.f32.mrf.mxu0
      %2220 = vmatprep.mubr.bf16.mxu0 %v1027
      %2221 = vmatmul.mubr.bf16.gmra.mxu0 %v1015
      %v2222 = vpop.f32.mrf.mxu0
      %v2223 = vadd.f32 %v2062, %v2222
      %v2224 = vpop.f32.mrf.mxu0
      %v2225 = vpop.f32.mrf.mxu0
      %v2226 = vadd.f32 %v2065, %v2225
      %v2227 = vpop.f32.mrf.mxu0
      %2228 = vmatprep.mubr.bf16.mxu0 %v1051
      %2229 = vmatmul.mubr.bf16.gmra.mxu0 %v1039
      %v2230 = vpop.f32.mrf.mxu0
      %v2231 = vadd.f32 %v2070, %v2230
      %v2232 = vpop.f32.mrf.mxu0
      %v2233 = vpop.f32.mrf.mxu0
      %v2234 = vadd.f32 %v2073, %v2233
      %v2235 = vpop.f32.mrf.mxu0
      %2236 = vmatprep.mubr.bf16.mxu0 %v1075
      %2237 = vmatmul.mubr.bf16.gmra.mxu0 %v1063
      %v2238 = vpop.f32.mrf.mxu0
      %v2239 = vadd.f32 %v2078, %v2238
      %v2240 = vpop.f32.mrf.mxu0
      %v2241 = vpop.f32.mrf.mxu0
      %v2242 = vadd.f32 %v2081, %v2241
      %v2243 = vpop.f32.mrf.mxu0
      %2244 = vmatprep.mubr.bf16.mxu0 %v1099
      %2245 = vmatmul.mubr.bf16.gmra.mxu0 %v1087
      %v2246 = vpop.f32.mrf.mxu0
      %v2247 = vadd.f32 %v2086, %v2246
      %v2248 = vpop.f32.mrf.mxu0
      %v2249 = vpop.f32.mrf.mxu0
      %v2250 = vadd.f32 %v2089, %v2249
      %v2251 = vpop.f32.mrf.mxu0
      %2252 = vmatprep.mubr.bf16.mxu0 %v1123
      %2253 = vmatmul.mubr.bf16.gmra.mxu0 %v1111
      %v2254 = vpop.f32.mrf.mxu0
      %v2255 = vadd.f32 %v2094, %v2254
      %v2256 = vpop.f32.mrf.mxu0
      %v2257 = vpop.f32.mrf.mxu0
      %v2258 = vadd.f32 %v2097, %v2257
      %v2259 = vpop.f32.mrf.mxu0
      %2260 = vdwg.mxu0
      %2261 = vmatprep.subr.bf16.mxu0 0
      %2262 = vmatpush1.bf16.msra.mxu0 %v1689
      %2263 = vmatprep.subr.bf16.mxu0 0
      %2264 = vmatpush1.bf16.msra.mxu0 %v1688
      %2265 = vmatprep.subr.bf16.mxu0 0
      %2266 = vmatpush1.bf16.msra.mxu0 %v1687
      %2267 = vmatprep.subr.bf16.mxu0 0
      %2268 = vmatpush1.bf16.msra.mxu0 %v1686
      %2269 = vmatprep.subr.bf16.mxu0 0
      %2270 = vmatpush1.bf16.msra.mxu0 %v1685
      %2271 = vmatprep.subr.bf16.mxu0 0
      %2272 = vmatpush1.bf16.msra.mxu0 %v1684
      %2273 = vmatprep.subr.bf16.mxu0 0
      %2274 = vmatpush1.bf16.msra.mxu0 %v1683
      %2275 = vmatprep.subr.bf16.mxu0 0
      %2276 = vmatpush1.bf16.msra.mxu0 %v1682
      %2277 = vmatprep.subr.bf16.mxu0 0
      %2278 = vmatpush2.bf16.msra.mxu0 %v1697
      %2279 = vmatprep.subr.bf16.mxu0 0
      %2280 = vmatpush2.bf16.msra.mxu0 %v1696
      %2281 = vmatprep.subr.bf16.mxu0 0
      %2282 = vmatpush2.bf16.msra.mxu0 %v1695
      %2283 = vmatprep.subr.bf16.mxu0 0
      %2284 = vmatpush2.bf16.msra.mxu0 %v1694
      %2285 = vmatprep.subr.bf16.mxu0 0
      %2286 = vmatpush2.bf16.msra.mxu0 %v1693
      %2287 = vmatprep.subr.bf16.mxu0 0
      %2288 = vmatpush2.bf16.msra.mxu0 %v1692
      %2289 = vmatprep.subr.bf16.mxu0 0
      %2290 = vmatpush2.bf16.msra.mxu0 %v1691
      %2291 = vmatprep.subr.bf16.mxu0 0
      %2292 = vmatpush2.bf16.msra.mxu0 %v1690
      %2293 = vmatprep.mubr.bf16.mxu0 %v775
      %2294 = vmatmul.mubr.bf16.gmra.mxu0 %v432
      %v2295 = vpop.f32.mrf.mxu0
      %v2296 = vadd.f32 %v2135, %v2295
      %v2297 = vpop.f32.mrf.mxu0
      %v2298 = vpop.f32.mrf.mxu0
      %v2299 = vadd.f32 %v2138, %v2298
      %v2300 = vpop.f32.mrf.mxu0
      %2301 = vmatprep.mubr.bf16.mxu0 %v799
      %2302 = vmatmul.mubr.bf16.gmra.mxu0 %v446
      %v2303 = vpop.f32.mrf.mxu0
      %v2304 = vadd.f32 %v2143, %v2303
      %v2305 = vpop.f32.mrf.mxu0
      %v2306 = vpop.f32.mrf.mxu0
      %v2307 = vadd.f32 %v2146, %v2306
      %v2308 = vpop.f32.mrf.mxu0
      %2309 = vmatprep.mubr.bf16.mxu0 %v823
      %2310 = vmatmul.mubr.bf16.gmra.mxu0 %v460
      %v2311 = vpop.f32.mrf.mxu0
      %v2312 = vadd.f32 %v2151, %v2311
      %v2313 = vpop.f32.mrf.mxu0
      %v2314 = vpop.f32.mrf.mxu0
      %v2315 = vadd.f32 %v2154, %v2314
      %v2316 = vpop.f32.mrf.mxu0
      %2317 = vmatprep.mubr.bf16.mxu0 %v847
      %2318 = vmatmul.mubr.bf16.gmra.mxu0 %v474
      %v2319 = vpop.f32.mrf.mxu0
      %v2320 = vadd.f32 %v2159, %v2319
      %v2321 = vpop.f32.mrf.mxu0
      %v2322 = vpop.f32.mrf.mxu0
      %v2323 = vadd.f32 %v2162, %v2322
      %v2324 = vpop.f32.mrf.mxu0
      %2325 = vmatprep.mubr.bf16.mxu0 %v871
      %2326 = vmatmul.mubr.bf16.gmra.mxu0 %v488
      %v2327 = vpop.f32.mrf.mxu0
      %v2328 = vadd.f32 %v2167, %v2327
      %v2329 = vpop.f32.mrf.mxu0
      %v2330 = vpop.f32.mrf.mxu0
      %v2331 = vadd.f32 %v2170, %v2330
      %v2332 = vpop.f32.mrf.mxu0
      %2333 = vmatprep.mubr.bf16.mxu0 %v895
      %2334 = vmatmul.mubr.bf16.gmra.mxu0 %v502
      %v2335 = vpop.f32.mrf.mxu0
      %v2336 = vadd.f32 %v2175, %v2335
      %v2337 = vpop.f32.mrf.mxu0
      %v2338 = vpop.f32.mrf.mxu0
      %v2339 = vadd.f32 %v2178, %v2338
      %v2340 = vpop.f32.mrf.mxu0
      %2341 = vmatprep.mubr.bf16.mxu0 %v919
      %2342 = vmatmul.mubr.bf16.gmra.mxu0 %v516
      %v2343 = vpop.f32.mrf.mxu0
      %v2344 = vadd.f32 %v2183, %v2343
      %v2345 = vpop.f32.mrf.mxu0
      %v2346 = vpop.f32.mrf.mxu0
      %v2347 = vadd.f32 %v2186, %v2346
      %v2348 = vpop.f32.mrf.mxu0
      %2349 = vmatprep.mubr.bf16.mxu0 %v943
      %2350 = vmatmul.mubr.bf16.gmra.mxu0 %v530
      %v2351 = vpop.f32.mrf.mxu0
      %v2352 = vadd.f32 %v2191, %v2351
      %v2353 = vpop.f32.mrf.mxu0
      %v2354 = vpop.f32.mrf.mxu0
      %v2355 = vadd.f32 %v2194, %v2354
      %v2356 = vpop.f32.mrf.mxu0
      %2357 = vmatprep.mubr.bf16.mxu0 %v967
      %2358 = vmatmul.mubr.bf16.gmra.mxu0 %v544
      %v2359 = vpop.f32.mrf.mxu0
      %v2360 = vadd.f32 %v2199, %v2359
      %v2361 = vpop.f32.mrf.mxu0
      %v2362 = vpop.f32.mrf.mxu0
      %v2363 = vadd.f32 %v2202, %v2362
      %v2364 = vpop.f32.mrf.mxu0
      %2365 = vmatprep.mubr.bf16.mxu0 %v991
      %2366 = vmatmul.mubr.bf16.gmra.mxu0 %v558
      %v2367 = vpop.f32.mrf.mxu0
      %v2368 = vadd.f32 %v2207, %v2367
      %v2369 = vpop.f32.mrf.mxu0
      %v2370 = vpop.f32.mrf.mxu0
      %v2371 = vadd.f32 %v2210, %v2370
      %v2372 = vpop.f32.mrf.mxu0
      %2373 = vmatprep.mubr.bf16.mxu0 %v1015
      %2374 = vmatmul.mubr.bf16.gmra.mxu0 %v572
      %v2375 = vpop.f32.mrf.mxu0
      %v2376 = vadd.f32 %v2215, %v2375
      %v2377 = vpop.f32.mrf.mxu0
      %v2378 = vpop.f32.mrf.mxu0
      %v2379 = vadd.f32 %v2218, %v2378
      %v2380 = vpop.f32.mrf.mxu0
      %2381 = vmatprep.mubr.bf16.mxu0 %v1039
      %2382 = vmatmul.mubr.bf16.gmra.mxu0 %v586
      %v2383 = vpop.f32.mrf.mxu0
      %v2384 = vadd.f32 %v2223, %v2383
      %v2385 = vpop.f32.mrf.mxu0
      %v2386 = vpop.f32.mrf.mxu0
      %v2387 = vadd.f32 %v2226, %v2386
      %v2388 = vpop.f32.mrf.mxu0
      %2389 = vmatprep.mubr.bf16.mxu0 %v1063
      %2390 = vmatmul.mubr.bf16.gmra.mxu0 %v600
      %v2391 = vpop.f32.mrf.mxu0
      %v2392 = vadd.f32 %v2231, %v2391
      %v2393 = vpop.f32.mrf.mxu0
      %v2394 = vpop.f32.mrf.mxu0
      %v2395 = vadd.f32 %v2234, %v2394
      %v2396 = vpop.f32.mrf.mxu0
      %2397 = vmatprep.mubr.bf16.mxu0 %v1087
      %2398 = vmatmul.mubr.bf16.gmra.mxu0 %v614
      %v2399 = vpop.f32.mrf.mxu0
      %v2400 = vadd.f32 %v2239, %v2399
      %v2401 = vpop.f32.mrf.mxu0
      %v2402 = vpop.f32.mrf.mxu0
      %v2403 = vadd.f32 %v2242, %v2402
      %v2404 = vpop.f32.mrf.mxu0
      %2405 = vmatprep.mubr.bf16.mxu0 %v1111
      %2406 = vmatmul.mubr.bf16.gmra.mxu0 %v685
      %v2407 = vpop.f32.mrf.mxu0
      %v2408 = vadd.f32 %v2247, %v2407
      %v2409 = vpop.f32.mrf.mxu0
      %v2410 = vpop.f32.mrf.mxu0
      %v2411 = vadd.f32 %v2250, %v2410
      %v2412 = vpop.f32.mrf.mxu0
      %2413 = vmatprep.mubr.bf16.mxu0 %v1135
      %2414 = vmatmul.mubr.bf16.gmra.mxu0 %v710
      %v2415 = vpop.f32.mrf.mxu0
      %v2416 = vadd.f32 %v2255, %v2415
      %v2417 = vpop.f32.mrf.mxu0
      %v2418 = vpop.f32.mrf.mxu0
      %v2419 = vadd.f32 %v2258, %v2418
      %v2420 = vpop.f32.mrf.mxu0
      %2421 = vdwg.mxu0
      %2422 = vmatprep.subr.bf16.mxu0 0
      %2423 = vmatpush1.bf16.msra.mxu0 %v1705
      %2424 = vmatprep.subr.bf16.mxu0 0
      %2425 = vmatpush1.bf16.msra.mxu0 %v1704
      %2426 = vmatprep.subr.bf16.mxu0 0
      %2427 = vmatpush1.bf16.msra.mxu0 %v1703
      %2428 = vmatprep.subr.bf16.mxu0 0
      %2429 = vmatpush1.bf16.msra.mxu0 %v1702
      %2430 = vmatprep.subr.bf16.mxu0 0
      %2431 = vmatpush1.bf16.msra.mxu0 %v1701
      %2432 = vmatprep.subr.bf16.mxu0 0
      %2433 = vmatpush1.bf16.msra.mxu0 %v1700
      %2434 = vmatprep.subr.bf16.mxu0 0
      %2435 = vmatpush1.bf16.msra.mxu0 %v1699
      %2436 = vmatprep.subr.bf16.mxu0 0
      %2437 = vmatpush1.bf16.msra.mxu0 %v1698
      %2438 = vmatprep.subr.bf16.mxu0 0
      %2439 = vmatpush2.bf16.msra.mxu0 0
      %2440 = vmatprep.subr.bf16.mxu0 0
      %2441 = vmatpush2.bf16.msra.mxu0 0
      %2442 = vmatprep.subr.bf16.mxu0 0
      %2443 = vmatpush2.bf16.msra.mxu0 0
      %2444 = vmatprep.subr.bf16.mxu0 0
      %2445 = vmatpush2.bf16.msra.mxu0 0
      %2446 = vmatprep.subr.bf16.mxu0 0
      %2447 = vmatpush2.bf16.msra.mxu0 0
      %2448 = vmatprep.subr.bf16.mxu0 0
      %2449 = vmatpush2.bf16.msra.mxu0 0
      %2450 = vmatprep.subr.bf16.mxu0 0
      %2451 = vmatpush2.bf16.msra.mxu0 0
      %2452 = vmatprep.subr.bf16.mxu0 0
      %2453 = vmatpush2.bf16.msra.mxu0 0
      %2454 = vmatprep.mubr.bf16.mxu0 0
      %2455 = vmatmul.mubr.bf16.gmra.mxu0 %v787
      %v2456 = vpop.f32.mrf.mxu0
      %v2457 = vadd.f32 %v2296, %v2456
      %v2458 = vpop.f32.mrf.mxu0
      %v2459 = vpop.f32.mrf.mxu0
      %v2460 = vadd.f32 %v2299, %v2459
      %v2461 = vpop.f32.mrf.mxu0
      %2462 = vmatprep.mubr.bf16.mxu0 0
      %2463 = vmatmul.mubr.bf16.gmra.mxu0 %v811
      %v2464 = vpop.f32.mrf.mxu0
      %v2465 = vadd.f32 %v2304, %v2464
      %v2466 = vpop.f32.mrf.mxu0
      %v2467 = vpop.f32.mrf.mxu0
      %v2468 = vadd.f32 %v2307, %v2467
      %v2469 = vpop.f32.mrf.mxu0
      %2470 = vmatprep.mubr.bf16.mxu0 0
      %2471 = vmatmul.mubr.bf16.gmra.mxu0 %v835
      %v2472 = vpop.f32.mrf.mxu0
      %v2473 = vadd.f32 %v2312, %v2472
      %v2474 = vpop.f32.mrf.mxu0
      %v2475 = vpop.f32.mrf.mxu0
      %v2476 = vadd.f32 %v2315, %v2475
      %v2477 = vpop.f32.mrf.mxu0
      %2478 = vmatprep.mubr.bf16.mxu0 0
      %2479 = vmatmul.mubr.bf16.gmra.mxu0 %v859
      %v2480 = vpop.f32.mrf.mxu0
      %v2481 = vadd.f32 %v2320, %v2480
      %v2482 = vpop.f32.mrf.mxu0
      %v2483 = vpop.f32.mrf.mxu0
      %v2484 = vadd.f32 %v2323, %v2483
      %v2485 = vpop.f32.mrf.mxu0
      %2486 = vmatprep.mubr.bf16.mxu0 0
      %2487 = vmatmul.mubr.bf16.gmra.mxu0 %v883
      %v2488 = vpop.f32.mrf.mxu0
      %v2489 = vadd.f32 %v2328, %v2488
      %v2490 = vpop.f32.mrf.mxu0
      %v2491 = vpop.f32.mrf.mxu0
      %v2492 = vadd.f32 %v2331, %v2491
      %v2493 = vpop.f32.mrf.mxu0
      %2494 = vmatprep.mubr.bf16.mxu0 0
      %2495 = vmatmul.mubr.bf16.gmra.mxu0 %v907
      %v2496 = vpop.f32.mrf.mxu0
      %v2497 = vadd.f32 %v2336, %v2496
      %v2498 = vpop.f32.mrf.mxu0
      %v2499 = vpop.f32.mrf.mxu0
      %v2500 = vadd.f32 %v2339, %v2499
      %v2501 = vpop.f32.mrf.mxu0
      %2502 = vmatprep.mubr.bf16.mxu0 0
      %2503 = vmatmul.mubr.bf16.gmra.mxu0 %v931
      %v2504 = vpop.f32.mrf.mxu0
      %v2505 = vadd.f32 %v2344, %v2504
      %v2506 = vpop.f32.mrf.mxu0
      %v2507 = vpop.f32.mrf.mxu0
      %v2508 = vadd.f32 %v2347, %v2507
      %v2509 = vpop.f32.mrf.mxu0
      %2510 = vmatprep.mubr.bf16.mxu0 0
      %2511 = vmatmul.mubr.bf16.gmra.mxu0 %v955
      %v2512 = vpop.f32.mrf.mxu0
      %v2513 = vadd.f32 %v2352, %v2512
      %v2514 = vpop.f32.mrf.mxu0
      %v2515 = vpop.f32.mrf.mxu0
      %v2516 = vadd.f32 %v2355, %v2515
      %v2517 = vpop.f32.mrf.mxu0
      %2518 = vmatprep.mubr.bf16.mxu0 0
      %2519 = vmatmul.mubr.bf16.gmra.mxu0 %v979
      %v2520 = vpop.f32.mrf.mxu0
      %v2521 = vadd.f32 %v2360, %v2520
      %v2522 = vpop.f32.mrf.mxu0
      %v2523 = vpop.f32.mrf.mxu0
      %v2524 = vadd.f32 %v2363, %v2523
      %v2525 = vpop.f32.mrf.mxu0
      %2526 = vmatprep.mubr.bf16.mxu0 0
      %2527 = vmatmul.mubr.bf16.gmra.mxu0 %v1003
      %v2528 = vpop.f32.mrf.mxu0
      %v2529 = vadd.f32 %v2368, %v2528
      %v2530 = vpop.f32.mrf.mxu0
      %v2531 = vpop.f32.mrf.mxu0
      %v2532 = vadd.f32 %v2371, %v2531
      %v2533 = vpop.f32.mrf.mxu0
      %2534 = vmatprep.mubr.bf16.mxu0 0
      %2535 = vmatmul.mubr.bf16.gmra.mxu0 %v1027
      %v2536 = vpop.f32.mrf.mxu0
      %v2537 = vadd.f32 %v2376, %v2536
      %v2538 = vpop.f32.mrf.mxu0
      %v2539 = vpop.f32.mrf.mxu0
      %v2540 = vadd.f32 %v2379, %v2539
      %v2541 = vpop.f32.mrf.mxu0
      %2542 = vmatprep.mubr.bf16.mxu0 0
      %2543 = vmatmul.mubr.bf16.gmra.mxu0 %v1051
      %v2544 = vpop.f32.mrf.mxu0
      %v2545 = vadd.f32 %v2384, %v2544
      %v2546 = vpop.f32.mrf.mxu0
      %v2547 = vpop.f32.mrf.mxu0
      %v2548 = vadd.f32 %v2387, %v2547
      %v2549 = vpop.f32.mrf.mxu0
      %2550 = vmatprep.mubr.bf16.mxu0 0
      %2551 = vmatmul.mubr.bf16.gmra.mxu0 %v1075
      %v2552 = vpop.f32.mrf.mxu0
      %v2553 = vadd.f32 %v2392, %v2552
      %v2554 = vpop.f32.mrf.mxu0
      %v2555 = vpop.f32.mrf.mxu0
      %v2556 = vadd.f32 %v2395, %v2555
      %v2557 = vpop.f32.mrf.mxu0
      %2558 = vmatprep.mubr.bf16.mxu0 0
      %2559 = vmatmul.mubr.bf16.gmra.mxu0 %v1099
      %v2560 = vpop.f32.mrf.mxu0
      %v2561 = vadd.f32 %v2400, %v2560
      %v2562 = vpop.f32.mrf.mxu0
      %v2563 = vpop.f32.mrf.mxu0
      %v2564 = vadd.f32 %v2403, %v2563
      %v2565 = vpop.f32.mrf.mxu0
      %2566 = vmatprep.mubr.bf16.mxu0 0
      %2567 = vmatmul.mubr.bf16.gmra.mxu0 %v1123
      %v2568 = vpop.f32.mrf.mxu0
      %v2569 = vadd.f32 %v2408, %v2568
      %v2570 = vpop.f32.mrf.mxu0
      %v2571 = vpop.f32.mrf.mxu0
      %v2572 = vadd.f32 %v2411, %v2571
      %v2573 = vpop.f32.mrf.mxu0
      %2574 = vmatprep.mubr.bf16.mxu0 0
      %2575 = vmatmul.mubr.bf16.gmra.mxu0 %v1147
      %v2576 = vpop.f32.mrf.mxu0
      %v2577 = vadd.f32 %v2416, %v2576
      %v2578 = vpop.f32.mrf.mxu0
      %v2579 = vpop.f32.mrf.mxu0
      %v2580 = vadd.f32 %v2419, %v2579
      %v2581 = vpop.f32.mrf.mxu0
      %2582 = vdwg.mxu0
      %v2583 = vpack.c.bf16 %v2460, %v2457
      %v2584 = vpack.c.bf16 %v2468, %v2465
      %v2585 = vpack.c.bf16 %v2476, %v2473
      %v2586 = vpack.c.bf16 %v2484, %v2481
      %v2587 = vpack.c.bf16 %v2492, %v2489
      %v2588 = vpack.c.bf16 %v2500, %v2497
      %v2589 = vpack.c.bf16 %v2508, %v2505
      %v2590 = vpack.c.bf16 %v2516, %v2513
      %v2591 = vpack.c.bf16 %v2524, %v2521
      %v2592 = vpack.c.bf16 %v2532, %v2529
      %v2593 = vpack.c.bf16 %v2540, %v2537
      %v2594 = vpack.c.bf16 %v2548, %v2545
      %v2595 = vpack.c.bf16 %v2556, %v2553
      %v2596 = vpack.c.bf16 %v2564, %v2561
      %v2597 = vpack.c.bf16 %v2572, %v2569
      %v2598 = vpack.c.bf16 %v2580, %v2577
      %v2615 = vunpack.c.l.b16 %v2583
      %v2616 = vunpack.c.h.b16 %v2583
      %v2617 = vunpack.c.l.b16 %v2584
      %v2618 = vunpack.c.h.b16 %v2584
      %v2619 = vunpack.c.l.b16 %v2585
      %v2620 = vunpack.c.h.b16 %v2585
      %v2621 = vunpack.c.l.b16 %v2586
      %v2622 = vunpack.c.h.b16 %v2586
      %v2623 = vunpack.c.l.b16 %v2587
      %v2624 = vunpack.c.h.b16 %v2587
      %v2625 = vunpack.c.l.b16 %v2588
      %v2626 = vunpack.c.h.b16 %v2588
      %v2627 = vunpack.c.l.b16 %v2589
      %v2628 = vunpack.c.h.b16 %v2589
      %v2629 = vunpack.c.l.b16 %v2590
      %v2630 = vunpack.c.h.b16 %v2590
      %v2631 = vunpack.c.l.b16 %v2591
      %v2632 = vunpack.c.h.b16 %v2591
      %v2633 = vunpack.c.l.b16 %v2592
      %v2634 = vunpack.c.h.b16 %v2592
      %v2635 = vunpack.c.l.b16 %v2593
      %v2636 = vunpack.c.h.b16 %v2593
      %v2637 = vunpack.c.l.b16 %v2594
      %v2638 = vunpack.c.h.b16 %v2594
      %v2639 = vunpack.c.l.b16 %v2595
      %v2640 = vunpack.c.h.b16 %v2595
      %v2641 = vunpack.c.l.b16 %v2596
      %v2642 = vunpack.c.h.b16 %v2596
      %v2643 = vunpack.c.l.b16 %v2597
      %v2644 = vunpack.c.h.b16 %v2597
      %v2645 = vunpack.c.l.b16 %v2598
      %v2646 = vunpack.c.h.b16 %v2598
      %v2647 = vpack.c.b16 %v2615, %v2615
      %v2648 = vpack.c.b16 %v2616, %v2616
      %v2649 = vpack.c.b16 %v2617, %v2617
      %v2650 = vpack.c.b16 %v2618, %v2618
      %v2651 = vpack.c.b16 %v2619, %v2619
      %v2652 = vpack.c.b16 %v2620, %v2620
      %v2653 = vpack.c.b16 %v2621, %v2621
      %v2654 = vpack.c.b16 %v2622, %v2622
      %v2655 = vpack.c.b16 %v2623, %v2623
      %v2656 = vpack.c.b16 %v2624, %v2624
      %v2657 = vpack.c.b16 %v2625, %v2625
      %v2658 = vpack.c.b16 %v2626, %v2626
      %v2659 = vpack.c.b16 %v2627, %v2627
      %v2660 = vpack.c.b16 %v2628, %v2628
      %v2661 = vpack.c.b16 %v2629, %v2629
      %v2662 = vpack.c.b16 %v2630, %v2630
      %v2663 = vpack.c.b16 %v2631, %v2631
      %v2664 = vpack.c.b16 %v2632, %v2632
      %v2665 = vpack.c.b16 %v2633, %v2633
      %v2666 = vpack.c.b16 %v2634, %v2634
      %v2667 = vpack.c.b16 %v2635, %v2635
      %v2668 = vpack.c.b16 %v2636, %v2636
      %v2669 = vpack.c.b16 %v2637, %v2637
      %v2670 = vpack.c.b16 %v2638, %v2638
      %v2671 = vpack.c.b16 %v2639, %v2639
      %v2672 = vpack.c.b16 %v2640, %v2640
      %v2673 = vpack.c.b16 %v2641, %v2641
      %v2674 = vpack.c.b16 %v2642, %v2642
      %v2675 = vpack.c.b16 %v2643, %v2643
      %v2676 = vpack.c.b16 %v2644, %v2644
      %v2677 = vpack.c.b16 %v2645, %v2645
      %v2678 = vpack.c.b16 %v2646, %v2646
      %vm2679 = vsmask.f32 256
      %vm2680 = vsmask.f32 4368
      %vm2681 = vmor %vm2679, %vm2680
      %v2683 = vshrl.u32 %v2647, 16
      %v2685 = vrot.slane %v2683, 7
      %v2686 = vshll.u32 %v2647, 16
      %v2688 = vor.u32 %v2685, %v2686
      %v2689 = vrot.slane %v2685, 4
      %v2691 = vshrl.u32 %v2648, 16
      %v2693 = vrot.slane %v2691, 7
      %v2694 = vshll.u32 %v2648, 16
      %v2696 = vor.u32 %v2693, %v2694
      %v2697 = vsel %vm2681, %v2689, %v2696
      %v2698 = vrot.slane %v2693, 4
      %v2700 = vshrl.u32 %v2649, 16
      %v2702 = vrot.slane %v2700, 7
      %v2703 = vshll.u32 %v2649, 16
      %v2705 = vor.u32 %v2702, %v2703
      %v2706 = vrot.slane %v2702, 4
      %v2708 = vshrl.u32 %v2650, 16
      %v2710 = vrot.slane %v2708, 7
      %v2711 = vshll.u32 %v2650, 16
      %v2713 = vor.u32 %v2710, %v2711
      %v2714 = vsel %vm2681, %v2706, %v2713
      %v2715 = vrot.slane %v2710, 4
      %v2717 = vshrl.u32 %v2651, 16
      %v2719 = vrot.slane %v2717, 7
      %v2720 = vshll.u32 %v2651, 16
      %v2722 = vor.u32 %v2719, %v2720
      %v2723 = vrot.slane %v2719, 4
      %v2725 = vshrl.u32 %v2652, 16
      %v2727 = vrot.slane %v2725, 7
      %v2728 = vshll.u32 %v2652, 16
      %v2730 = vor.u32 %v2727, %v2728
      %v2731 = vsel %vm2681, %v2723, %v2730
      %v2732 = vrot.slane %v2727, 4
      %v2734 = vshrl.u32 %v2653, 16
      %v2736 = vrot.slane %v2734, 7
      %v2737 = vshll.u32 %v2653, 16
      %v2739 = vor.u32 %v2736, %v2737
      %v2740 = vrot.slane %v2736, 4
      %v2742 = vshrl.u32 %v2654, 16
      %v2744 = vrot.slane %v2742, 7
      %v2745 = vshll.u32 %v2654, 16
      %v2747 = vor.u32 %v2744, %v2745
      %v2748 = vsel %vm2681, %v2740, %v2747
      %v2749 = vrot.slane %v2744, 4
      %v2751 = vshrl.u32 %v2655, 16
      %v2753 = vrot.slane %v2751, 7
      %v2754 = vshll.u32 %v2655, 16
      %v2756 = vor.u32 %v2753, %v2754
      %v2757 = vrot.slane %v2753, 4
      %v2759 = vshrl.u32 %v2656, 16
      %v2761 = vrot.slane %v2759, 7
      %v2762 = vshll.u32 %v2656, 16
      %v2764 = vor.u32 %v2761, %v2762
      %v2765 = vsel %vm2681, %v2757, %v2764
      %v2766 = vrot.slane %v2761, 4
      %v2768 = vshrl.u32 %v2657, 16
      %v2770 = vrot.slane %v2768, 7
      %v2771 = vshll.u32 %v2657, 16
      %v2773 = vor.u32 %v2770, %v2771
      %v2774 = vrot.slane %v2770, 4
      %v2776 = vshrl.u32 %v2658, 16
      %v2778 = vrot.slane %v2776, 7
      %v2779 = vshll.u32 %v2658, 16
      %v2781 = vor.u32 %v2778, %v2779
      %v2782 = vsel %vm2681, %v2774, %v2781
      %v2783 = vrot.slane %v2778, 4
      %v2785 = vshrl.u32 %v2659, 16
      %v2787 = vrot.slane %v2785, 7
      %v2788 = vshll.u32 %v2659, 16
      %v2790 = vor.u32 %v2787, %v2788
      %v2791 = vrot.slane %v2787, 4
      %v2793 = vshrl.u32 %v2660, 16
      %v2795 = vrot.slane %v2793, 7
      %v2796 = vshll.u32 %v2660, 16
      %v2798 = vor.u32 %v2795, %v2796
      %v2799 = vsel %vm2681, %v2791, %v2798
      %v2800 = vrot.slane %v2795, 4
      %v2802 = vshrl.u32 %v2661, 16
      %v2804 = vrot.slane %v2802, 7
      %v2805 = vshll.u32 %v2661, 16
      %v2807 = vor.u32 %v2804, %v2805
      %v2808 = vrot.slane %v2804, 4
      %v2810 = vshrl.u32 %v2662, 16
      %v2812 = vrot.slane %v2810, 7
      %v2813 = vshll.u32 %v2662, 16
      %v2815 = vor.u32 %v2812, %v2813
      %v2816 = vsel %vm2681, %v2808, %v2815
      %v2817 = vrot.slane %v2812, 4
      %v2819 = vshrl.u32 %v2663, 16
      %v2821 = vrot.slane %v2819, 7
      %v2822 = vshll.u32 %v2663, 16
      %v2824 = vor.u32 %v2821, %v2822
      %v2825 = vrot.slane %v2821, 4
      %v2827 = vshrl.u32 %v2664, 16
      %v2829 = vrot.slane %v2827, 7
      %v2830 = vshll.u32 %v2664, 16
      %v2832 = vor.u32 %v2829, %v2830
      %v2833 = vsel %vm2681, %v2825, %v2832
      %v2834 = vrot.slane %v2829, 4
      %v2836 = vshrl.u32 %v2665, 16
      %v2838 = vrot.slane %v2836, 7
      %v2839 = vshll.u32 %v2665, 16
      %v2841 = vor.u32 %v2838, %v2839
      %v2842 = vrot.slane %v2838, 4
      %v2844 = vshrl.u32 %v2666, 16
      %v2846 = vrot.slane %v2844, 7
      %v2847 = vshll.u32 %v2666, 16
      %v2849 = vor.u32 %v2846, %v2847
      %v2850 = vsel %vm2681, %v2842, %v2849
      %v2851 = vrot.slane %v2846, 4
      %v2853 = vshrl.u32 %v2667, 16
      %v2855 = vrot.slane %v2853, 7
      %v2856 = vshll.u32 %v2667, 16
      %v2858 = vor.u32 %v2855, %v2856
      %v2859 = vrot.slane %v2855, 4
      %v2861 = vshrl.u32 %v2668, 16
      %v2863 = vrot.slane %v2861, 7
      %v2864 = vshll.u32 %v2668, 16
      %v2866 = vor.u32 %v2863, %v2864
      %v2867 = vsel %vm2681, %v2859, %v2866
      %v2868 = vrot.slane %v2863, 4
      %v2870 = vshrl.u32 %v2669, 16
      %v2872 = vrot.slane %v2870, 7
      %v2873 = vshll.u32 %v2669, 16
      %v2875 = vor.u32 %v2872, %v2873
      %v2876 = vrot.slane %v2872, 4
      %v2878 = vshrl.u32 %v2670, 16
      %v2880 = vrot.slane %v2878, 7
      %v2881 = vshll.u32 %v2670, 16
      %v2883 = vor.u32 %v2880, %v2881
      %v2884 = vsel %vm2681, %v2876, %v2883
      %v2885 = vrot.slane %v2880, 4
      %v2887 = vshrl.u32 %v2671, 16
      %v2889 = vrot.slane %v2887, 7
      %v2890 = vshll.u32 %v2671, 16
      %v2892 = vor.u32 %v2889, %v2890
      %v2893 = vrot.slane %v2889, 4
      %v2895 = vshrl.u32 %v2672, 16
      %v2897 = vrot.slane %v2895, 7
      %v2898 = vshll.u32 %v2672, 16
      %v2900 = vor.u32 %v2897, %v2898
      %v2901 = vsel %vm2681, %v2893, %v2900
      %v2902 = vrot.slane %v2897, 4
      %v2904 = vshrl.u32 %v2673, 16
      %v2906 = vrot.slane %v2904, 7
      %v2907 = vshll.u32 %v2673, 16
      %v2909 = vor.u32 %v2906, %v2907
      %v2910 = vrot.slane %v2906, 4
      %v2912 = vshrl.u32 %v2674, 16
      %v2914 = vrot.slane %v2912, 7
      %v2915 = vshll.u32 %v2674, 16
      %v2917 = vor.u32 %v2914, %v2915
      %v2918 = vsel %vm2681, %v2910, %v2917
      %v2919 = vrot.slane %v2914, 4
      %v2921 = vshrl.u32 %v2675, 16
      %v2923 = vrot.slane %v2921, 7
      %v2924 = vshll.u32 %v2675, 16
      %v2926 = vor.u32 %v2923, %v2924
      %v2927 = vrot.slane %v2923, 4
      %v2929 = vshrl.u32 %v2676, 16
      %v2931 = vrot.slane %v2929, 7
      %v2932 = vshll.u32 %v2676, 16
      %v2934 = vor.u32 %v2931, %v2932
      %v2935 = vsel %vm2681, %v2927, %v2934
      %v2936 = vrot.slane %v2931, 4
      %v2938 = vshrl.u32 %v2677, 16
      %v2940 = vrot.slane %v2938, 7
      %v2941 = vshll.u32 %v2677, 16
      %v2943 = vor.u32 %v2940, %v2941
      %v2944 = vrot.slane %v2940, 4
      %v2946 = vshrl.u32 %v2678, 16
      %v2948 = vrot.slane %v2946, 7
      %v2949 = vshll.u32 %v2678, 16
      %v2951 = vor.u32 %v2948, %v2949
      %v2952 = vsel %vm2681, %v2944, %v2951
      %v2953 = vrot.slane %v2948, 4
      %s3002 = scalar_lea.vmem [#allocation2], 12
      %vm3003 = vcmask 1043456
      %vm3004 = vsmask.f32 7938
      %vm3005 = vmand %vm3003, %vm3004
      %v3006 = vld [vmem:[%s3002] sm:$0xf]
      %v3007 = vsel %vm3005, %v2688, %v3006
      %3008 = vst [vmem:[%s3002] sm:$0xf] %v3007
      %3009 = vst [vmem:[%s3002 + $0x4] sm:$0xf] %v2697
      %vm3010 = vcmask 1040384
      %vm3011 = vmand %vm3010, %vm2679
      %v3012 = vld [vmem:[%s3002 + $0x8] sm:$0x1]
      %v3013 = vsel %vm3011, %v2698, %v3012
      %3014 = vst [vmem:[%s3002 + $0x8] sm:$0x1] %v3013
      %v3015 = vld [vmem:[%s3002 + $0xc] sm:$0xf]
      %v3016 = vsel %vm3005, %v2705, %v3015
      %3017 = vst [vmem:[%s3002 + $0xc] sm:$0xf] %v3016
      %3018 = vst [vmem:[%s3002 + $0x10] sm:$0xf] %v2714
      %v3019 = vld [vmem:[%s3002 + $0x14] sm:$0x1]
      %v3020 = vsel %vm3011, %v2715, %v3019
      %3021 = vst [vmem:[%s3002 + $0x14] sm:$0x1] %v3020
      %v3022 = vld [vmem:[%s3002 + $0x18] sm:$0xf]
      %v3023 = vsel %vm3005, %v2722, %v3022
      %3024 = vst [vmem:[%s3002 + $0x18] sm:$0xf] %v3023
      %3025 = vst [vmem:[%s3002 + $0x1c] sm:$0xf] %v2731
      %v3026 = vld [vmem:[%s3002 + $0x20] sm:$0x1]
      %v3027 = vsel %vm3011, %v2732, %v3026
      %3028 = vst [vmem:[%s3002 + $0x20] sm:$0x1] %v3027
      %v3029 = vld [vmem:[%s3002 + $0x24] sm:$0xf]
      %v3030 = vsel %vm3005, %v2739, %v3029
      %3031 = vst [vmem:[%s3002 + $0x24] sm:$0xf] %v3030
      %3032 = vst [vmem:[%s3002 + $0x28] sm:$0xf] %v2748
      %v3033 = vld [vmem:[%s3002 + $0x2c] sm:$0x1]
      %v3034 = vsel %vm3011, %v2749, %v3033
      %3035 = vst [vmem:[%s3002 + $0x2c] sm:$0x1] %v3034
      %v3036 = vld [vmem:[%s3002 + $0x30] sm:$0xf]
      %v3037 = vsel %vm3005, %v2756, %v3036
      %3038 = vst [vmem:[%s3002 + $0x30] sm:$0xf] %v3037
      %3039 = vst [vmem:[%s3002 + $0x34] sm:$0xf] %v2765
      %v3040 = vld [vmem:[%s3002 + $0x38] sm:$0x1]
      %v3041 = vsel %vm3011, %v2766, %v3040
      %3042 = vst [vmem:[%s3002 + $0x38] sm:$0x1] %v3041
      %v3043 = vld [vmem:[%s3002 + $0x3c] sm:$0xf]
      %v3044 = vsel %vm3005, %v2773, %v3043
      %3045 = vst [vmem:[%s3002 + $0x3c] sm:$0xf] %v3044
      %3046 = vst [vmem:[%s3002 + $0x40] sm:$0xf] %v2782
      %v3047 = vld [vmem:[%s3002 + $0x44] sm:$0x1]
      %v3048 = vsel %vm3011, %v2783, %v3047
      %3049 = vst [vmem:[%s3002 + $0x44] sm:$0x1] %v3048
      %v3050 = vld [vmem:[%s3002 + $0x48] sm:$0xf]
      %v3051 = vsel %vm3005, %v2790, %v3050
      %3052 = vst [vmem:[%s3002 + $0x48] sm:$0xf] %v3051
      %3053 = vst [vmem:[%s3002 + $0x4c] sm:$0xf] %v2799
      %v3054 = vld [vmem:[%s3002 + $0x50] sm:$0x1]
      %v3055 = vsel %vm3011, %v2800, %v3054
      %3056 = vst [vmem:[%s3002 + $0x50] sm:$0x1] %v3055
      %v3057 = vld [vmem:[%s3002 + $0x54] sm:$0xf]
      %v3058 = vsel %vm3005, %v2807, %v3057
      %3059 = vst [vmem:[%s3002 + $0x54] sm:$0xf] %v3058
      %3060 = vst [vmem:[%s3002 + $0x58] sm:$0xf] %v2816
      %v3061 = vld [vmem:[%s3002 + $0x5c] sm:$0x1]
      %v3062 = vsel %vm3011, %v2817, %v3061
      %3063 = vst [vmem:[%s3002 + $0x5c] sm:$0x1] %v3062
      %v3064 = vld [vmem:[%s3002 + $0x60] sm:$0xf]
      %v3065 = vsel %vm3005, %v2824, %v3064
      %3066 = vst [vmem:[%s3002 + $0x60] sm:$0xf] %v3065
      %3067 = vst [vmem:[%s3002 + $0x64] sm:$0xf] %v2833
      %v3068 = vld [vmem:[%s3002 + $0x68] sm:$0x1]
      %v3069 = vsel %vm3011, %v2834, %v3068
      %3070 = vst [vmem:[%s3002 + $0x68] sm:$0x1] %v3069
      %v3071 = vld [vmem:[%s3002 + $0x6c] sm:$0xf]
      %v3072 = vsel %vm3005, %v2841, %v3071
      %3073 = vst [vmem:[%s3002 + $0x6c] sm:$0xf] %v3072
      %3074 = vst [vmem:[%s3002 + $0x70] sm:$0xf] %v2850
      %v3075 = vld [vmem:[%s3002 + $0x74] sm:$0x1]
      %v3076 = vsel %vm3011, %v2851, %v3075
      %3077 = vst [vmem:[%s3002 + $0x74] sm:$0x1] %v3076
      %v3078 = vld [vmem:[%s3002 + $0x78] sm:$0xf]
      %v3079 = vsel %vm3005, %v2858, %v3078
      %3080 = vst [vmem:[%s3002 + $0x78] sm:$0xf] %v3079
      %3081 = vst [vmem:[%s3002 + $0x7c] sm:$0xf] %v2867
      %v3082 = vld [vmem:[%s3002 + $0x80] sm:$0x1]
      %v3083 = vsel %vm3011, %v2868, %v3082
      %3084 = vst [vmem:[%s3002 + $0x80] sm:$0x1] %v3083
      %v3085 = vld [vmem:[%s3002 + $0x84] sm:$0xf]
      %v3086 = vsel %vm3005, %v2875, %v3085
      %3087 = vst [vmem:[%s3002 + $0x84] sm:$0xf] %v3086
      %3088 = vst [vmem:[%s3002 + $0x88] sm:$0xf] %v2884
      %v3089 = vld [vmem:[%s3002 + $0x8c] sm:$0x1]
      %v3090 = vsel %vm3011, %v2885, %v3089
      %3091 = vst [vmem:[%s3002 + $0x8c] sm:$0x1] %v3090
      %v3092 = vld [vmem:[%s3002 + $0x90] sm:$0xf]
      %v3093 = vsel %vm3005, %v2892, %v3092
      %3094 = vst [vmem:[%s3002 + $0x90] sm:$0xf] %v3093
      %3095 = vst [vmem:[%s3002 + $0x94] sm:$0xf] %v2901
      %v3096 = vld [vmem:[%s3002 + $0x98] sm:$0x1]
      %v3097 = vsel %vm3011, %v2902, %v3096
      %3098 = vst [vmem:[%s3002 + $0x98] sm:$0x1] %v3097
      %v3099 = vld [vmem:[%s3002 + $0x9c] sm:$0xf]
      %v3100 = vsel %vm3005, %v2909, %v3099
      %3101 = vst [vmem:[%s3002 + $0x9c] sm:$0xf] %v3100
      %3102 = vst [vmem:[%s3002 + $0xa0] sm:$0xf] %v2918
      %v3103 = vld [vmem:[%s3002 + $0xa4] sm:$0x1]
      %v3104 = vsel %vm3011, %v2919, %v3103
      %3105 = vst [vmem:[%s3002 + $0xa4] sm:$0x1] %v3104
      %v3106 = vld [vmem:[%s3002 + $0xa8] sm:$0xf]
      %v3107 = vsel %vm3005, %v2926, %v3106
      %3108 = vst [vmem:[%s3002 + $0xa8] sm:$0xf] %v3107
      %3109 = vst [vmem:[%s3002 + $0xac] sm:$0xf] %v2935
      %v3110 = vld [vmem:[%s3002 + $0xb0] sm:$0x1]
      %v3111 = vsel %vm3011, %v2936, %v3110
      %3112 = vst [vmem:[%s3002 + $0xb0] sm:$0x1] %v3111
      %v3113 = vld [vmem:[%s3002 + $0xb4] sm:$0xf]
      %v3114 = vsel %vm3005, %v2943, %v3113
      %3115 = vst [vmem:[%s3002 + $0xb4] sm:$0xf] %v3114
      %3116 = vst [vmem:[%s3002 + $0xb8] sm:$0xf] %v2952
      %v3117 = vld [vmem:[%s3002 + $0xbc] sm:$0x1]
      %v3118 = vsel %vm3011, %v2953, %v3117
      %3119 = vst [vmem:[%s3002 + $0xbc] sm:$0x1] %v3118
      %3120 = vst [vmem:[#allocation2] sm:$0xf] 0
      %3121 = vst [vmem:[#allocation2 + $0x4] sm:$0xf] 0
      %3122 = vst [vmem:[#allocation2 + $0x8] sm:$0x1] 0
      %s3123 = scalar_lea.vmem [#allocation2], 204
      %3124 = vst [vmem:[%s3123] sm:$0xf] 0
      %3125 = vst [vmem:[%s3123 + $0x4] sm:$0xf] 0
      %3126 = vst [vmem:[%s3123 + $0x8] sm:$0x1] 0
      %v3127 = vld [vmem:[#allocation2] sm:$0x1]
      %v3128 = vsel %vm3011, 0, %v3127
      %3129 = vst [vmem:[#allocation2] sm:$0x1] %v3128
      %v3130 = vld [vmem:[#allocation2 + $0xc] sm:$0x1]
      %v3131 = vsel %vm3011, 0, %v3130
      %3132 = vst [vmem:[#allocation2 + $0xc] sm:$0x1] %v3131
      %v3133 = vld [vmem:[#allocation2 + $0x18] sm:$0x1]
      %v3134 = vsel %vm3011, 0, %v3133
      %3135 = vst [vmem:[#allocation2 + $0x18] sm:$0x1] %v3134
      %v3136 = vld [vmem:[#allocation2 + $0x24] sm:$0x1]
      %v3137 = vsel %vm3011, 0, %v3136
      %3138 = vst [vmem:[#allocation2 + $0x24] sm:$0x1] %v3137
      %v3139 = vld [vmem:[#allocation2 + $0x30] sm:$0x1]
      %v3140 = vsel %vm3011, 0, %v3139
      %3141 = vst [vmem:[#allocation2 + $0x30] sm:$0x1] %v3140
      %v3142 = vld [vmem:[#allocation2 + $0x3c] sm:$0x1]
      %v3143 = vsel %vm3011, 0, %v3142
      %3144 = vst [vmem:[#allocation2 + $0x3c] sm:$0x1] %v3143
      %v3145 = vld [vmem:[#allocation2 + $0x48] sm:$0x1]
      %v3146 = vsel %vm3011, 0, %v3145
      %3147 = vst [vmem:[#allocation2 + $0x48] sm:$0x1] %v3146
      %v3148 = vld [vmem:[#allocation2 + $0x54] sm:$0x1]
      %v3149 = vsel %vm3011, 0, %v3148
      %3150 = vst [vmem:[#allocation2 + $0x54] sm:$0x1] %v3149
      %v3151 = vld [vmem:[#allocation2 + $0x60] sm:$0x1]
      %v3152 = vsel %vm3011, 0, %v3151
      %3153 = vst [vmem:[#allocation2 + $0x60] sm:$0x1] %v3152
      %v3154 = vld [vmem:[#allocation2 + $0x6c] sm:$0x1]
      %v3155 = vsel %vm3011, 0, %v3154
      %3156 = vst [vmem:[#allocation2 + $0x6c] sm:$0x1] %v3155
      %v3157 = vld [vmem:[#allocation2 + $0x78] sm:$0x1]
      %v3158 = vsel %vm3011, 0, %v3157
      %3159 = vst [vmem:[#allocation2 + $0x78] sm:$0x1] %v3158
      %v3160 = vld [vmem:[#allocation2 + $0x84] sm:$0x1]
      %v3161 = vsel %vm3011, 0, %v3160
      %3162 = vst [vmem:[#allocation2 + $0x84] sm:$0x1] %v3161
      %v3163 = vld [vmem:[#allocation2 + $0x90] sm:$0x1]
      %v3164 = vsel %vm3011, 0, %v3163
      %3165 = vst [vmem:[#allocation2 + $0x90] sm:$0x1] %v3164
      %v3166 = vld [vmem:[#allocation2 + $0x9c] sm:$0x1]
      %v3167 = vsel %vm3011, 0, %v3166
      %3168 = vst [vmem:[#allocation2 + $0x9c] sm:$0x1] %v3167
      %v3169 = vld [vmem:[#allocation2 + $0xa8] sm:$0x1]
      %v3170 = vsel %vm3011, 0, %v3169
      %3171 = vst [vmem:[#allocation2 + $0xa8] sm:$0x1] %v3170
      %v3172 = vld [vmem:[#allocation2 + $0xb4] sm:$0x1]
      %v3173 = vsel %vm3011, 0, %v3172
      %3174 = vst [vmem:[#allocation2 + $0xb4] sm:$0x1] %v3173
      %v3175 = vld [vmem:[#allocation2 + $0xc0] sm:$0x1]
      %v3176 = vsel %vm3011, 0, %v3175
      %3177 = vst [vmem:[#allocation2 + $0xc0] sm:$0x1] %v3176
      %v3178 = vld [vmem:[#allocation2 + $0xcc] sm:$0x1]
      %v3179 = vsel %vm3011, 0, %v3178
      %3180 = vst [vmem:[#allocation2 + $0xcc] sm:$0x1] %v3179
      %vm3181 = vmand %vm3010, %vm3004
      %v3182 = vld [vmem:[#allocation2 + $0x8] sm:$0x1]
      %v3183 = vsel %vm3181, 0, %v3182
      %3184 = vst [vmem:[#allocation2 + $0x8] sm:$0x1] %v3183
      %v3185 = vld [vmem:[#allocation2 + $0x14] sm:$0x1]
      %v3186 = vsel %vm3181, 0, %v3185
      %3187 = vst [vmem:[#allocation2 + $0x14] sm:$0x1] %v3186
      %v3188 = vld [vmem:[#allocation2 + $0x20] sm:$0x1]
      %v3189 = vsel %vm3181, 0, %v3188
      %3190 = vst [vmem:[#allocation2 + $0x20] sm:$0x1] %v3189
      %v3191 = vld [vmem:[#allocation2 + $0x2c] sm:$0x1]
      %v3192 = vsel %vm3181, 0, %v3191
      %3193 = vst [vmem:[#allocation2 + $0x2c] sm:$0x1] %v3192
      %v3194 = vld [vmem:[#allocation2 + $0x38] sm:$0x1]
      %v3195 = vsel %vm3181, 0, %v3194
      %3196 = vst [vmem:[#allocation2 + $0x38] sm:$0x1] %v3195
      %v3197 = vld [vmem:[#allocation2 + $0x44] sm:$0x1]
      %v3198 = vsel %vm3181, 0, %v3197
      %3199 = vst [vmem:[#allocation2 + $0x44] sm:$0x1] %v3198
      %v3200 = vld [vmem:[#allocation2 + $0x50] sm:$0x1]
      %v3201 = vsel %vm3181, 0, %v3200
      %3202 = vst [vmem:[#allocation2 + $0x50] sm:$0x1] %v3201
      %v3203 = vld [vmem:[#allocation2 + $0x5c] sm:$0x1]
      %v3204 = vsel %vm3181, 0, %v3203
      %3205 = vst [vmem:[#allocation2 + $0x5c] sm:$0x1] %v3204
      %v3206 = vld [vmem:[#allocation2 + $0x68] sm:$0x1]
      %v3207 = vsel %vm3181, 0, %v3206
      %3208 = vst [vmem:[#allocation2 + $0x68] sm:$0x1] %v3207
      %v3209 = vld [vmem:[#allocation2 + $0x74] sm:$0x1]
      %v3210 = vsel %vm3181, 0, %v3209
      %3211 = vst [vmem:[#allocation2 + $0x74] sm:$0x1] %v3210
      %v3212 = vld [vmem:[#allocation2 + $0x80] sm:$0x1]
      %v3213 = vsel %vm3181, 0, %v3212
      %3214 = vst [vmem:[#allocation2 + $0x80] sm:$0x1] %v3213
      %v3215 = vld [vmem:[#allocation2 + $0x8c] sm:$0x1]
      %v3216 = vsel %vm3181, 0, %v3215
      %3217 = vst [vmem:[#allocation2 + $0x8c] sm:$0x1] %v3216
      %v3218 = vld [vmem:[#allocation2 + $0x98] sm:$0x1]
      %v3219 = vsel %vm3181, 0, %v3218
      %3220 = vst [vmem:[#allocation2 + $0x98] sm:$0x1] %v3219
      %v3221 = vld [vmem:[#allocation2 + $0xa4] sm:$0x1]
      %v3222 = vsel %vm3181, 0, %v3221
      %3223 = vst [vmem:[#allocation2 + $0xa4] sm:$0x1] %v3222
      %v3224 = vld [vmem:[#allocation2 + $0xb0] sm:$0x1]
      %v3225 = vsel %vm3181, 0, %v3224
      %3226 = vst [vmem:[#allocation2 + $0xb0] sm:$0x1] %v3225
      %v3227 = vld [vmem:[#allocation2 + $0xbc] sm:$0x1]
      %v3228 = vsel %vm3181, 0, %v3227
      %3229 = vst [vmem:[#allocation2 + $0xbc] sm:$0x1] %v3228
      %v3230 = vld [vmem:[#allocation2 + $0xc8] sm:$0x1]
      %v3231 = vsel %vm3181, 0, %v3230
      %3232 = vst [vmem:[#allocation2 + $0xc8] sm:$0x1] %v3231
      %v3233 = vld [vmem:[#allocation2 + $0xd4] sm:$0x1]
      %v3234 = vsel %vm3181, 0, %v3233
      %3235 = vst [vmem:[#allocation2 + $0xd4] sm:$0x1] %v3234
      %v3236 = vld [vmem:[#allocation2] sm:$0xf]
      %v3237 = vld [vmem:[#allocation2 + $0x4] sm:$0xf]
      %v3238 = vld [vmem:[#allocation2 + $0xc] sm:$0xf]
      %v3239 = vld [vmem:[#allocation2 + $0x10] sm:$0xf]
      %v3240 = vld [vmem:[#allocation2 + $0x18] sm:$0xf]
      %v3241 = vld [vmem:[#allocation2 + $0x1c] sm:$0xf]
      %v3242 = vld [vmem:[#allocation2 + $0x24] sm:$0xf]
      %v3243 = vld [vmem:[#allocation2 + $0x28] sm:$0xf]
      %v3244 = vld [vmem:[#allocation2 + $0x30] sm:$0xf]
      %v3245 = vld [vmem:[#allocation2 + $0x34] sm:$0xf]
      %v3246 = vld [vmem:[#allocation2 + $0x3c] sm:$0xf]
      %v3247 = vld [vmem:[#allocation2 + $0x40] sm:$0xf]
      %v3248 = vld [vmem:[#allocation2 + $0x48] sm:$0xf]
      %v3249 = vld [vmem:[#allocation2 + $0x4c] sm:$0xf]
      %v3250 = vld [vmem:[#allocation2 + $0x54] sm:$0xf]
      %v3251 = vld [vmem:[#allocation2 + $0x58] sm:$0xf]
      %v3252 = vld [vmem:[#allocation2 + $0x60] sm:$0xf]
      %v3253 = vld [vmem:[#allocation2 + $0x64] sm:$0xf]
      %v3254 = vld [vmem:[#allocation2 + $0x6c] sm:$0xf]
      %v3255 = vld [vmem:[#allocation2 + $0x70] sm:$0xf]
      %v3256 = vld [vmem:[#allocation2 + $0x78] sm:$0xf]
      %v3257 = vld [vmem:[#allocation2 + $0x7c] sm:$0xf]
      %v3258 = vld [vmem:[#allocation2 + $0x84] sm:$0xf]
      %v3259 = vld [vmem:[#allocation2 + $0x88] sm:$0xf]
      %v3260 = vld [vmem:[#allocation2 + $0x90] sm:$0xf]
      %v3261 = vld [vmem:[#allocation2 + $0x94] sm:$0xf]
      %v3262 = vld [vmem:[#allocation2 + $0x9c] sm:$0xf]
      %v3263 = vld [vmem:[#allocation2 + $0xa0] sm:$0xf]
      %v3264 = vld [vmem:[#allocation2 + $0xa8] sm:$0xf]
      %v3265 = vld [vmem:[#allocation2 + $0xac] sm:$0xf]
      %v3266 = vld [vmem:[#allocation2 + $0xb4] sm:$0xf]
      %v3267 = vld [vmem:[#allocation2 + $0xb8] sm:$0xf]
      %v3268 = vld [vmem:[#allocation2 + $0x8] sm:$0x1]
      %v3269 = vld [vmem:[#allocation2 + $0x14] sm:$0x1]
      %v3270 = vld [vmem:[#allocation2 + $0x20] sm:$0x1]
      %v3271 = vld [vmem:[#allocation2 + $0x2c] sm:$0x1]
      %v3272 = vld [vmem:[#allocation2 + $0x38] sm:$0x1]
      %v3273 = vld [vmem:[#allocation2 + $0x44] sm:$0x1]
      %v3274 = vld [vmem:[#allocation2 + $0x50] sm:$0x1]
      %v3275 = vld [vmem:[#allocation2 + $0x5c] sm:$0x1]
      %v3276 = vld [vmem:[#allocation2 + $0x68] sm:$0x1]
      %v3277 = vld [vmem:[#allocation2 + $0x74] sm:$0x1]
      %v3278 = vld [vmem:[#allocation2 + $0x80] sm:$0x1]
      %v3279 = vld [vmem:[#allocation2 + $0x8c] sm:$0x1]
      %v3280 = vld [vmem:[#allocation2 + $0x98] sm:$0x1]
      %v3281 = vld [vmem:[#allocation2 + $0xa4] sm:$0x1]
      %v3282 = vld [vmem:[#allocation2 + $0xb0] sm:$0x1]
      %v3283 = vld [vmem:[#allocation2 + $0xbc] sm:$0x1]
      %v3284 = vld [vmem:[#allocation2] sm:$0xe]
      %v3285 = vld [vmem:[#allocation2 + $0xc] sm:$0xe]
      %v3286 = vld [vmem:[#allocation2 + $0x18] sm:$0xe]
      %v3287 = vld [vmem:[#allocation2 + $0x24] sm:$0xe]
      %v3288 = vld [vmem:[#allocation2 + $0x30] sm:$0xe]
      %v3289 = vld [vmem:[#allocation2 + $0x3c] sm:$0xe]
      %v3290 = vld [vmem:[#allocation2 + $0x48] sm:$0xe]
      %v3291 = vld [vmem:[#allocation2 + $0x54] sm:$0xe]
      %v3292 = vld [vmem:[#allocation2 + $0x60] sm:$0xe]
      %v3293 = vld [vmem:[#allocation2 + $0x6c] sm:$0xe]
      %v3294 = vld [vmem:[#allocation2 + $0x78] sm:$0xe]
      %v3295 = vld [vmem:[#allocation2 + $0x84] sm:$0xe]
      %v3296 = vld [vmem:[#allocation2 + $0x90] sm:$0xe]
      %v3297 = vld [vmem:[#allocation2 + $0x9c] sm:$0xe]
      %v3298 = vld [vmem:[#allocation2 + $0xa8] sm:$0xe]
      %v3299 = vld [vmem:[#allocation2 + $0xb4] sm:$0xe]
      %v3300 = vld [vmem:[%s3002] sm:$0xf]
      %v3301 = vld [vmem:[%s3002 + $0x4] sm:$0xf]
      %v3302 = vld [vmem:[%s3002 + $0xc] sm:$0xf]
      %v3303 = vld [vmem:[%s3002 + $0x10] sm:$0xf]
      %v3304 = vld [vmem:[%s3002 + $0x18] sm:$0xf]
      %v3305 = vld [vmem:[%s3002 + $0x1c] sm:$0xf]
      %v3306 = vld [vmem:[%s3002 + $0x24] sm:$0xf]
      %v3307 = vld [vmem:[%s3002 + $0x28] sm:$0xf]
      %v3308 = vld [vmem:[%s3002 + $0x30] sm:$0xf]
      %v3309 = vld [vmem:[%s3002 + $0x34] sm:$0xf]
      %v3310 = vld [vmem:[%s3002 + $0x3c] sm:$0xf]
      %v3311 = vld [vmem:[%s3002 + $0x40] sm:$0xf]
      %v3312 = vld [vmem:[%s3002 + $0x48] sm:$0xf]
      %v3313 = vld [vmem:[%s3002 + $0x4c] sm:$0xf]
      %v3314 = vld [vmem:[%s3002 + $0x54] sm:$0xf]
      %v3315 = vld [vmem:[%s3002 + $0x58] sm:$0xf]
      %v3316 = vld [vmem:[%s3002 + $0x60] sm:$0xf]
      %v3317 = vld [vmem:[%s3002 + $0x64] sm:$0xf]
      %v3318 = vld [vmem:[%s3002 + $0x6c] sm:$0xf]
      %v3319 = vld [vmem:[%s3002 + $0x70] sm:$0xf]
      %v3320 = vld [vmem:[%s3002 + $0x78] sm:$0xf]
      %v3321 = vld [vmem:[%s3002 + $0x7c] sm:$0xf]
      %v3322 = vld [vmem:[%s3002 + $0x84] sm:$0xf]
      %v3323 = vld [vmem:[%s3002 + $0x88] sm:$0xf]
      %v3324 = vld [vmem:[%s3002 + $0x90] sm:$0xf]
      %v3325 = vld [vmem:[%s3002 + $0x94] sm:$0xf]
      %v3326 = vld [vmem:[%s3002 + $0x9c] sm:$0xf]
      %v3327 = vld [vmem:[%s3002 + $0xa0] sm:$0xf]
      %v3328 = vld [vmem:[%s3002 + $0xa8] sm:$0xf]
      %v3329 = vld [vmem:[%s3002 + $0xac] sm:$0xf]
      %v3330 = vld [vmem:[%s3002 + $0xb4] sm:$0xf]
      %v3331 = vld [vmem:[%s3002 + $0xb8] sm:$0xf]
      %v3332 = vld [vmem:[%s3002 + $0x8] sm:$0x1]
      %v3333 = vld [vmem:[%s3002 + $0x14] sm:$0x1]
      %v3334 = vld [vmem:[%s3002 + $0x20] sm:$0x1]
      %v3335 = vld [vmem:[%s3002 + $0x2c] sm:$0x1]
      %v3336 = vld [vmem:[%s3002 + $0x38] sm:$0x1]
      %v3337 = vld [vmem:[%s3002 + $0x44] sm:$0x1]
      %v3338 = vld [vmem:[%s3002 + $0x50] sm:$0x1]
      %v3339 = vld [vmem:[%s3002 + $0x5c] sm:$0x1]
      %v3340 = vld [vmem:[%s3002 + $0x68] sm:$0x1]
      %v3341 = vld [vmem:[%s3002 + $0x74] sm:$0x1]
      %v3342 = vld [vmem:[%s3002 + $0x80] sm:$0x1]
      %v3343 = vld [vmem:[%s3002 + $0x8c] sm:$0x1]
      %v3344 = vld [vmem:[%s3002 + $0x98] sm:$0x1]
      %v3345 = vld [vmem:[%s3002 + $0xa4] sm:$0x1]
      %v3346 = vld [vmem:[%s3002 + $0xb0] sm:$0x1]
      %v3347 = vld [vmem:[%s3002 + $0xbc] sm:$0x1]
      %v3348 = vld [vmem:[%s3002] sm:$0xe]
      %v3349 = vld [vmem:[%s3002 + $0xc] sm:$0xe]
      %v3350 = vld [vmem:[%s3002 + $0x18] sm:$0xe]
      %v3351 = vld [vmem:[%s3002 + $0x24] sm:$0xe]
      %v3352 = vld [vmem:[%s3002 + $0x30] sm:$0xe]
      %v3353 = vld [vmem:[%s3002 + $0x3c] sm:$0xe]
      %v3354 = vld [vmem:[%s3002 + $0x48] sm:$0xe]
      %v3355 = vld [vmem:[%s3002 + $0x54] sm:$0xe]
      %v3356 = vld [vmem:[%s3002 + $0x60] sm:$0xe]
      %v3357 = vld [vmem:[%s3002 + $0x6c] sm:$0xe]
      %v3358 = vld [vmem:[%s3002 + $0x78] sm:$0xe]
      %v3359 = vld [vmem:[%s3002 + $0x84] sm:$0xe]
      %v3360 = vld [vmem:[%s3002 + $0x90] sm:$0xe]
      %v3361 = vld [vmem:[%s3002 + $0x9c] sm:$0xe]
      %v3362 = vld [vmem:[%s3002 + $0xa8] sm:$0xe]
      %v3363 = vld [vmem:[%s3002 + $0xb4] sm:$0xe]
      %s3364 = scalar_lea.vmem [#allocation2], 24
      %v3365 = vld [vmem:[%s3364] sm:$0xf]
      %v3366 = vld [vmem:[%s3364 + $0x4] sm:$0xf]
      %v3367 = vld [vmem:[%s3364 + $0xc] sm:$0xf]
      %v3368 = vld [vmem:[%s3364 + $0x10] sm:$0xf]
      %v3369 = vld [vmem:[%s3364 + $0x18] sm:$0xf]
      %v3370 = vld [vmem:[%s3364 + $0x1c] sm:$0xf]
      %v3371 = vld [vmem:[%s3364 + $0x24] sm:$0xf]
      %v3372 = vld [vmem:[%s3364 + $0x28] sm:$0xf]
      %v3373 = vld [vmem:[%s3364 + $0x30] sm:$0xf]
      %v3374 = vld [vmem:[%s3364 + $0x34] sm:$0xf]
      %v3375 = vld [vmem:[%s3364 + $0x3c] sm:$0xf]
      %v3376 = vld [vmem:[%s3364 + $0x40] sm:$0xf]
      %v3377 = vld [vmem:[%s3364 + $0x48] sm:$0xf]
      %v3378 = vld [vmem:[%s3364 + $0x4c] sm:$0xf]
      %v3379 = vld [vmem:[%s3364 + $0x54] sm:$0xf]
      %v3380 = vld [vmem:[%s3364 + $0x58] sm:$0xf]
      %v3381 = vld [vmem:[%s3364 + $0x60] sm:$0xf]
      %v3382 = vld [vmem:[%s3364 + $0x64] sm:$0xf]
      %v3383 = vld [vmem:[%s3364 + $0x6c] sm:$0xf]
      %v3384 = vld [vmem:[%s3364 + $0x70] sm:$0xf]
      %v3385 = vld [vmem:[%s3364 + $0x78] sm:$0xf]
      %v3386 = vld [vmem:[%s3364 + $0x7c] sm:$0xf]
      %v3387 = vld [vmem:[%s3364 + $0x84] sm:$0xf]
      %v3388 = vld [vmem:[%s3364 + $0x88] sm:$0xf]
      %v3389 = vld [vmem:[%s3364 + $0x90] sm:$0xf]
      %v3390 = vld [vmem:[%s3364 + $0x94] sm:$0xf]
      %v3391 = vld [vmem:[%s3364 + $0x9c] sm:$0xf]
      %v3392 = vld [vmem:[%s3364 + $0xa0] sm:$0xf]
      %v3393 = vld [vmem:[%s3364 + $0xa8] sm:$0xf]
      %v3394 = vld [vmem:[%s3364 + $0xac] sm:$0xf]
      %v3395 = vld [vmem:[%s3364 + $0xb4] sm:$0xf]
      %v3396 = vld [vmem:[%s3364 + $0xb8] sm:$0xf]
      %v3397 = vld [vmem:[%s3364 + $0x8] sm:$0x1]
      %v3398 = vld [vmem:[%s3364 + $0x14] sm:$0x1]
      %v3399 = vld [vmem:[%s3364 + $0x20] sm:$0x1]
      %v3400 = vld [vmem:[%s3364 + $0x2c] sm:$0x1]
      %v3401 = vld [vmem:[%s3364 + $0x38] sm:$0x1]
      %v3402 = vld [vmem:[%s3364 + $0x44] sm:$0x1]
      %v3403 = vld [vmem:[%s3364 + $0x50] sm:$0x1]
      %v3404 = vld [vmem:[%s3364 + $0x5c] sm:$0x1]
      %v3405 = vld [vmem:[%s3364 + $0x68] sm:$0x1]
      %v3406 = vld [vmem:[%s3364 + $0x74] sm:$0x1]
      %v3407 = vld [vmem:[%s3364 + $0x80] sm:$0x1]
      %v3408 = vld [vmem:[%s3364 + $0x8c] sm:$0x1]
      %v3409 = vld [vmem:[%s3364 + $0x98] sm:$0x1]
      %v3410 = vld [vmem:[%s3364 + $0xa4] sm:$0x1]
      %v3411 = vld [vmem:[%s3364 + $0xb0] sm:$0x1]
      %v3412 = vld [vmem:[%s3364 + $0xbc] sm:$0x1]
      %v3413 = vld [vmem:[%s3364] sm:$0xe]
      %v3414 = vld [vmem:[%s3364 + $0xc] sm:$0xe]
      %v3415 = vld [vmem:[%s3364 + $0x18] sm:$0xe]
      %v3416 = vld [vmem:[%s3364 + $0x24] sm:$0xe]
      %v3417 = vld [vmem:[%s3364 + $0x30] sm:$0xe]
      %v3418 = vld [vmem:[%s3364 + $0x3c] sm:$0xe]
      %v3419 = vld [vmem:[%s3364 + $0x48] sm:$0xe]
      %v3420 = vld [vmem:[%s3364 + $0x54] sm:$0xe]
      %v3421 = vld [vmem:[%s3364 + $0x60] sm:$0xe]
      %v3422 = vld [vmem:[%s3364 + $0x6c] sm:$0xe]
      %v3423 = vld [vmem:[%s3364 + $0x78] sm:$0xe]
      %v3424 = vld [vmem:[%s3364 + $0x84] sm:$0xe]
      %v3425 = vld [vmem:[%s3364 + $0x90] sm:$0xe]
      %v3426 = vld [vmem:[%s3364 + $0x9c] sm:$0xe]
      %v3427 = vld [vmem:[%s3364 + $0xa8] sm:$0xe]
      %v3428 = vld [vmem:[%s3364 + $0xb4] sm:$0xe]
      %v3461 = vunpack.c.l.b16 %v3236
      %v3462 = vunpack.c.l.b16 %v3237
      %v3463 = vunpack.c.l.b16 %v3238
      %v3464 = vunpack.c.l.b16 %v3239
      %v3465 = vunpack.c.l.b16 %v3240
      %v3466 = vunpack.c.l.b16 %v3241
      %v3467 = vunpack.c.l.b16 %v3242
      %v3468 = vunpack.c.l.b16 %v3243
      %v3469 = vunpack.c.l.b16 %v3244
      %v3470 = vunpack.c.l.b16 %v3245
      %v3471 = vunpack.c.l.b16 %v3246
      %v3472 = vunpack.c.l.b16 %v3247
      %v3473 = vunpack.c.l.b16 %v3248
      %v3474 = vunpack.c.l.b16 %v3249
      %v3475 = vunpack.c.l.b16 %v3250
      %v3476 = vunpack.c.l.b16 %v3251
      %v3477 = vunpack.c.l.b16 %v3252
      %v3478 = vunpack.c.l.b16 %v3253
      %v3479 = vunpack.c.l.b16 %v3254
      %v3480 = vunpack.c.l.b16 %v3255
      %v3481 = vunpack.c.l.b16 %v3256
      %v3482 = vunpack.c.l.b16 %v3257
      %v3483 = vunpack.c.l.b16 %v3258
      %v3484 = vunpack.c.l.b16 %v3259
      %v3485 = vunpack.c.l.b16 %v3260
      %v3486 = vunpack.c.l.b16 %v3261
      %v3487 = vunpack.c.l.b16 %v3262
      %v3488 = vunpack.c.l.b16 %v3263
      %v3489 = vunpack.c.l.b16 %v3264
      %v3490 = vunpack.c.l.b16 %v3265
      %v3491 = vunpack.c.l.b16 %v3266
      %v3492 = vunpack.c.l.b16 %v3267
      %v3493 = vpack.c.b16 %v3462, %v3461
      %v3494 = vpack.c.b16 %v3464, %v3463
      %v3495 = vpack.c.b16 %v3466, %v3465
      %v3496 = vpack.c.b16 %v3468, %v3467
      %v3497 = vpack.c.b16 %v3470, %v3469
      %v3498 = vpack.c.b16 %v3472, %v3471
      %v3499 = vpack.c.b16 %v3474, %v3473
      %v3500 = vpack.c.b16 %v3476, %v3475
      %v3501 = vpack.c.b16 %v3478, %v3477
      %v3502 = vpack.c.b16 %v3480, %v3479
      %v3503 = vpack.c.b16 %v3482, %v3481
      %v3504 = vpack.c.b16 %v3484, %v3483
      %v3505 = vpack.c.b16 %v3486, %v3485
      %v3506 = vpack.c.b16 %v3488, %v3487
      %v3507 = vpack.c.b16 %v3490, %v3489
      %v3508 = vpack.c.b16 %v3492, %v3491
      %v3541 = vunpack.c.l.b16 %v3268
      %v3542 = vunpack.c.l.b16 %v3269
      %v3543 = vunpack.c.l.b16 %v3270
      %v3544 = vunpack.c.l.b16 %v3271
      %v3545 = vunpack.c.l.b16 %v3272
      %v3546 = vunpack.c.l.b16 %v3273
      %v3547 = vunpack.c.l.b16 %v3274
      %v3548 = vunpack.c.l.b16 %v3275
      %v3549 = vunpack.c.l.b16 %v3276
      %v3550 = vunpack.c.l.b16 %v3277
      %v3551 = vunpack.c.l.b16 %v3278
      %v3552 = vunpack.c.l.b16 %v3279
      %v3553 = vunpack.c.l.b16 %v3280
      %v3554 = vunpack.c.l.b16 %v3281
      %v3555 = vunpack.c.l.b16 %v3282
      %v3556 = vunpack.c.l.b16 %v3283
      %v3557 = vpack.c.b16 %v3541, %v3541
      %v3558 = vpack.c.b16 %v3542, %v3542
      %v3559 = vpack.c.b16 %v3543, %v3543
      %v3560 = vpack.c.b16 %v3544, %v3544
      %v3561 = vpack.c.b16 %v3545, %v3545
      %v3562 = vpack.c.b16 %v3546, %v3546
      %v3563 = vpack.c.b16 %v3547, %v3547
      %v3564 = vpack.c.b16 %v3548, %v3548
      %v3565 = vpack.c.b16 %v3549, %v3549
      %v3566 = vpack.c.b16 %v3550, %v3550
      %v3567 = vpack.c.b16 %v3551, %v3551
      %v3568 = vpack.c.b16 %v3552, %v3552
      %v3569 = vpack.c.b16 %v3553, %v3553
      %v3570 = vpack.c.b16 %v3554, %v3554
      %v3571 = vpack.c.b16 %v3555, %v3555
      %v3572 = vpack.c.b16 %v3556, %v3556
      %v3574 = vshrl.u32 %v3493, 16
      %v3576 = vshll.u32 %v3493, 16
      %v3578 = vrot.slane %v3576, 1
      %v3579 = vor.u32 %v3574, %v3578
      %v3581 = vshll.u32 %v3557, 16
      %v3583 = vrot.slane %v3581, 1
      %v3584 = vsel %vm392, %v3579, %v3583
      %v3586 = vshrl.u32 %v3494, 16
      %v3588 = vshll.u32 %v3494, 16
      %v3590 = vrot.slane %v3588, 1
      %v3591 = vor.u32 %v3586, %v3590
      %v3593 = vshll.u32 %v3558, 16
      %v3595 = vrot.slane %v3593, 1
      %v3596 = vsel %vm392, %v3591, %v3595
      %v3598 = vshrl.u32 %v3495, 16
      %v3600 = vshll.u32 %v3495, 16
      %v3602 = vrot.slane %v3600, 1
      %v3603 = vor.u32 %v3598, %v3602
      %v3605 = vshll.u32 %v3559, 16
      %v3607 = vrot.slane %v3605, 1
      %v3608 = vsel %vm392, %v3603, %v3607
      %v3610 = vshrl.u32 %v3496, 16
      %v3612 = vshll.u32 %v3496, 16
      %v3614 = vrot.slane %v3612, 1
      %v3615 = vor.u32 %v3610, %v3614
      %v3617 = vshll.u32 %v3560, 16
      %v3619 = vrot.slane %v3617, 1
      %v3620 = vsel %vm392, %v3615, %v3619
      %v3622 = vshrl.u32 %v3497, 16
      %v3624 = vshll.u32 %v3497, 16
      %v3626 = vrot.slane %v3624, 1
      %v3627 = vor.u32 %v3622, %v3626
      %v3629 = vshll.u32 %v3561, 16
      %v3631 = vrot.slane %v3629, 1
      %v3632 = vsel %vm392, %v3627, %v3631
      %v3634 = vshrl.u32 %v3498, 16
      %v3636 = vshll.u32 %v3498, 16
      %v3638 = vrot.slane %v3636, 1
      %v3639 = vor.u32 %v3634, %v3638
      %v3641 = vshll.u32 %v3562, 16
      %v3643 = vrot.slane %v3641, 1
      %v3644 = vsel %vm392, %v3639, %v3643
      %v3646 = vshrl.u32 %v3499, 16
      %v3648 = vshll.u32 %v3499, 16
      %v3650 = vrot.slane %v3648, 1
      %v3651 = vor.u32 %v3646, %v3650
      %v3653 = vshll.u32 %v3563, 16
      %v3655 = vrot.slane %v3653, 1
      %v3656 = vsel %vm392, %v3651, %v3655
      %v3658 = vshrl.u32 %v3500, 16
      %v3660 = vshll.u32 %v3500, 16
      %v3662 = vrot.slane %v3660, 1
      %v3663 = vor.u32 %v3658, %v3662
      %v3665 = vshll.u32 %v3564, 16
      %v3667 = vrot.slane %v3665, 1
      %v3668 = vsel %vm392, %v3663, %v3667
      %v3670 = vshrl.u32 %v3501, 16
      %v3672 = vshll.u32 %v3501, 16
      %v3674 = vrot.slane %v3672, 1
      %v3675 = vor.u32 %v3670, %v3674
      %v3677 = vshll.u32 %v3565, 16
      %v3679 = vrot.slane %v3677, 1
      %v3680 = vsel %vm392, %v3675, %v3679
      %v3682 = vshrl.u32 %v3502, 16
      %v3684 = vshll.u32 %v3502, 16
      %v3686 = vrot.slane %v3684, 1
      %v3687 = vor.u32 %v3682, %v3686
      %v3689 = vshll.u32 %v3566, 16
      %v3691 = vrot.slane %v3689, 1
      %v3692 = vsel %vm392, %v3687, %v3691
      %v3694 = vshrl.u32 %v3503, 16
      %v3696 = vshll.u32 %v3503, 16
      %v3698 = vrot.slane %v3696, 1
      %v3699 = vor.u32 %v3694, %v3698
      %v3701 = vshll.u32 %v3567, 16
      %v3703 = vrot.slane %v3701, 1
      %v3704 = vsel %vm392, %v3699, %v3703
      %v3706 = vshrl.u32 %v3504, 16
      %v3708 = vshll.u32 %v3504, 16
      %v3710 = vrot.slane %v3708, 1
      %v3711 = vor.u32 %v3706, %v3710
      %v3713 = vshll.u32 %v3568, 16
      %v3715 = vrot.slane %v3713, 1
      %v3716 = vsel %vm392, %v3711, %v3715
      %v3718 = vshrl.u32 %v3505, 16
      %v3720 = vshll.u32 %v3505, 16
      %v3722 = vrot.slane %v3720, 1
      %v3723 = vor.u32 %v3718, %v3722
      %v3725 = vshll.u32 %v3569, 16
      %v3727 = vrot.slane %v3725, 1
      %v3728 = vsel %vm392, %v3723, %v3727
      %v3730 = vshrl.u32 %v3506, 16
      %v3732 = vshll.u32 %v3506, 16
      %v3734 = vrot.slane %v3732, 1
      %v3735 = vor.u32 %v3730, %v3734
      %v3737 = vshll.u32 %v3570, 16
      %v3739 = vrot.slane %v3737, 1
      %v3740 = vsel %vm392, %v3735, %v3739
      %v3742 = vshrl.u32 %v3507, 16
      %v3744 = vshll.u32 %v3507, 16
      %v3746 = vrot.slane %v3744, 1
      %v3747 = vor.u32 %v3742, %v3746
      %v3749 = vshll.u32 %v3571, 16
      %v3751 = vrot.slane %v3749, 1
      %v3752 = vsel %vm392, %v3747, %v3751
      %v3754 = vshrl.u32 %v3508, 16
      %v3756 = vshll.u32 %v3508, 16
      %v3758 = vrot.slane %v3756, 1
      %v3759 = vor.u32 %v3754, %v3758
      %v3761 = vshll.u32 %v3572, 16
      %v3763 = vrot.slane %v3761, 1
      %v3764 = vsel %vm392, %v3759, %v3763
      %v3797 = vunpack.c.l.b16 %v3284
      %v3798 = vunpack.c.l.b16 %v3285
      %v3799 = vunpack.c.l.b16 %v3286
      %v3800 = vunpack.c.l.b16 %v3287
      %v3801 = vunpack.c.l.b16 %v3288
      %v3802 = vunpack.c.l.b16 %v3289
      %v3803 = vunpack.c.l.b16 %v3290
      %v3804 = vunpack.c.l.b16 %v3291
      %v3805 = vunpack.c.l.b16 %v3292
      %v3806 = vunpack.c.l.b16 %v3293
      %v3807 = vunpack.c.l.b16 %v3294
      %v3808 = vunpack.c.l.b16 %v3295
      %v3809 = vunpack.c.l.b16 %v3296
      %v3810 = vunpack.c.l.b16 %v3297
      %v3811 = vunpack.c.l.b16 %v3298
      %v3812 = vunpack.c.l.b16 %v3299
      %v3813 = vpack.c.b16 %v3462, %v3797
      %v3814 = vpack.c.b16 %v3464, %v3798
      %v3815 = vpack.c.b16 %v3466, %v3799
      %v3816 = vpack.c.b16 %v3468, %v3800
      %v3817 = vpack.c.b16 %v3470, %v3801
      %v3818 = vpack.c.b16 %v3472, %v3802
      %v3819 = vpack.c.b16 %v3474, %v3803
      %v3820 = vpack.c.b16 %v3476, %v3804
      %v3821 = vpack.c.b16 %v3478, %v3805
      %v3822 = vpack.c.b16 %v3480, %v3806
      %v3823 = vpack.c.b16 %v3482, %v3807
      %v3824 = vpack.c.b16 %v3484, %v3808
      %v3825 = vpack.c.b16 %v3486, %v3809
      %v3826 = vpack.c.b16 %v3488, %v3810
      %v3827 = vpack.c.b16 %v3490, %v3811
      %v3828 = vpack.c.b16 %v3492, %v3812
      %v3829 = vrot.slane %v3813, 1
      %v3830 = vrot.slane %v3557, 1
      %v3831 = vsel %vm617, %v3829, %v3830
      %v3832 = vrot.slane %v3814, 1
      %v3833 = vrot.slane %v3558, 1
      %v3834 = vsel %vm617, %v3832, %v3833
      %v3835 = vrot.slane %v3815, 1
      %v3836 = vrot.slane %v3559, 1
      %v3837 = vsel %vm617, %v3835, %v3836
      %v3838 = vrot.slane %v3816, 1
      %v3839 = vrot.slane %v3560, 1
      %v3840 = vsel %vm617, %v3838, %v3839
      %v3841 = vrot.slane %v3817, 1
      %v3842 = vrot.slane %v3561, 1
      %v3843 = vsel %vm617, %v3841, %v3842
      %v3844 = vrot.slane %v3818, 1
      %v3845 = vrot.slane %v3562, 1
      %v3846 = vsel %vm617, %v3844, %v3845
      %v3847 = vrot.slane %v3819, 1
      %v3848 = vrot.slane %v3563, 1
      %v3849 = vsel %vm617, %v3847, %v3848
      %v3850 = vrot.slane %v3820, 1
      %v3851 = vrot.slane %v3564, 1
      %v3852 = vsel %vm617, %v3850, %v3851
      %v3853 = vrot.slane %v3821, 1
      %v3854 = vrot.slane %v3565, 1
      %v3855 = vsel %vm617, %v3853, %v3854
      %v3856 = vrot.slane %v3822, 1
      %v3857 = vrot.slane %v3566, 1
      %v3858 = vsel %vm617, %v3856, %v3857
      %v3859 = vrot.slane %v3823, 1
      %v3860 = vrot.slane %v3567, 1
      %v3861 = vsel %vm617, %v3859, %v3860
      %v3862 = vrot.slane %v3824, 1
      %v3863 = vrot.slane %v3568, 1
      %v3864 = vsel %vm617, %v3862, %v3863
      %v3865 = vrot.slane %v3825, 1
      %v3866 = vrot.slane %v3569, 1
      %v3867 = vsel %vm617, %v3865, %v3866
      %v3868 = vrot.slane %v3826, 1
      %v3869 = vrot.slane %v3570, 1
      %v3870 = vsel %vm617, %v3868, %v3869
      %v3871 = vrot.slane %v3827, 1
      %v3872 = vrot.slane %v3571, 1
      %v3873 = vsel %vm617, %v3871, %v3872
      %v3874 = vrot.slane %v3828, 1
      %v3875 = vrot.slane %v3572, 1
      %v3876 = vsel %vm617, %v3874, %v3875
      %v3925 = vunpack.c.l.b16 %v3300
      %v3926 = vunpack.c.l.b16 %v3301
      %v3927 = vunpack.c.l.b16 %v3302
      %v3928 = vunpack.c.l.b16 %v3303
      %v3929 = vunpack.c.l.b16 %v3304
      %v3930 = vunpack.c.l.b16 %v3305
      %v3931 = vunpack.c.l.b16 %v3306
      %v3932 = vunpack.c.l.b16 %v3307
      %v3933 = vunpack.c.l.b16 %v3308
      %v3934 = vunpack.c.l.b16 %v3309
      %v3935 = vunpack.c.l.b16 %v3310
      %v3936 = vunpack.c.l.b16 %v3311
      %v3937 = vunpack.c.l.b16 %v3312
      %v3938 = vunpack.c.l.b16 %v3313
      %v3939 = vunpack.c.l.b16 %v3314
      %v3940 = vunpack.c.l.b16 %v3315
      %v3941 = vunpack.c.l.b16 %v3316
      %v3942 = vunpack.c.l.b16 %v3317
      %v3943 = vunpack.c.l.b16 %v3318
      %v3944 = vunpack.c.l.b16 %v3319
      %v3945 = vunpack.c.l.b16 %v3320
      %v3946 = vunpack.c.l.b16 %v3321
      %v3947 = vunpack.c.l.b16 %v3322
      %v3948 = vunpack.c.l.b16 %v3323
      %v3949 = vunpack.c.l.b16 %v3324
      %v3950 = vunpack.c.l.b16 %v3325
      %v3951 = vunpack.c.l.b16 %v3326
      %v3952 = vunpack.c.l.b16 %v3327
      %v3953 = vunpack.c.l.b16 %v3328
      %v3954 = vunpack.c.l.b16 %v3329
      %v3955 = vunpack.c.l.b16 %v3330
      %v3956 = vunpack.c.l.b16 %v3331
      %v3957 = vpack.c.b16 %v3926, %v3925
      %v3958 = vpack.c.b16 %v3928, %v3927
      %v3959 = vpack.c.b16 %v3930, %v3929
      %v3960 = vpack.c.b16 %v3932, %v3931
      %v3961 = vpack.c.b16 %v3934, %v3933
      %v3962 = vpack.c.b16 %v3936, %v3935
      %v3963 = vpack.c.b16 %v3938, %v3937
      %v3964 = vpack.c.b16 %v3940, %v3939
      %v3965 = vpack.c.b16 %v3942, %v3941
      %v3966 = vpack.c.b16 %v3944, %v3943
      %v3967 = vpack.c.b16 %v3946, %v3945
      %v3968 = vpack.c.b16 %v3948, %v3947
      %v3969 = vpack.c.b16 %v3950, %v3949
      %v3970 = vpack.c.b16 %v3952, %v3951
      %v3971 = vpack.c.b16 %v3954, %v3953
      %v3972 = vpack.c.b16 %v3956, %v3955
      %v4005 = vunpack.c.l.b16 %v3332
      %v4006 = vunpack.c.l.b16 %v3333
      %v4007 = vunpack.c.l.b16 %v3334
      %v4008 = vunpack.c.l.b16 %v3335
      %v4009 = vunpack.c.l.b16 %v3336
      %v4010 = vunpack.c.l.b16 %v3337
      %v4011 = vunpack.c.l.b16 %v3338
      %v4012 = vunpack.c.l.b16 %v3339
      %v4013 = vunpack.c.l.b16 %v3340
      %v4014 = vunpack.c.l.b16 %v3341
      %v4015 = vunpack.c.l.b16 %v3342
      %v4016 = vunpack.c.l.b16 %v3343
      %v4017 = vunpack.c.l.b16 %v3344
      %v4018 = vunpack.c.l.b16 %v3345
      %v4019 = vunpack.c.l.b16 %v3346
      %v4020 = vunpack.c.l.b16 %v3347
      %v4021 = vpack.c.b16 %v4005, %v4005
      %v4022 = vpack.c.b16 %v4006, %v4006
      %v4023 = vpack.c.b16 %v4007, %v4007
      %v4024 = vpack.c.b16 %v4008, %v4008
      %v4025 = vpack.c.b16 %v4009, %v4009
      %v4026 = vpack.c.b16 %v4010, %v4010
      %v4027 = vpack.c.b16 %v4011, %v4011
      %v4028 = vpack.c.b16 %v4012, %v4012
      %v4029 = vpack.c.b16 %v4013, %v4013
      %v4030 = vpack.c.b16 %v4014, %v4014
      %v4031 = vpack.c.b16 %v4015, %v4015
      %v4032 = vpack.c.b16 %v4016, %v4016
      %v4033 = vpack.c.b16 %v4017, %v4017
      %v4034 = vpack.c.b16 %v4018, %v4018
      %v4035 = vpack.c.b16 %v4019, %v4019
      %v4036 = vpack.c.b16 %v4020, %v4020
      %v4038 = vshrl.u32 %v3957, 16
      %v4040 = vshll.u32 %v3957, 16
      %v4042 = vrot.slane %v4040, 1
      %v4043 = vor.u32 %v4038, %v4042
      %v4045 = vshll.u32 %v4021, 16
      %v4047 = vrot.slane %v4045, 1
      %v4048 = vsel %vm392, %v4043, %v4047
      %v4050 = vshrl.u32 %v3958, 16
      %v4052 = vshll.u32 %v3958, 16
      %v4054 = vrot.slane %v4052, 1
      %v4055 = vor.u32 %v4050, %v4054
      %v4057 = vshll.u32 %v4022, 16
      %v4059 = vrot.slane %v4057, 1
      %v4060 = vsel %vm392, %v4055, %v4059
      %v4062 = vshrl.u32 %v3959, 16
      %v4064 = vshll.u32 %v3959, 16
      %v4066 = vrot.slane %v4064, 1
      %v4067 = vor.u32 %v4062, %v4066
      %v4069 = vshll.u32 %v4023, 16
      %v4071 = vrot.slane %v4069, 1
      %v4072 = vsel %vm392, %v4067, %v4071
      %v4074 = vshrl.u32 %v3960, 16
      %v4076 = vshll.u32 %v3960, 16
      %v4078 = vrot.slane %v4076, 1
      %v4079 = vor.u32 %v4074, %v4078
      %v4081 = vshll.u32 %v4024, 16
      %v4083 = vrot.slane %v4081, 1
      %v4084 = vsel %vm392, %v4079, %v4083
      %v4086 = vshrl.u32 %v3961, 16
      %v4088 = vshll.u32 %v3961, 16
      %v4090 = vrot.slane %v4088, 1
      %v4091 = vor.u32 %v4086, %v4090
      %v4093 = vshll.u32 %v4025, 16
      %v4095 = vrot.slane %v4093, 1
      %v4096 = vsel %vm392, %v4091, %v4095
      %v4098 = vshrl.u32 %v3962, 16
      %v4100 = vshll.u32 %v3962, 16
      %v4102 = vrot.slane %v4100, 1
      %v4103 = vor.u32 %v4098, %v4102
      %v4105 = vshll.u32 %v4026, 16
      %v4107 = vrot.slane %v4105, 1
      %v4108 = vsel %vm392, %v4103, %v4107
      %v4110 = vshrl.u32 %v3963, 16
      %v4112 = vshll.u32 %v3963, 16
      %v4114 = vrot.slane %v4112, 1
      %v4115 = vor.u32 %v4110, %v4114
      %v4117 = vshll.u32 %v4027, 16
      %v4119 = vrot.slane %v4117, 1
      %v4120 = vsel %vm392, %v4115, %v4119
      %v4122 = vshrl.u32 %v3964, 16
      %v4124 = vshll.u32 %v3964, 16
      %v4126 = vrot.slane %v4124, 1
      %v4127 = vor.u32 %v4122, %v4126
      %v4129 = vshll.u32 %v4028, 16
      %v4131 = vrot.slane %v4129, 1
      %v4132 = vsel %vm392, %v4127, %v4131
      %v4134 = vshrl.u32 %v3965, 16
      %v4136 = vshll.u32 %v3965, 16
      %v4138 = vrot.slane %v4136, 1
      %v4139 = vor.u32 %v4134, %v4138
      %v4141 = vshll.u32 %v4029, 16
      %v4143 = vrot.slane %v4141, 1
      %v4144 = vsel %vm392, %v4139, %v4143
      %v4146 = vshrl.u32 %v3966, 16
      %v4148 = vshll.u32 %v3966, 16
      %v4150 = vrot.slane %v4148, 1
      %v4151 = vor.u32 %v4146, %v4150
      %v4153 = vshll.u32 %v4030, 16
      %v4155 = vrot.slane %v4153, 1
      %v4156 = vsel %vm392, %v4151, %v4155
      %v4158 = vshrl.u32 %v3967, 16
      %v4160 = vshll.u32 %v3967, 16
      %v4162 = vrot.slane %v4160, 1
      %v4163 = vor.u32 %v4158, %v4162
      %v4165 = vshll.u32 %v4031, 16
      %v4167 = vrot.slane %v4165, 1
      %v4168 = vsel %vm392, %v4163, %v4167
      %v4170 = vshrl.u32 %v3968, 16
      %v4172 = vshll.u32 %v3968, 16
      %v4174 = vrot.slane %v4172, 1
      %v4175 = vor.u32 %v4170, %v4174
      %v4177 = vshll.u32 %v4032, 16
      %v4179 = vrot.slane %v4177, 1
      %v4180 = vsel %vm392, %v4175, %v4179
      %v4182 = vshrl.u32 %v3969, 16
      %v4184 = vshll.u32 %v3969, 16
      %v4186 = vrot.slane %v4184, 1
      %v4187 = vor.u32 %v4182, %v4186
      %v4189 = vshll.u32 %v4033, 16
      %v4191 = vrot.slane %v4189, 1
      %v4192 = vsel %vm392, %v4187, %v4191
      %v4194 = vshrl.u32 %v3970, 16
      %v4196 = vshll.u32 %v3970, 16
      %v4198 = vrot.slane %v4196, 1
      %v4199 = vor.u32 %v4194, %v4198
      %v4201 = vshll.u32 %v4034, 16
      %v4203 = vrot.slane %v4201, 1
      %v4204 = vsel %vm392, %v4199, %v4203
      %v4206 = vshrl.u32 %v3971, 16
      %v4208 = vshll.u32 %v3971, 16
      %v4210 = vrot.slane %v4208, 1
      %v4211 = vor.u32 %v4206, %v4210
      %v4213 = vshll.u32 %v4035, 16
      %v4215 = vrot.slane %v4213, 1
      %v4216 = vsel %vm392, %v4211, %v4215
      %v4218 = vshrl.u32 %v3972, 16
      %v4220 = vshll.u32 %v3972, 16
      %v4222 = vrot.slane %v4220, 1
      %v4223 = vor.u32 %v4218, %v4222
      %v4225 = vshll.u32 %v4036, 16
      %v4227 = vrot.slane %v4225, 1
      %v4228 = vsel %vm392, %v4223, %v4227
      %v4261 = vunpack.c.l.b16 %v3348
      %v4262 = vunpack.c.l.b16 %v3349
      %v4263 = vunpack.c.l.b16 %v3350
      %v4264 = vunpack.c.l.b16 %v3351
      %v4265 = vunpack.c.l.b16 %v3352
      %v4266 = vunpack.c.l.b16 %v3353
      %v4267 = vunpack.c.l.b16 %v3354
      %v4268 = vunpack.c.l.b16 %v3355
      %v4269 = vunpack.c.l.b16 %v3356
      %v4270 = vunpack.c.l.b16 %v3357
      %v4271 = vunpack.c.l.b16 %v3358
      %v4272 = vunpack.c.l.b16 %v3359
      %v4273 = vunpack.c.l.b16 %v3360
      %v4274 = vunpack.c.l.b16 %v3361
      %v4275 = vunpack.c.l.b16 %v3362
      %v4276 = vunpack.c.l.b16 %v3363
      %v4277 = vpack.c.b16 %v3926, %v4261
      %v4278 = vpack.c.b16 %v3928, %v4262
      %v4279 = vpack.c.b16 %v3930, %v4263
      %v4280 = vpack.c.b16 %v3932, %v4264
      %v4281 = vpack.c.b16 %v3934, %v4265
      %v4282 = vpack.c.b16 %v3936, %v4266
      %v4283 = vpack.c.b16 %v3938, %v4267
      %v4284 = vpack.c.b16 %v3940, %v4268
      %v4285 = vpack.c.b16 %v3942, %v4269
      %v4286 = vpack.c.b16 %v3944, %v4270
      %v4287 = vpack.c.b16 %v3946, %v4271
      %v4288 = vpack.c.b16 %v3948, %v4272
      %v4289 = vpack.c.b16 %v3950, %v4273
      %v4290 = vpack.c.b16 %v3952, %v4274
      %v4291 = vpack.c.b16 %v3954, %v4275
      %v4292 = vpack.c.b16 %v3956, %v4276
      %v4293 = vrot.slane %v4277, 1
      %v4294 = vrot.slane %v4021, 1
      %v4295 = vsel %vm617, %v4293, %v4294
      %v4296 = vrot.slane %v4278, 1
      %v4297 = vrot.slane %v4022, 1
      %v4298 = vsel %vm617, %v4296, %v4297
      %v4299 = vrot.slane %v4279, 1
      %v4300 = vrot.slane %v4023, 1
      %v4301 = vsel %vm617, %v4299, %v4300
      %v4302 = vrot.slane %v4280, 1
      %v4303 = vrot.slane %v4024, 1
      %v4304 = vsel %vm617, %v4302, %v4303
      %v4305 = vrot.slane %v4281, 1
      %v4306 = vrot.slane %v4025, 1
      %v4307 = vsel %vm617, %v4305, %v4306
      %v4308 = vrot.slane %v4282, 1
      %v4309 = vrot.slane %v4026, 1
      %v4310 = vsel %vm617, %v4308, %v4309
      %v4311 = vrot.slane %v4283, 1
      %v4312 = vrot.slane %v4027, 1
      %v4313 = vsel %vm617, %v4311, %v4312
      %v4314 = vrot.slane %v4284, 1
      %v4315 = vrot.slane %v4028, 1
      %v4316 = vsel %vm617, %v4314, %v4315
      %v4317 = vrot.slane %v4285, 1
      %v4318 = vrot.slane %v4029, 1
      %v4319 = vsel %vm617, %v4317, %v4318
      %v4320 = vrot.slane %v4286, 1
      %v4321 = vrot.slane %v4030, 1
      %v4322 = vsel %vm617, %v4320, %v4321
      %v4323 = vrot.slane %v4287, 1
      %v4324 = vrot.slane %v4031, 1
      %v4325 = vsel %vm617, %v4323, %v4324
      %v4326 = vrot.slane %v4288, 1
      %v4327 = vrot.slane %v4032, 1
      %v4328 = vsel %vm617, %v4326, %v4327
      %v4329 = vrot.slane %v4289, 1
      %v4330 = vrot.slane %v4033, 1
      %v4331 = vsel %vm617, %v4329, %v4330
      %v4332 = vrot.slane %v4290, 1
      %v4333 = vrot.slane %v4034, 1
      %v4334 = vsel %vm617, %v4332, %v4333
      %v4335 = vrot.slane %v4291, 1
      %v4336 = vrot.slane %v4035, 1
      %v4337 = vsel %vm617, %v4335, %v4336
      %v4338 = vrot.slane %v4292, 1
      %v4339 = vrot.slane %v4036, 1
      %v4340 = vsel %vm617, %v4338, %v4339
      %v4389 = vunpack.c.l.b16 %v3365
      %v4390 = vunpack.c.l.b16 %v3366
      %v4391 = vunpack.c.l.b16 %v3367
      %v4392 = vunpack.c.l.b16 %v3368
      %v4393 = vunpack.c.l.b16 %v3369
      %v4394 = vunpack.c.l.b16 %v3370
      %v4395 = vunpack.c.l.b16 %v3371
      %v4396 = vunpack.c.l.b16 %v3372
      %v4397 = vunpack.c.l.b16 %v3373
      %v4398 = vunpack.c.l.b16 %v3374
      %v4399 = vunpack.c.l.b16 %v3375
      %v4400 = vunpack.c.l.b16 %v3376
      %v4401 = vunpack.c.l.b16 %v3377
      %v4402 = vunpack.c.l.b16 %v3378
      %v4403 = vunpack.c.l.b16 %v3379
      %v4404 = vunpack.c.l.b16 %v3380
      %v4405 = vunpack.c.l.b16 %v3381
      %v4406 = vunpack.c.l.b16 %v3382
      %v4407 = vunpack.c.l.b16 %v3383
      %v4408 = vunpack.c.l.b16 %v3384
      %v4409 = vunpack.c.l.b16 %v3385
      %v4410 = vunpack.c.l.b16 %v3386
      %v4411 = vunpack.c.l.b16 %v3387
      %v4412 = vunpack.c.l.b16 %v3388
      %v4413 = vunpack.c.l.b16 %v3389
      %v4414 = vunpack.c.l.b16 %v3390
      %v4415 = vunpack.c.l.b16 %v3391
      %v4416 = vunpack.c.l.b16 %v3392
      %v4417 = vunpack.c.l.b16 %v3393
      %v4418 = vunpack.c.l.b16 %v3394
      %v4419 = vunpack.c.l.b16 %v3395
      %v4420 = vunpack.c.l.b16 %v3396
      %v4421 = vpack.c.b16 %v4390, %v4389
      %v4422 = vpack.c.b16 %v4392, %v4391
      %v4423 = vpack.c.b16 %v4394, %v4393
      %v4424 = vpack.c.b16 %v4396, %v4395
      %v4425 = vpack.c.b16 %v4398, %v4397
      %v4426 = vpack.c.b16 %v4400, %v4399
      %v4427 = vpack.c.b16 %v4402, %v4401
      %v4428 = vpack.c.b16 %v4404, %v4403
      %v4429 = vpack.c.b16 %v4406, %v4405
      %v4430 = vpack.c.b16 %v4408, %v4407
      %v4431 = vpack.c.b16 %v4410, %v4409
      %v4432 = vpack.c.b16 %v4412, %v4411
      %v4433 = vpack.c.b16 %v4414, %v4413
      %v4434 = vpack.c.b16 %v4416, %v4415
      %v4435 = vpack.c.b16 %v4418, %v4417
      %v4436 = vpack.c.b16 %v4420, %v4419
      %v4469 = vunpack.c.l.b16 %v3397
      %v4470 = vunpack.c.l.b16 %v3398
      %v4471 = vunpack.c.l.b16 %v3399
      %v4472 = vunpack.c.l.b16 %v3400
      %v4473 = vunpack.c.l.b16 %v3401
      %v4474 = vunpack.c.l.b16 %v3402
      %v4475 = vunpack.c.l.b16 %v3403
      %v4476 = vunpack.c.l.b16 %v3404
      %v4477 = vunpack.c.l.b16 %v3405
      %v4478 = vunpack.c.l.b16 %v3406
      %v4479 = vunpack.c.l.b16 %v3407
      %v4480 = vunpack.c.l.b16 %v3408
      %v4481 = vunpack.c.l.b16 %v3409
      %v4482 = vunpack.c.l.b16 %v3410
      %v4483 = vunpack.c.l.b16 %v3411
      %v4484 = vunpack.c.l.b16 %v3412
      %v4485 = vpack.c.b16 %v4469, %v4469
      %v4486 = vpack.c.b16 %v4470, %v4470
      %v4487 = vpack.c.b16 %v4471, %v4471
      %v4488 = vpack.c.b16 %v4472, %v4472
      %v4489 = vpack.c.b16 %v4473, %v4473
      %v4490 = vpack.c.b16 %v4474, %v4474
      %v4491 = vpack.c.b16 %v4475, %v4475
      %v4492 = vpack.c.b16 %v4476, %v4476
      %v4493 = vpack.c.b16 %v4477, %v4477
      %v4494 = vpack.c.b16 %v4478, %v4478
      %v4495 = vpack.c.b16 %v4479, %v4479
      %v4496 = vpack.c.b16 %v4480, %v4480
      %v4497 = vpack.c.b16 %v4481, %v4481
      %v4498 = vpack.c.b16 %v4482, %v4482
      %v4499 = vpack.c.b16 %v4483, %v4483
      %v4500 = vpack.c.b16 %v4484, %v4484
      %v4502 = vshrl.u32 %v4421, 16
      %v4504 = vshll.u32 %v4421, 16
      %v4506 = vrot.slane %v4504, 1
      %v4507 = vor.u32 %v4502, %v4506
      %v4509 = vshll.u32 %v4485, 16
      %v4511 = vrot.slane %v4509, 1
      %v4512 = vsel %vm392, %v4507, %v4511
      %v4514 = vshrl.u32 %v4422, 16
      %v4516 = vshll.u32 %v4422, 16
      %v4518 = vrot.slane %v4516, 1
      %v4519 = vor.u32 %v4514, %v4518
      %v4521 = vshll.u32 %v4486, 16
      %v4523 = vrot.slane %v4521, 1
      %v4524 = vsel %vm392, %v4519, %v4523
      %v4526 = vshrl.u32 %v4423, 16
      %v4528 = vshll.u32 %v4423, 16
      %v4530 = vrot.slane %v4528, 1
      %v4531 = vor.u32 %v4526, %v4530
      %v4533 = vshll.u32 %v4487, 16
      %v4535 = vrot.slane %v4533, 1
      %v4536 = vsel %vm392, %v4531, %v4535
      %v4538 = vshrl.u32 %v4424, 16
      %v4540 = vshll.u32 %v4424, 16
      %v4542 = vrot.slane %v4540, 1
      %v4543 = vor.u32 %v4538, %v4542
      %v4545 = vshll.u32 %v4488, 16
      %v4547 = vrot.slane %v4545, 1
      %v4548 = vsel %vm392, %v4543, %v4547
      %v4550 = vshrl.u32 %v4425, 16
      %v4552 = vshll.u32 %v4425, 16
      %v4554 = vrot.slane %v4552, 1
      %v4555 = vor.u32 %v4550, %v4554
      %v4557 = vshll.u32 %v4489, 16
      %v4559 = vrot.slane %v4557, 1
      %v4560 = vsel %vm392, %v4555, %v4559
      %v4562 = vshrl.u32 %v4426, 16
      %v4564 = vshll.u32 %v4426, 16
      %v4566 = vrot.slane %v4564, 1
      %v4567 = vor.u32 %v4562, %v4566
      %v4569 = vshll.u32 %v4490, 16
      %v4571 = vrot.slane %v4569, 1
      %v4572 = vsel %vm392, %v4567, %v4571
      %v4574 = vshrl.u32 %v4427, 16
      %v4576 = vshll.u32 %v4427, 16
      %v4578 = vrot.slane %v4576, 1
      %v4579 = vor.u32 %v4574, %v4578
      %v4581 = vshll.u32 %v4491, 16
      %v4583 = vrot.slane %v4581, 1
      %v4584 = vsel %vm392, %v4579, %v4583
      %v4586 = vshrl.u32 %v4428, 16
      %v4588 = vshll.u32 %v4428, 16
      %v4590 = vrot.slane %v4588, 1
      %v4591 = vor.u32 %v4586, %v4590
      %v4593 = vshll.u32 %v4492, 16
      %v4595 = vrot.slane %v4593, 1
      %v4596 = vsel %vm392, %v4591, %v4595
      %v4598 = vshrl.u32 %v4429, 16
      %v4600 = vshll.u32 %v4429, 16
      %v4602 = vrot.slane %v4600, 1
      %v4603 = vor.u32 %v4598, %v4602
      %v4605 = vshll.u32 %v4493, 16
      %v4607 = vrot.slane %v4605, 1
      %v4608 = vsel %vm392, %v4603, %v4607
      %v4610 = vshrl.u32 %v4430, 16
      %v4612 = vshll.u32 %v4430, 16
      %v4614 = vrot.slane %v4612, 1
      %v4615 = vor.u32 %v4610, %v4614
      %v4617 = vshll.u32 %v4494, 16
      %v4619 = vrot.slane %v4617, 1
      %v4620 = vsel %vm392, %v4615, %v4619
      %v4622 = vshrl.u32 %v4431, 16
      %v4624 = vshll.u32 %v4431, 16
      %v4626 = vrot.slane %v4624, 1
      %v4627 = vor.u32 %v4622, %v4626
      %v4629 = vshll.u32 %v4495, 16
      %v4631 = vrot.slane %v4629, 1
      %v4632 = vsel %vm392, %v4627, %v4631
      %v4634 = vshrl.u32 %v4432, 16
      %v4636 = vshll.u32 %v4432, 16
      %v4638 = vrot.slane %v4636, 1
      %v4639 = vor.u32 %v4634, %v4638
      %v4641 = vshll.u32 %v4496, 16
      %v4643 = vrot.slane %v4641, 1
      %v4644 = vsel %vm392, %v4639, %v4643
      %v4646 = vshrl.u32 %v4433, 16
      %v4648 = vshll.u32 %v4433, 16
      %v4650 = vrot.slane %v4648, 1
      %v4651 = vor.u32 %v4646, %v4650
      %v4653 = vshll.u32 %v4497, 16
      %v4655 = vrot.slane %v4653, 1
      %v4656 = vsel %vm392, %v4651, %v4655
      %v4658 = vshrl.u32 %v4434, 16
      %v4660 = vshll.u32 %v4434, 16
      %v4662 = vrot.slane %v4660, 1
      %v4663 = vor.u32 %v4658, %v4662
      %v4665 = vshll.u32 %v4498, 16
      %v4667 = vrot.slane %v4665, 1
      %v4668 = vsel %vm392, %v4663, %v4667
      %v4670 = vshrl.u32 %v4435, 16
      %v4672 = vshll.u32 %v4435, 16
      %v4674 = vrot.slane %v4672, 1
      %v4675 = vor.u32 %v4670, %v4674
      %v4677 = vshll.u32 %v4499, 16
      %v4679 = vrot.slane %v4677, 1
      %v4680 = vsel %vm392, %v4675, %v4679
      %v4682 = vshrl.u32 %v4436, 16
      %v4684 = vshll.u32 %v4436, 16
      %v4686 = vrot.slane %v4684, 1
      %v4687 = vor.u32 %v4682, %v4686
      %v4689 = vshll.u32 %v4500, 16
      %v4691 = vrot.slane %v4689, 1
      %v4692 = vsel %vm392, %v4687, %v4691
      %v4725 = vunpack.c.l.b16 %v3413
      %v4726 = vunpack.c.l.b16 %v3414
      %v4727 = vunpack.c.l.b16 %v3415
      %v4728 = vunpack.c.l.b16 %v3416
      %v4729 = vunpack.c.l.b16 %v3417
      %v4730 = vunpack.c.l.b16 %v3418
      %v4731 = vunpack.c.l.b16 %v3419
      %v4732 = vunpack.c.l.b16 %v3420
      %v4733 = vunpack.c.l.b16 %v3421
      %v4734 = vunpack.c.l.b16 %v3422
      %v4735 = vunpack.c.l.b16 %v3423
      %v4736 = vunpack.c.l.b16 %v3424
      %v4737 = vunpack.c.l.b16 %v3425
      %v4738 = vunpack.c.l.b16 %v3426
      %v4739 = vunpack.c.l.b16 %v3427
      %v4740 = vunpack.c.l.b16 %v3428
      %v4741 = vpack.c.b16 %v4390, %v4725
      %v4742 = vpack.c.b16 %v4392, %v4726
      %v4743 = vpack.c.b16 %v4394, %v4727
      %v4744 = vpack.c.b16 %v4396, %v4728
      %v4745 = vpack.c.b16 %v4398, %v4729
      %v4746 = vpack.c.b16 %v4400, %v4730
      %v4747 = vpack.c.b16 %v4402, %v4731
      %v4748 = vpack.c.b16 %v4404, %v4732
      %v4749 = vpack.c.b16 %v4406, %v4733
      %v4750 = vpack.c.b16 %v4408, %v4734
      %v4751 = vpack.c.b16 %v4410, %v4735
      %v4752 = vpack.c.b16 %v4412, %v4736
      %v4753 = vpack.c.b16 %v4414, %v4737
      %v4754 = vpack.c.b16 %v4416, %v4738
      %v4755 = vpack.c.b16 %v4418, %v4739
      %v4756 = vpack.c.b16 %v4420, %v4740
      %v4757 = vrot.slane %v4741, 1
      %v4758 = vrot.slane %v4485, 1
      %v4759 = vsel %vm617, %v4757, %v4758
      %v4760 = vrot.slane %v4742, 1
      %v4761 = vrot.slane %v4486, 1
      %v4762 = vsel %vm617, %v4760, %v4761
      %v4763 = vrot.slane %v4743, 1
      %v4764 = vrot.slane %v4487, 1
      %v4765 = vsel %vm617, %v4763, %v4764
      %v4766 = vrot.slane %v4744, 1
      %v4767 = vrot.slane %v4488, 1
      %v4768 = vsel %vm617, %v4766, %v4767
      %v4769 = vrot.slane %v4745, 1
      %v4770 = vrot.slane %v4489, 1
      %v4771 = vsel %vm617, %v4769, %v4770
      %v4772 = vrot.slane %v4746, 1
      %v4773 = vrot.slane %v4490, 1
      %v4774 = vsel %vm617, %v4772, %v4773
      %v4775 = vrot.slane %v4747, 1
      %v4776 = vrot.slane %v4491, 1
      %v4777 = vsel %vm617, %v4775, %v4776
      %v4778 = vrot.slane %v4748, 1
      %v4779 = vrot.slane %v4492, 1
      %v4780 = vsel %vm617, %v4778, %v4779
      %v4781 = vrot.slane %v4749, 1
      %v4782 = vrot.slane %v4493, 1
      %v4783 = vsel %vm617, %v4781, %v4782
      %v4784 = vrot.slane %v4750, 1
      %v4785 = vrot.slane %v4494, 1
      %v4786 = vsel %vm617, %v4784, %v4785
      %v4787 = vrot.slane %v4751, 1
      %v4788 = vrot.slane %v4495, 1
      %v4789 = vsel %vm617, %v4787, %v4788
      %v4790 = vrot.slane %v4752, 1
      %v4791 = vrot.slane %v4496, 1
      %v4792 = vsel %vm617, %v4790, %v4791
      %v4793 = vrot.slane %v4753, 1
      %v4794 = vrot.slane %v4497, 1
      %v4795 = vsel %vm617, %v4793, %v4794
      %v4796 = vrot.slane %v4754, 1
      %v4797 = vrot.slane %v4498, 1
      %v4798 = vsel %vm617, %v4796, %v4797
      %v4799 = vrot.slane %v4755, 1
      %v4800 = vrot.slane %v4499, 1
      %v4801 = vsel %vm617, %v4799, %v4800
      %v4802 = vrot.slane %v4756, 1
      %v4803 = vrot.slane %v4500, 1
      %v4804 = vsel %vm617, %v4802, %v4803
      %v4821 = vld [vmem:[%s2] sm:$0xf]
      %v4822 = vld [vmem:[%s2 + $0x4] sm:$0xf]
      %v4823 = vld [vmem:[%s2 + $0x8] sm:$0xf]
      %v4824 = vld [vmem:[%s2 + $0xc] sm:$0xf]
      %v4825 = vld [vmem:[%s2 + $0x10] sm:$0xf]
      %v4826 = vld [vmem:[%s2 + $0x14] sm:$0xf]
      %v4827 = vld [vmem:[%s2 + $0x18] sm:$0xf]
      %v4828 = vld [vmem:[%s2 + $0x1c] sm:$0xf]
      %v4829 = vld [vmem:[%s2 + $0x20] sm:$0xf]
      %v4830 = vld [vmem:[%s2 + $0x24] sm:$0xf]
      %v4831 = vld [vmem:[%s2 + $0x28] sm:$0xf]
      %v4832 = vld [vmem:[%s2 + $0x2c] sm:$0xf]
      %v4833 = vld [vmem:[%s2 + $0x30] sm:$0xf]
      %v4834 = vld [vmem:[%s2 + $0x34] sm:$0xf]
      %v4835 = vld [vmem:[%s2 + $0x38] sm:$0xf]
      %v4836 = vld [vmem:[%s2 + $0x3c] sm:$0xf]
      %v4837 = vld [vmem:[%s2 + $0x40] sm:$0xf]
      %v4838 = vld [vmem:[%s2 + $0x44] sm:$0xf]
      %v4839 = vld [vmem:[%s2 + $0x48] sm:$0xf]
      %v4840 = vld [vmem:[%s2 + $0x4c] sm:$0xf]
      %v4841 = vld [vmem:[%s2 + $0x50] sm:$0xf]
      %v4842 = vld [vmem:[%s2 + $0x54] sm:$0xf]
      %v4843 = vld [vmem:[%s2 + $0x58] sm:$0xf]
      %v4844 = vld [vmem:[%s2 + $0x5c] sm:$0xf]
      %v4845 = vld [vmem:[%s2 + $0x60] sm:$0xf]
      %v4846 = vld [vmem:[%s2 + $0x64] sm:$0xf]
      %v4847 = vld [vmem:[%s2 + $0x68] sm:$0xf]
      %v4848 = vld [vmem:[%s2 + $0x6c] sm:$0xf]
      %v4849 = vld [vmem:[%s2 + $0x70] sm:$0xf]
      %v4850 = vld [vmem:[%s2 + $0x74] sm:$0xf]
      %v4851 = vld [vmem:[%s2 + $0x78] sm:$0xf]
      %v4852 = vld [vmem:[%s2 + $0x7c] sm:$0xf]
      %v4853 = vld [vmem:[%s2 + $0x80] sm:$0xf]
      %v4854 = vld [vmem:[%s2 + $0x84] sm:$0xf]
      %v4855 = vld [vmem:[%s2 + $0x88] sm:$0xf]
      %v4856 = vld [vmem:[%s2 + $0x8c] sm:$0xf]
      %v4857 = vld [vmem:[%s2 + $0x90] sm:$0xf]
      %v4858 = vld [vmem:[%s2 + $0x94] sm:$0xf]
      %v4859 = vld [vmem:[%s2 + $0x98] sm:$0xf]
      %v4860 = vld [vmem:[%s2 + $0x9c] sm:$0xf]
      %v4861 = vld [vmem:[%s2 + $0xa0] sm:$0xf]
      %v4862 = vld [vmem:[%s2 + $0xa4] sm:$0xf]
      %v4863 = vld [vmem:[%s2 + $0xa8] sm:$0xf]
      %v4864 = vld [vmem:[%s2 + $0xac] sm:$0xf]
      %v4865 = vld [vmem:[%s2 + $0xb0] sm:$0xf]
      %v4866 = vld [vmem:[%s2 + $0xb4] sm:$0xf]
      %v4867 = vld [vmem:[%s2 + $0xb8] sm:$0xf]
      %v4868 = vld [vmem:[%s2 + $0xbc] sm:$0xf]
      %v4869 = vld [vmem:[%s2 + $0xc0] sm:$0xf]
      %v4870 = vld [vmem:[%s2 + $0xc4] sm:$0xf]
      %v4871 = vld [vmem:[%s2 + $0xc8] sm:$0xf]
      %v4872 = vld [vmem:[%s2 + $0xcc] sm:$0xf]
      %v4873 = vld [vmem:[%s2 + $0xd0] sm:$0xf]
      %v4874 = vld [vmem:[%s2 + $0xd4] sm:$0xf]
      %v4875 = vld [vmem:[%s2 + $0xd8] sm:$0xf]
      %v4876 = vld [vmem:[%s2 + $0xdc] sm:$0xf]
      %v4877 = vld [vmem:[%s2 + $0xe0] sm:$0xf]
      %v4878 = vld [vmem:[%s2 + $0xe4] sm:$0xf]
      %v4879 = vld [vmem:[%s2 + $0xe8] sm:$0xf]
      %v4880 = vld [vmem:[%s2 + $0xec] sm:$0xf]
      %v4881 = vld [vmem:[%s2 + $0xf0] sm:$0xf]
      %v4882 = vld [vmem:[%s2 + $0xf4] sm:$0xf]
      %v4883 = vld [vmem:[%s2 + $0xf8] sm:$0xf]
      %v4884 = vld [vmem:[%s2 + $0xfc] sm:$0xf]
      %v4885 = vld [vmem:[%s2 + $0x100] sm:$0xf]
      %v4886 = vld [vmem:[%s2 + $0x104] sm:$0xf]
      %v4887 = vld [vmem:[%s2 + $0x108] sm:$0xf]
      %v4888 = vld [vmem:[%s2 + $0x10c] sm:$0xf]
      %v4889 = vld [vmem:[%s2 + $0x110] sm:$0xf]
      %v4890 = vld [vmem:[%s2 + $0x114] sm:$0xf]
      %v4891 = vld [vmem:[%s2 + $0x118] sm:$0xf]
      %v4892 = vld [vmem:[%s2 + $0x11c] sm:$0xf]
      %v4893 = vld [vmem:[%s2 + $0x120] sm:$0xf]
      %v4894 = vld [vmem:[%s2 + $0x124] sm:$0xf]
      %v4895 = vld [vmem:[%s2 + $0x128] sm:$0xf]
      %v4896 = vld [vmem:[%s2 + $0x12c] sm:$0xf]
      %v4897 = vld [vmem:[%s2 + $0x130] sm:$0xf]
      %v4898 = vld [vmem:[%s2 + $0x134] sm:$0xf]
      %v4899 = vld [vmem:[%s2 + $0x138] sm:$0xf]
      %v4900 = vld [vmem:[%s2 + $0x13c] sm:$0xf]
      %v4901 = vld [vmem:[%s2 + $0x140] sm:$0xf]
      %v4902 = vld [vmem:[%s2 + $0x144] sm:$0xf]
      %v4903 = vld [vmem:[%s2 + $0x148] sm:$0xf]
      %v4904 = vld [vmem:[%s2 + $0x14c] sm:$0xf]
      %v4905 = vld [vmem:[%s2 + $0x150] sm:$0xf]
      %v4906 = vld [vmem:[%s2 + $0x154] sm:$0xf]
      %v4907 = vld [vmem:[%s2 + $0x158] sm:$0xf]
      %v4908 = vld [vmem:[%s2 + $0x15c] sm:$0xf]
      %v4909 = vld [vmem:[%s2 + $0x160] sm:$0xf]
      %v4910 = vld [vmem:[%s2 + $0x164] sm:$0xf]
      %v4911 = vld [vmem:[%s2 + $0x168] sm:$0xf]
      %v4912 = vld [vmem:[%s2 + $0x16c] sm:$0xf]
      %v4913 = vld [vmem:[%s2 + $0x170] sm:$0xf]
      %v4914 = vld [vmem:[%s2 + $0x174] sm:$0xf]
      %v4915 = vld [vmem:[%s2 + $0x178] sm:$0xf]
      %v4916 = vld [vmem:[%s2 + $0x17c] sm:$0xf]
      %v4917 = vld [vmem:[%s2 + $0x180] sm:$0xf]
      %v4918 = vld [vmem:[%s2 + $0x184] sm:$0xf]
      %v4919 = vld [vmem:[%s2 + $0x188] sm:$0xf]
      %v4920 = vld [vmem:[%s2 + $0x18c] sm:$0xf]
      %v4921 = vld [vmem:[%s2 + $0x190] sm:$0xf]
      %v4922 = vld [vmem:[%s2 + $0x194] sm:$0xf]
      %v4923 = vld [vmem:[%s2 + $0x198] sm:$0xf]
      %v4924 = vld [vmem:[%s2 + $0x19c] sm:$0xf]
      %v4925 = vld [vmem:[%s2 + $0x1a0] sm:$0xf]
      %v4926 = vld [vmem:[%s2 + $0x1a4] sm:$0xf]
      %v4927 = vld [vmem:[%s2 + $0x1a8] sm:$0xf]
      %v4928 = vld [vmem:[%s2 + $0x1ac] sm:$0xf]
      %v4929 = vld [vmem:[%s2 + $0x1b0] sm:$0xf]
      %v4930 = vld [vmem:[%s2 + $0x1b4] sm:$0xf]
      %v4931 = vld [vmem:[%s2 + $0x1b8] sm:$0xf]
      %v4932 = vld [vmem:[%s2 + $0x1bc] sm:$0xf]
      %v4933 = vld [vmem:[%s2 + $0x1c0] sm:$0xf]
      %v4934 = vld [vmem:[%s2 + $0x1c4] sm:$0xf]
      %v4935 = vld [vmem:[%s2 + $0x1c8] sm:$0xf]
      %v4936 = vld [vmem:[%s2 + $0x1cc] sm:$0xf]
      %v4937 = vld [vmem:[%s2 + $0x1d0] sm:$0xf]
      %v4938 = vld [vmem:[%s2 + $0x1d4] sm:$0xf]
      %v4939 = vld [vmem:[%s2 + $0x1d8] sm:$0xf]
      %v4940 = vld [vmem:[%s2 + $0x1dc] sm:$0xf]
      %v4941 = vld [vmem:[%s2 + $0x1e0] sm:$0xf]
      %v4942 = vld [vmem:[%s2 + $0x1e4] sm:$0xf]
      %v4943 = vld [vmem:[%s2 + $0x1e8] sm:$0xf]
      %v4944 = vld [vmem:[%s2 + $0x1ec] sm:$0xf]
      %v4945 = vld [vmem:[%s2 + $0x1f0] sm:$0xf]
      %v4946 = vld [vmem:[%s2 + $0x1f4] sm:$0xf]
      %v4947 = vld [vmem:[%s2 + $0x1f8] sm:$0xf]
      %v4948 = vld [vmem:[%s2 + $0x1fc] sm:$0xf]
      %v4949 = vld [vmem:[%s2 + $0x200] sm:$0xf]
      %v4950 = vld [vmem:[%s2 + $0x204] sm:$0xf]
      %v4951 = vld [vmem:[%s2 + $0x208] sm:$0xf]
      %v4952 = vld [vmem:[%s2 + $0x20c] sm:$0xf]
      %v4953 = vld [vmem:[%s2 + $0x210] sm:$0xf]
      %v4954 = vld [vmem:[%s2 + $0x214] sm:$0xf]
      %v4955 = vld [vmem:[%s2 + $0x218] sm:$0xf]
      %v4956 = vld [vmem:[%s2 + $0x21c] sm:$0xf]
      %v4957 = vld [vmem:[%s2 + $0x220] sm:$0xf]
      %v4958 = vld [vmem:[%s2 + $0x224] sm:$0xf]
      %v4959 = vld [vmem:[%s2 + $0x228] sm:$0xf]
      %v4960 = vld [vmem:[%s2 + $0x22c] sm:$0xf]
      %v4961 = vld [vmem:[%s2 + $0x230] sm:$0xf]
      %v4962 = vld [vmem:[%s2 + $0x234] sm:$0xf]
      %v4963 = vld [vmem:[%s2 + $0x238] sm:$0xf]
      %v4964 = vld [vmem:[%s2 + $0x23c] sm:$0xf]
      %v5109 = vunpack.c.l.b16 %v4821
      %v5110 = vunpack.c.l.b16 %v4822
      %v5111 = vunpack.c.l.b16 %v4823
      %v5112 = vunpack.c.l.b16 %v4824
      %v5113 = vunpack.c.l.b16 %v4825
      %v5114 = vunpack.c.l.b16 %v4826
      %v5115 = vunpack.c.l.b16 %v4827
      %v5116 = vunpack.c.l.b16 %v4828
      %v5117 = vunpack.c.l.b16 %v4829
      %v5118 = vunpack.c.l.b16 %v4830
      %v5119 = vunpack.c.l.b16 %v4831
      %v5120 = vunpack.c.l.b16 %v4832
      %v5121 = vunpack.c.l.b16 %v4833
      %v5122 = vunpack.c.l.b16 %v4834
      %v5123 = vunpack.c.l.b16 %v4835
      %v5124 = vunpack.c.l.b16 %v4836
      %v5125 = vunpack.c.l.b16 %v4837
      %v5126 = vunpack.c.l.b16 %v4838
      %v5127 = vunpack.c.l.b16 %v4839
      %v5128 = vunpack.c.l.b16 %v4840
      %v5129 = vunpack.c.l.b16 %v4841
      %v5130 = vunpack.c.l.b16 %v4842
      %v5131 = vunpack.c.l.b16 %v4843
      %v5132 = vunpack.c.l.b16 %v4844
      %v5133 = vunpack.c.l.b16 %v4845
      %v5134 = vunpack.c.l.b16 %v4846
      %v5135 = vunpack.c.l.b16 %v4847
      %v5136 = vunpack.c.l.b16 %v4848
      %v5137 = vunpack.c.l.b16 %v4849
      %v5138 = vunpack.c.l.b16 %v4850
      %v5139 = vunpack.c.l.b16 %v4851
      %v5140 = vunpack.c.l.b16 %v4852
      %v5141 = vunpack.c.l.b16 %v4853
      %v5142 = vunpack.c.l.b16 %v4854
      %v5143 = vunpack.c.l.b16 %v4855
      %v5144 = vunpack.c.l.b16 %v4856
      %v5145 = vunpack.c.l.b16 %v4857
      %v5146 = vunpack.c.l.b16 %v4858
      %v5147 = vunpack.c.l.b16 %v4859
      %v5148 = vunpack.c.l.b16 %v4860
      %v5149 = vunpack.c.l.b16 %v4861
      %v5150 = vunpack.c.l.b16 %v4862
      %v5151 = vunpack.c.l.b16 %v4863
      %v5152 = vunpack.c.l.b16 %v4864
      %v5153 = vunpack.c.l.b16 %v4865
      %v5154 = vunpack.c.l.b16 %v4866
      %v5155 = vunpack.c.l.b16 %v4867
      %v5156 = vunpack.c.l.b16 %v4868
      %v5157 = vunpack.c.l.b16 %v4869
      %v5158 = vunpack.c.l.b16 %v4870
      %v5159 = vunpack.c.l.b16 %v4871
      %v5160 = vunpack.c.l.b16 %v4872
      %v5161 = vunpack.c.l.b16 %v4873
      %v5162 = vunpack.c.l.b16 %v4874
      %v5163 = vunpack.c.l.b16 %v4875
      %v5164 = vunpack.c.l.b16 %v4876
      %v5165 = vunpack.c.l.b16 %v4877
      %v5166 = vunpack.c.l.b16 %v4878
      %v5167 = vunpack.c.l.b16 %v4879
      %v5168 = vunpack.c.l.b16 %v4880
      %v5169 = vunpack.c.l.b16 %v4881
      %v5170 = vunpack.c.l.b16 %v4882
      %v5171 = vunpack.c.l.b16 %v4883
      %v5172 = vunpack.c.l.b16 %v4884
      %v5173 = vunpack.c.l.b16 %v4885
      %v5174 = vunpack.c.l.b16 %v4886
      %v5175 = vunpack.c.l.b16 %v4887
      %v5176 = vunpack.c.l.b16 %v4888
      %v5177 = vunpack.c.l.b16 %v4889
      %v5178 = vunpack.c.l.b16 %v4890
      %v5179 = vunpack.c.l.b16 %v4891
      %v5180 = vunpack.c.l.b16 %v4892
      %v5181 = vunpack.c.l.b16 %v4893
      %v5182 = vunpack.c.l.b16 %v4894
      %v5183 = vunpack.c.l.b16 %v4895
      %v5184 = vunpack.c.l.b16 %v4896
      %v5185 = vunpack.c.l.b16 %v4897
      %v5186 = vunpack.c.l.b16 %v4898
      %v5187 = vunpack.c.l.b16 %v4899
      %v5188 = vunpack.c.l.b16 %v4900
      %v5189 = vunpack.c.l.b16 %v4901
      %v5190 = vunpack.c.l.b16 %v4902
      %v5191 = vunpack.c.l.b16 %v4903
      %v5192 = vunpack.c.l.b16 %v4904
      %v5193 = vunpack.c.l.b16 %v4905
      %v5194 = vunpack.c.l.b16 %v4906
      %v5195 = vunpack.c.l.b16 %v4907
      %v5196 = vunpack.c.l.b16 %v4908
      %v5197 = vunpack.c.l.b16 %v4909
      %v5198 = vunpack.c.l.b16 %v4910
      %v5199 = vunpack.c.l.b16 %v4911
      %v5200 = vunpack.c.l.b16 %v4912
      %v5201 = vunpack.c.l.b16 %v4913
      %v5202 = vunpack.c.l.b16 %v4914
      %v5203 = vunpack.c.l.b16 %v4915
      %v5204 = vunpack.c.l.b16 %v4916
      %v5205 = vunpack.c.l.b16 %v4917
      %v5206 = vunpack.c.l.b16 %v4918
      %v5207 = vunpack.c.l.b16 %v4919
      %v5208 = vunpack.c.l.b16 %v4920
      %v5209 = vunpack.c.l.b16 %v4921
      %v5210 = vunpack.c.l.b16 %v4922
      %v5211 = vunpack.c.l.b16 %v4923
      %v5212 = vunpack.c.l.b16 %v4924
      %v5213 = vunpack.c.l.b16 %v4925
      %v5214 = vunpack.c.l.b16 %v4926
      %v5215 = vunpack.c.l.b16 %v4927
      %v5216 = vunpack.c.l.b16 %v4928
      %v5217 = vunpack.c.l.b16 %v4929
      %v5218 = vunpack.c.l.b16 %v4930
      %v5219 = vunpack.c.l.b16 %v4931
      %v5220 = vunpack.c.l.b16 %v4932
      %v5221 = vunpack.c.l.b16 %v4933
      %v5222 = vunpack.c.l.b16 %v4934
      %v5223 = vunpack.c.l.b16 %v4935
      %v5224 = vunpack.c.l.b16 %v4936
      %v5225 = vunpack.c.l.b16 %v4937
      %v5226 = vunpack.c.l.b16 %v4938
      %v5227 = vunpack.c.l.b16 %v4939
      %v5228 = vunpack.c.l.b16 %v4940
      %v5229 = vunpack.c.l.b16 %v4941
      %v5230 = vunpack.c.l.b16 %v4942
      %v5231 = vunpack.c.l.b16 %v4943
      %v5232 = vunpack.c.l.b16 %v4944
      %v5233 = vunpack.c.l.b16 %v4945
      %v5234 = vunpack.c.l.b16 %v4946
      %v5235 = vunpack.c.l.b16 %v4947
      %v5236 = vunpack.c.l.b16 %v4948
      %v5237 = vunpack.c.l.b16 %v4949
      %v5238 = vunpack.c.l.b16 %v4950
      %v5239 = vunpack.c.l.b16 %v4951
      %v5240 = vunpack.c.l.b16 %v4952
      %v5241 = vunpack.c.l.b16 %v4953
      %v5242 = vunpack.c.l.b16 %v4954
      %v5243 = vunpack.c.l.b16 %v4955
      %v5244 = vunpack.c.l.b16 %v4956
      %v5245 = vunpack.c.l.b16 %v4957
      %v5246 = vunpack.c.l.b16 %v4958
      %v5247 = vunpack.c.l.b16 %v4959
      %v5248 = vunpack.c.l.b16 %v4960
      %v5249 = vunpack.c.l.b16 %v4961
      %v5250 = vunpack.c.l.b16 %v4962
      %v5251 = vunpack.c.l.b16 %v4963
      %v5252 = vunpack.c.l.b16 %v4964
      %v5253 = vpack.c.b16 %v5110, %v5109
      %v5254 = vpack.c.b16 %v5112, %v5111
      %v5255 = vpack.c.b16 %v5114, %v5113
      %v5256 = vpack.c.b16 %v5116, %v5115
      %v5257 = vpack.c.b16 %v5118, %v5117
      %v5258 = vpack.c.b16 %v5120, %v5119
      %v5259 = vpack.c.b16 %v5122, %v5121
      %v5260 = vpack.c.b16 %v5124, %v5123
      %v5261 = vpack.c.b16 %v5126, %v5125
      %v5262 = vpack.c.b16 %v5128, %v5127
      %v5263 = vpack.c.b16 %v5130, %v5129
      %v5264 = vpack.c.b16 %v5132, %v5131
      %v5265 = vpack.c.b16 %v5134, %v5133
      %v5266 = vpack.c.b16 %v5136, %v5135
      %v5267 = vpack.c.b16 %v5138, %v5137
      %v5268 = vpack.c.b16 %v5140, %v5139
      %v5269 = vpack.c.b16 %v5142, %v5141
      %v5270 = vpack.c.b16 %v5144, %v5143
      %v5271 = vpack.c.b16 %v5146, %v5145
      %v5272 = vpack.c.b16 %v5148, %v5147
      %v5273 = vpack.c.b16 %v5150, %v5149
      %v5274 = vpack.c.b16 %v5152, %v5151
      %v5275 = vpack.c.b16 %v5154, %v5153
      %v5276 = vpack.c.b16 %v5156, %v5155
      %v5277 = vpack.c.b16 %v5158, %v5157
      %v5278 = vpack.c.b16 %v5160, %v5159
      %v5279 = vpack.c.b16 %v5162, %v5161
      %v5280 = vpack.c.b16 %v5164, %v5163
      %v5281 = vpack.c.b16 %v5166, %v5165
      %v5282 = vpack.c.b16 %v5168, %v5167
      %v5283 = vpack.c.b16 %v5170, %v5169
      %v5284 = vpack.c.b16 %v5172, %v5171
      %v5285 = vpack.c.b16 %v5174, %v5173
      %v5286 = vpack.c.b16 %v5176, %v5175
      %v5287 = vpack.c.b16 %v5178, %v5177
      %v5288 = vpack.c.b16 %v5180, %v5179
      %v5289 = vpack.c.b16 %v5182, %v5181
      %v5290 = vpack.c.b16 %v5184, %v5183
      %v5291 = vpack.c.b16 %v5186, %v5185
      %v5292 = vpack.c.b16 %v5188, %v5187
      %v5293 = vpack.c.b16 %v5190, %v5189
      %v5294 = vpack.c.b16 %v5192, %v5191
      %v5295 = vpack.c.b16 %v5194, %v5193
      %v5296 = vpack.c.b16 %v5196, %v5195
      %v5297 = vpack.c.b16 %v5198, %v5197
      %v5298 = vpack.c.b16 %v5200, %v5199
      %v5299 = vpack.c.b16 %v5202, %v5201
      %v5300 = vpack.c.b16 %v5204, %v5203
      %v5301 = vpack.c.b16 %v5206, %v5205
      %v5302 = vpack.c.b16 %v5208, %v5207
      %v5303 = vpack.c.b16 %v5210, %v5209
      %v5304 = vpack.c.b16 %v5212, %v5211
      %v5305 = vpack.c.b16 %v5214, %v5213
      %v5306 = vpack.c.b16 %v5216, %v5215
      %v5307 = vpack.c.b16 %v5218, %v5217
      %v5308 = vpack.c.b16 %v5220, %v5219
      %v5309 = vpack.c.b16 %v5222, %v5221
      %v5310 = vpack.c.b16 %v5224, %v5223
      %v5311 = vpack.c.b16 %v5226, %v5225
      %v5312 = vpack.c.b16 %v5228, %v5227
      %v5313 = vpack.c.b16 %v5230, %v5229
      %v5314 = vpack.c.b16 %v5232, %v5231
      %v5315 = vpack.c.b16 %v5234, %v5233
      %v5316 = vpack.c.b16 %v5236, %v5235
      %v5317 = vpack.c.b16 %v5238, %v5237
      %v5318 = vpack.c.b16 %v5240, %v5239
      %v5319 = vpack.c.b16 %v5242, %v5241
      %v5320 = vpack.c.b16 %v5244, %v5243
      %v5321 = vpack.c.b16 %v5246, %v5245
      %v5322 = vpack.c.b16 %v5248, %v5247
      %v5323 = vpack.c.b16 %v5250, %v5249
      %v5324 = vpack.c.b16 %v5252, %v5251
      %5397 = vmatprep.subr.bf16.mxu0 0
      %5398 = vmatpush1.bf16.msra.mxu0 %v5260
      %5399 = vmatprep.subr.bf16.mxu0 0
      %5400 = vmatpush1.bf16.msra.mxu0 %v5259
      %5401 = vmatprep.subr.bf16.mxu0 0
      %5402 = vmatpush1.bf16.msra.mxu0 %v5258
      %5403 = vmatprep.subr.bf16.mxu0 0
      %5404 = vmatpush1.bf16.msra.mxu0 %v5257
      %5405 = vmatprep.subr.bf16.mxu0 0
      %5406 = vmatpush1.bf16.msra.mxu0 %v5256
      %5407 = vmatprep.subr.bf16.mxu0 0
      %5408 = vmatpush1.bf16.msra.mxu0 %v5255
      %5409 = vmatprep.subr.bf16.mxu0 0
      %5410 = vmatpush1.bf16.msra.mxu0 %v5254
      %5411 = vmatprep.subr.bf16.mxu0 0
      %5412 = vmatpush1.bf16.msra.mxu0 %v5253
      %5413 = vmatprep.subr.bf16.mxu0 0
      %5414 = vmatpush2.bf16.msra.mxu0 %v5268
      %5415 = vmatprep.subr.bf16.mxu0 0
      %5416 = vmatpush2.bf16.msra.mxu0 %v5267
      %5417 = vmatprep.subr.bf16.mxu0 0
      %5418 = vmatpush2.bf16.msra.mxu0 %v5266
      %5419 = vmatprep.subr.bf16.mxu0 0
      %5420 = vmatpush2.bf16.msra.mxu0 %v5265
      %5421 = vmatprep.subr.bf16.mxu0 0
      %5422 = vmatpush2.bf16.msra.mxu0 %v5264
      %5423 = vmatprep.subr.bf16.mxu0 0
      %5424 = vmatpush2.bf16.msra.mxu0 %v5263
      %5425 = vmatprep.subr.bf16.mxu0 0
      %5426 = vmatpush2.bf16.msra.mxu0 %v5262
      %5427 = vmatprep.subr.bf16.mxu0 0
      %5428 = vmatpush2.bf16.msra.mxu0 %v5261
      %5429 = vmatprep.mubr.bf16.mxu0 %v3584
      %5430 = vmatmul.mubr.bf16.gmra.mxu0 %v3493
      %v5431 = vpop.f32.mrf.mxu0
      %v5432 = vadd.f32 0.0, %v5431
      %v5433 = vpop.f32.mrf.mxu0
      %v5434 = vpop.f32.mrf.mxu0
      %v5435 = vadd.f32 0.0, %v5434
      %v5436 = vpop.f32.mrf.mxu0
      %5437 = vmatprep.mubr.bf16.mxu0 %v3596
      %5438 = vmatmul.mubr.bf16.gmra.mxu0 %v3494
      %v5439 = vpop.f32.mrf.mxu0
      %v5440 = vadd.f32 0.0, %v5439
      %v5441 = vpop.f32.mrf.mxu0
      %v5442 = vpop.f32.mrf.mxu0
      %v5443 = vadd.f32 0.0, %v5442
      %v5444 = vpop.f32.mrf.mxu0
      %5445 = vmatprep.mubr.bf16.mxu0 %v3608
      %5446 = vmatmul.mubr.bf16.gmra.mxu0 %v3495
      %v5447 = vpop.f32.mrf.mxu0
      %v5448 = vadd.f32 0.0, %v5447
      %v5449 = vpop.f32.mrf.mxu0
      %v5450 = vpop.f32.mrf.mxu0
      %v5451 = vadd.f32 0.0, %v5450
      %v5452 = vpop.f32.mrf.mxu0
      %5453 = vmatprep.mubr.bf16.mxu0 %v3620
      %5454 = vmatmul.mubr.bf16.gmra.mxu0 %v3496
      %v5455 = vpop.f32.mrf.mxu0
      %v5456 = vadd.f32 0.0, %v5455
      %v5457 = vpop.f32.mrf.mxu0
      %v5458 = vpop.f32.mrf.mxu0
      %v5459 = vadd.f32 0.0, %v5458
      %v5460 = vpop.f32.mrf.mxu0
      %5461 = vmatprep.mubr.bf16.mxu0 %v3632
      %5462 = vmatmul.mubr.bf16.gmra.mxu0 %v3497
      %v5463 = vpop.f32.mrf.mxu0
      %v5464 = vadd.f32 0.0, %v5463
      %v5465 = vpop.f32.mrf.mxu0
      %v5466 = vpop.f32.mrf.mxu0
      %v5467 = vadd.f32 0.0, %v5466
      %v5468 = vpop.f32.mrf.mxu0
      %5469 = vmatprep.mubr.bf16.mxu0 %v3644
      %5470 = vmatmul.mubr.bf16.gmra.mxu0 %v3498
      %v5471 = vpop.f32.mrf.mxu0
      %v5472 = vadd.f32 0.0, %v5471
      %v5473 = vpop.f32.mrf.mxu0
      %v5474 = vpop.f32.mrf.mxu0
      %v5475 = vadd.f32 0.0, %v5474
      %v5476 = vpop.f32.mrf.mxu0
      %5477 = vmatprep.mubr.bf16.mxu0 %v3656
      %5478 = vmatmul.mubr.bf16.gmra.mxu0 %v3499
      %v5479 = vpop.f32.mrf.mxu0
      %v5480 = vadd.f32 0.0, %v5479
      %v5481 = vpop.f32.mrf.mxu0
      %v5482 = vpop.f32.mrf.mxu0
      %v5483 = vadd.f32 0.0, %v5482
      %v5484 = vpop.f32.mrf.mxu0
      %5485 = vmatprep.mubr.bf16.mxu0 %v3668
      %5486 = vmatmul.mubr.bf16.gmra.mxu0 %v3500
      %v5487 = vpop.f32.mrf.mxu0
      %v5488 = vadd.f32 0.0, %v5487
      %v5489 = vpop.f32.mrf.mxu0
      %v5490 = vpop.f32.mrf.mxu0
      %v5491 = vadd.f32 0.0, %v5490
      %v5492 = vpop.f32.mrf.mxu0
      %5493 = vmatprep.mubr.bf16.mxu0 %v3680
      %5494 = vmatmul.mubr.bf16.gmra.mxu0 %v3501
      %v5495 = vpop.f32.mrf.mxu0
      %v5496 = vadd.f32 0.0, %v5495
      %v5497 = vpop.f32.mrf.mxu0
      %v5498 = vpop.f32.mrf.mxu0
      %v5499 = vadd.f32 0.0, %v5498
      %v5500 = vpop.f32.mrf.mxu0
      %5501 = vmatprep.mubr.bf16.mxu0 %v3692
      %5502 = vmatmul.mubr.bf16.gmra.mxu0 %v3502
      %v5503 = vpop.f32.mrf.mxu0
      %v5504 = vadd.f32 0.0, %v5503
      %v5505 = vpop.f32.mrf.mxu0
      %v5506 = vpop.f32.mrf.mxu0
      %v5507 = vadd.f32 0.0, %v5506
      %v5508 = vpop.f32.mrf.mxu0
      %5509 = vmatprep.mubr.bf16.mxu0 %v3704
      %5510 = vmatmul.mubr.bf16.gmra.mxu0 %v3503
      %v5511 = vpop.f32.mrf.mxu0
      %v5512 = vadd.f32 0.0, %v5511
      %v5513 = vpop.f32.mrf.mxu0
      %v5514 = vpop.f32.mrf.mxu0
      %v5515 = vadd.f32 0.0, %v5514
      %v5516 = vpop.f32.mrf.mxu0
      %5517 = vmatprep.mubr.bf16.mxu0 %v3716
      %5518 = vmatmul.mubr.bf16.gmra.mxu0 %v3504
      %v5519 = vpop.f32.mrf.mxu0
      %v5520 = vadd.f32 0.0, %v5519
      %v5521 = vpop.f32.mrf.mxu0
      %v5522 = vpop.f32.mrf.mxu0
      %v5523 = vadd.f32 0.0, %v5522
      %v5524 = vpop.f32.mrf.mxu0
      %5525 = vmatprep.mubr.bf16.mxu0 %v3728
      %5526 = vmatmul.mubr.bf16.gmra.mxu0 %v3505
      %v5527 = vpop.f32.mrf.mxu0
      %v5528 = vadd.f32 0.0, %v5527
      %v5529 = vpop.f32.mrf.mxu0
      %v5530 = vpop.f32.mrf.mxu0
      %v5531 = vadd.f32 0.0, %v5530
      %v5532 = vpop.f32.mrf.mxu0
      %5533 = vmatprep.mubr.bf16.mxu0 %v3740
      %5534 = vmatmul.mubr.bf16.gmra.mxu0 %v3506
      %v5535 = vpop.f32.mrf.mxu0
      %v5536 = vadd.f32 0.0, %v5535
      %v5537 = vpop.f32.mrf.mxu0
      %v5538 = vpop.f32.mrf.mxu0
      %v5539 = vadd.f32 0.0, %v5538
      %v5540 = vpop.f32.mrf.mxu0
      %5541 = vmatprep.mubr.bf16.mxu0 %v3752
      %5542 = vmatmul.mubr.bf16.gmra.mxu0 %v3507
      %v5543 = vpop.f32.mrf.mxu0
      %v5544 = vadd.f32 0.0, %v5543
      %v5545 = vpop.f32.mrf.mxu0
      %v5546 = vpop.f32.mrf.mxu0
      %v5547 = vadd.f32 0.0, %v5546
      %v5548 = vpop.f32.mrf.mxu0
      %5549 = vmatprep.mubr.bf16.mxu0 %v3764
      %5550 = vmatmul.mubr.bf16.gmra.mxu0 %v3508
      %v5551 = vpop.f32.mrf.mxu0
      %v5552 = vadd.f32 0.0, %v5551
      %v5553 = vpop.f32.mrf.mxu0
      %v5554 = vpop.f32.mrf.mxu0
      %v5555 = vadd.f32 0.0, %v5554
      %v5556 = vpop.f32.mrf.mxu0
      %5557 = vdwg.mxu0
      %5558 = vmatprep.subr.bf16.mxu0 0
      %5559 = vmatpush1.bf16.msra.mxu0 %v5276
      %5560 = vmatprep.subr.bf16.mxu0 0
      %5561 = vmatpush1.bf16.msra.mxu0 %v5275
      %5562 = vmatprep.subr.bf16.mxu0 0
      %5563 = vmatpush1.bf16.msra.mxu0 %v5274
      %5564 = vmatprep.subr.bf16.mxu0 0
      %5565 = vmatpush1.bf16.msra.mxu0 %v5273
      %5566 = vmatprep.subr.bf16.mxu0 0
      %5567 = vmatpush1.bf16.msra.mxu0 %v5272
      %5568 = vmatprep.subr.bf16.mxu0 0
      %5569 = vmatpush1.bf16.msra.mxu0 %v5271
      %5570 = vmatprep.subr.bf16.mxu0 0
      %5571 = vmatpush1.bf16.msra.mxu0 %v5270
      %5572 = vmatprep.subr.bf16.mxu0 0
      %5573 = vmatpush1.bf16.msra.mxu0 %v5269
      %5574 = vmatprep.subr.bf16.mxu0 0
      %5575 = vmatpush2.bf16.msra.mxu0 %v5284
      %5576 = vmatprep.subr.bf16.mxu0 0
      %5577 = vmatpush2.bf16.msra.mxu0 %v5283
      %5578 = vmatprep.subr.bf16.mxu0 0
      %5579 = vmatpush2.bf16.msra.mxu0 %v5282
      %5580 = vmatprep.subr.bf16.mxu0 0
      %5581 = vmatpush2.bf16.msra.mxu0 %v5281
      %5582 = vmatprep.subr.bf16.mxu0 0
      %5583 = vmatpush2.bf16.msra.mxu0 %v5280
      %5584 = vmatprep.subr.bf16.mxu0 0
      %5585 = vmatpush2.bf16.msra.mxu0 %v5279
      %5586 = vmatprep.subr.bf16.mxu0 0
      %5587 = vmatpush2.bf16.msra.mxu0 %v5278
      %5588 = vmatprep.subr.bf16.mxu0 0
      %5589 = vmatpush2.bf16.msra.mxu0 %v5277
      %5590 = vmatprep.mubr.bf16.mxu0 %v3957
      %5591 = vmatmul.mubr.bf16.gmra.mxu0 %v3831
      %v5592 = vpop.f32.mrf.mxu0
      %v5593 = vadd.f32 %v5432, %v5592
      %v5594 = vpop.f32.mrf.mxu0
      %v5595 = vpop.f32.mrf.mxu0
      %v5596 = vadd.f32 %v5435, %v5595
      %v5597 = vpop.f32.mrf.mxu0
      %5598 = vmatprep.mubr.bf16.mxu0 %v3958
      %5599 = vmatmul.mubr.bf16.gmra.mxu0 %v3834
      %v5600 = vpop.f32.mrf.mxu0
      %v5601 = vadd.f32 %v5440, %v5600
      %v5602 = vpop.f32.mrf.mxu0
      %v5603 = vpop.f32.mrf.mxu0
      %v5604 = vadd.f32 %v5443, %v5603
      %v5605 = vpop.f32.mrf.mxu0
      %5606 = vmatprep.mubr.bf16.mxu0 %v3959
      %5607 = vmatmul.mubr.bf16.gmra.mxu0 %v3837
      %v5608 = vpop.f32.mrf.mxu0
      %v5609 = vadd.f32 %v5448, %v5608
      %v5610 = vpop.f32.mrf.mxu0
      %v5611 = vpop.f32.mrf.mxu0
      %v5612 = vadd.f32 %v5451, %v5611
      %v5613 = vpop.f32.mrf.mxu0
      %5614 = vmatprep.mubr.bf16.mxu0 %v3960
      %5615 = vmatmul.mubr.bf16.gmra.mxu0 %v3840
      %v5616 = vpop.f32.mrf.mxu0
      %v5617 = vadd.f32 %v5456, %v5616
      %v5618 = vpop.f32.mrf.mxu0
      %v5619 = vpop.f32.mrf.mxu0
      %v5620 = vadd.f32 %v5459, %v5619
      %v5621 = vpop.f32.mrf.mxu0
      %5622 = vmatprep.mubr.bf16.mxu0 %v3961
      %5623 = vmatmul.mubr.bf16.gmra.mxu0 %v3843
      %v5624 = vpop.f32.mrf.mxu0
      %v5625 = vadd.f32 %v5464, %v5624
      %v5626 = vpop.f32.mrf.mxu0
      %v5627 = vpop.f32.mrf.mxu0
      %v5628 = vadd.f32 %v5467, %v5627
      %v5629 = vpop.f32.mrf.mxu0
      %5630 = vmatprep.mubr.bf16.mxu0 %v3962
      %5631 = vmatmul.mubr.bf16.gmra.mxu0 %v3846
      %v5632 = vpop.f32.mrf.mxu0
      %v5633 = vadd.f32 %v5472, %v5632
      %v5634 = vpop.f32.mrf.mxu0
      %v5635 = vpop.f32.mrf.mxu0
      %v5636 = vadd.f32 %v5475, %v5635
      %v5637 = vpop.f32.mrf.mxu0
      %5638 = vmatprep.mubr.bf16.mxu0 %v3963
      %5639 = vmatmul.mubr.bf16.gmra.mxu0 %v3849
      %v5640 = vpop.f32.mrf.mxu0
      %v5641 = vadd.f32 %v5480, %v5640
      %v5642 = vpop.f32.mrf.mxu0
      %v5643 = vpop.f32.mrf.mxu0
      %v5644 = vadd.f32 %v5483, %v5643
      %v5645 = vpop.f32.mrf.mxu0
      %5646 = vmatprep.mubr.bf16.mxu0 %v3964
      %5647 = vmatmul.mubr.bf16.gmra.mxu0 %v3852
      %v5648 = vpop.f32.mrf.mxu0
      %v5649 = vadd.f32 %v5488, %v5648
      %v5650 = vpop.f32.mrf.mxu0
      %v5651 = vpop.f32.mrf.mxu0
      %v5652 = vadd.f32 %v5491, %v5651
      %v5653 = vpop.f32.mrf.mxu0
      %5654 = vmatprep.mubr.bf16.mxu0 %v3965
      %5655 = vmatmul.mubr.bf16.gmra.mxu0 %v3855
      %v5656 = vpop.f32.mrf.mxu0
      %v5657 = vadd.f32 %v5496, %v5656
      %v5658 = vpop.f32.mrf.mxu0
      %v5659 = vpop.f32.mrf.mxu0
      %v5660 = vadd.f32 %v5499, %v5659
      %v5661 = vpop.f32.mrf.mxu0
      %5662 = vmatprep.mubr.bf16.mxu0 %v3966
      %5663 = vmatmul.mubr.bf16.gmra.mxu0 %v3858
      %v5664 = vpop.f32.mrf.mxu0
      %v5665 = vadd.f32 %v5504, %v5664
      %v5666 = vpop.f32.mrf.mxu0
      %v5667 = vpop.f32.mrf.mxu0
      %v5668 = vadd.f32 %v5507, %v5667
      %v5669 = vpop.f32.mrf.mxu0
      %5670 = vmatprep.mubr.bf16.mxu0 %v3967
      %5671 = vmatmul.mubr.bf16.gmra.mxu0 %v3861
      %v5672 = vpop.f32.mrf.mxu0
      %v5673 = vadd.f32 %v5512, %v5672
      %v5674 = vpop.f32.mrf.mxu0
      %v5675 = vpop.f32.mrf.mxu0
      %v5676 = vadd.f32 %v5515, %v5675
      %v5677 = vpop.f32.mrf.mxu0
      %5678 = vmatprep.mubr.bf16.mxu0 %v3968
      %5679 = vmatmul.mubr.bf16.gmra.mxu0 %v3864
      %v5680 = vpop.f32.mrf.mxu0
      %v5681 = vadd.f32 %v5520, %v5680
      %v5682 = vpop.f32.mrf.mxu0
      %v5683 = vpop.f32.mrf.mxu0
      %v5684 = vadd.f32 %v5523, %v5683
      %v5685 = vpop.f32.mrf.mxu0
      %5686 = vmatprep.mubr.bf16.mxu0 %v3969
      %5687 = vmatmul.mubr.bf16.gmra.mxu0 %v3867
      %v5688 = vpop.f32.mrf.mxu0
      %v5689 = vadd.f32 %v5528, %v5688
      %v5690 = vpop.f32.mrf.mxu0
      %v5691 = vpop.f32.mrf.mxu0
      %v5692 = vadd.f32 %v5531, %v5691
      %v5693 = vpop.f32.mrf.mxu0
      %5694 = vmatprep.mubr.bf16.mxu0 %v3970
      %5695 = vmatmul.mubr.bf16.gmra.mxu0 %v3870
      %v5696 = vpop.f32.mrf.mxu0
      %v5697 = vadd.f32 %v5536, %v5696
      %v5698 = vpop.f32.mrf.mxu0
      %v5699 = vpop.f32.mrf.mxu0
      %v5700 = vadd.f32 %v5539, %v5699
      %v5701 = vpop.f32.mrf.mxu0
      %5702 = vmatprep.mubr.bf16.mxu0 %v3971
      %5703 = vmatmul.mubr.bf16.gmra.mxu0 %v3873
      %v5704 = vpop.f32.mrf.mxu0
      %v5705 = vadd.f32 %v5544, %v5704
      %v5706 = vpop.f32.mrf.mxu0
      %v5707 = vpop.f32.mrf.mxu0
      %v5708 = vadd.f32 %v5547, %v5707
      %v5709 = vpop.f32.mrf.mxu0
      %5710 = vmatprep.mubr.bf16.mxu0 %v3972
      %5711 = vmatmul.mubr.bf16.gmra.mxu0 %v3876
      %v5712 = vpop.f32.mrf.mxu0
      %v5713 = vadd.f32 %v5552, %v5712
      %v5714 = vpop.f32.mrf.mxu0
      %v5715 = vpop.f32.mrf.mxu0
      %v5716 = vadd.f32 %v5555, %v5715
      %v5717 = vpop.f32.mrf.mxu0
      %5718 = vdwg.mxu0
      %5719 = vmatprep.subr.bf16.mxu0 0
      %5720 = vmatpush1.bf16.msra.mxu0 %v5292
      %5721 = vmatprep.subr.bf16.mxu0 0
      %5722 = vmatpush1.bf16.msra.mxu0 %v5291
      %5723 = vmatprep.subr.bf16.mxu0 0
      %5724 = vmatpush1.bf16.msra.mxu0 %v5290
      %5725 = vmatprep.subr.bf16.mxu0 0
      %5726 = vmatpush1.bf16.msra.mxu0 %v5289
      %5727 = vmatprep.subr.bf16.mxu0 0
      %5728 = vmatpush1.bf16.msra.mxu0 %v5288
      %5729 = vmatprep.subr.bf16.mxu0 0
      %5730 = vmatpush1.bf16.msra.mxu0 %v5287
      %5731 = vmatprep.subr.bf16.mxu0 0
      %5732 = vmatpush1.bf16.msra.mxu0 %v5286
      %5733 = vmatprep.subr.bf16.mxu0 0
      %5734 = vmatpush1.bf16.msra.mxu0 %v5285
      %5735 = vmatprep.subr.bf16.mxu0 0
      %5736 = vmatpush2.bf16.msra.mxu0 %v5300
      %5737 = vmatprep.subr.bf16.mxu0 0
      %5738 = vmatpush2.bf16.msra.mxu0 %v5299
      %5739 = vmatprep.subr.bf16.mxu0 0
      %5740 = vmatpush2.bf16.msra.mxu0 %v5298
      %5741 = vmatprep.subr.bf16.mxu0 0
      %5742 = vmatpush2.bf16.msra.mxu0 %v5297
      %5743 = vmatprep.subr.bf16.mxu0 0
      %5744 = vmatpush2.bf16.msra.mxu0 %v5296
      %5745 = vmatprep.subr.bf16.mxu0 0
      %5746 = vmatpush2.bf16.msra.mxu0 %v5295
      %5747 = vmatprep.subr.bf16.mxu0 0
      %5748 = vmatpush2.bf16.msra.mxu0 %v5294
      %5749 = vmatprep.subr.bf16.mxu0 0
      %5750 = vmatpush2.bf16.msra.mxu0 %v5293
      %5751 = vmatprep.mubr.bf16.mxu0 %v4295
      %5752 = vmatmul.mubr.bf16.gmra.mxu0 %v4048
      %v5753 = vpop.f32.mrf.mxu0
      %v5754 = vadd.f32 %v5593, %v5753
      %v5755 = vpop.f32.mrf.mxu0
      %v5756 = vpop.f32.mrf.mxu0
      %v5757 = vadd.f32 %v5596, %v5756
      %v5758 = vpop.f32.mrf.mxu0
      %5759 = vmatprep.mubr.bf16.mxu0 %v4298
      %5760 = vmatmul.mubr.bf16.gmra.mxu0 %v4060
      %v5761 = vpop.f32.mrf.mxu0
      %v5762 = vadd.f32 %v5601, %v5761
      %v5763 = vpop.f32.mrf.mxu0
      %v5764 = vpop.f32.mrf.mxu0
      %v5765 = vadd.f32 %v5604, %v5764
      %v5766 = vpop.f32.mrf.mxu0
      %5767 = vmatprep.mubr.bf16.mxu0 %v4301
      %5768 = vmatmul.mubr.bf16.gmra.mxu0 %v4072
      %v5769 = vpop.f32.mrf.mxu0
      %v5770 = vadd.f32 %v5609, %v5769
      %v5771 = vpop.f32.mrf.mxu0
      %v5772 = vpop.f32.mrf.mxu0
      %v5773 = vadd.f32 %v5612, %v5772
      %v5774 = vpop.f32.mrf.mxu0
      %5775 = vmatprep.mubr.bf16.mxu0 %v4304
      %5776 = vmatmul.mubr.bf16.gmra.mxu0 %v4084
      %v5777 = vpop.f32.mrf.mxu0
      %v5778 = vadd.f32 %v5617, %v5777
      %v5779 = vpop.f32.mrf.mxu0
      %v5780 = vpop.f32.mrf.mxu0
      %v5781 = vadd.f32 %v5620, %v5780
      %v5782 = vpop.f32.mrf.mxu0
      %5783 = vmatprep.mubr.bf16.mxu0 %v4307
      %5784 = vmatmul.mubr.bf16.gmra.mxu0 %v4096
      %v5785 = vpop.f32.mrf.mxu0
      %v5786 = vadd.f32 %v5625, %v5785
      %v5787 = vpop.f32.mrf.mxu0
      %v5788 = vpop.f32.mrf.mxu0
      %v5789 = vadd.f32 %v5628, %v5788
      %v5790 = vpop.f32.mrf.mxu0
      %5791 = vmatprep.mubr.bf16.mxu0 %v4310
      %5792 = vmatmul.mubr.bf16.gmra.mxu0 %v4108
      %v5793 = vpop.f32.mrf.mxu0
      %v5794 = vadd.f32 %v5633, %v5793
      %v5795 = vpop.f32.mrf.mxu0
      %v5796 = vpop.f32.mrf.mxu0
      %v5797 = vadd.f32 %v5636, %v5796
      %v5798 = vpop.f32.mrf.mxu0
      %5799 = vmatprep.mubr.bf16.mxu0 %v4313
      %5800 = vmatmul.mubr.bf16.gmra.mxu0 %v4120
      %v5801 = vpop.f32.mrf.mxu0
      %v5802 = vadd.f32 %v5641, %v5801
      %v5803 = vpop.f32.mrf.mxu0
      %v5804 = vpop.f32.mrf.mxu0
      %v5805 = vadd.f32 %v5644, %v5804
      %v5806 = vpop.f32.mrf.mxu0
      %5807 = vmatprep.mubr.bf16.mxu0 %v4316
      %5808 = vmatmul.mubr.bf16.gmra.mxu0 %v4132
      %v5809 = vpop.f32.mrf.mxu0
      %v5810 = vadd.f32 %v5649, %v5809
      %v5811 = vpop.f32.mrf.mxu0
      %v5812 = vpop.f32.mrf.mxu0
      %v5813 = vadd.f32 %v5652, %v5812
      %v5814 = vpop.f32.mrf.mxu0
      %5815 = vmatprep.mubr.bf16.mxu0 %v4319
      %5816 = vmatmul.mubr.bf16.gmra.mxu0 %v4144
      %v5817 = vpop.f32.mrf.mxu0
      %v5818 = vadd.f32 %v5657, %v5817
      %v5819 = vpop.f32.mrf.mxu0
      %v5820 = vpop.f32.mrf.mxu0
      %v5821 = vadd.f32 %v5660, %v5820
      %v5822 = vpop.f32.mrf.mxu0
      %5823 = vmatprep.mubr.bf16.mxu0 %v4322
      %5824 = vmatmul.mubr.bf16.gmra.mxu0 %v4156
      %v5825 = vpop.f32.mrf.mxu0
      %v5826 = vadd.f32 %v5665, %v5825
      %v5827 = vpop.f32.mrf.mxu0
      %v5828 = vpop.f32.mrf.mxu0
      %v5829 = vadd.f32 %v5668, %v5828
      %v5830 = vpop.f32.mrf.mxu0
      %5831 = vmatprep.mubr.bf16.mxu0 %v4325
      %5832 = vmatmul.mubr.bf16.gmra.mxu0 %v4168
      %v5833 = vpop.f32.mrf.mxu0
      %v5834 = vadd.f32 %v5673, %v5833
      %v5835 = vpop.f32.mrf.mxu0
      %v5836 = vpop.f32.mrf.mxu0
      %v5837 = vadd.f32 %v5676, %v5836
      %v5838 = vpop.f32.mrf.mxu0
      %5839 = vmatprep.mubr.bf16.mxu0 %v4328
      %5840 = vmatmul.mubr.bf16.gmra.mxu0 %v4180
      %v5841 = vpop.f32.mrf.mxu0
      %v5842 = vadd.f32 %v5681, %v5841
      %v5843 = vpop.f32.mrf.mxu0
      %v5844 = vpop.f32.mrf.mxu0
      %v5845 = vadd.f32 %v5684, %v5844
      %v5846 = vpop.f32.mrf.mxu0
      %5847 = vmatprep.mubr.bf16.mxu0 %v4331
      %5848 = vmatmul.mubr.bf16.gmra.mxu0 %v4192
      %v5849 = vpop.f32.mrf.mxu0
      %v5850 = vadd.f32 %v5689, %v5849
      %v5851 = vpop.f32.mrf.mxu0
      %v5852 = vpop.f32.mrf.mxu0
      %v5853 = vadd.f32 %v5692, %v5852
      %v5854 = vpop.f32.mrf.mxu0
      %5855 = vmatprep.mubr.bf16.mxu0 %v4334
      %5856 = vmatmul.mubr.bf16.gmra.mxu0 %v4204
      %v5857 = vpop.f32.mrf.mxu0
      %v5858 = vadd.f32 %v5697, %v5857
      %v5859 = vpop.f32.mrf.mxu0
      %v5860 = vpop.f32.mrf.mxu0
      %v5861 = vadd.f32 %v5700, %v5860
      %v5862 = vpop.f32.mrf.mxu0
      %5863 = vmatprep.mubr.bf16.mxu0 %v4337
      %5864 = vmatmul.mubr.bf16.gmra.mxu0 %v4216
      %v5865 = vpop.f32.mrf.mxu0
      %v5866 = vadd.f32 %v5705, %v5865
      %v5867 = vpop.f32.mrf.mxu0
      %v5868 = vpop.f32.mrf.mxu0
      %v5869 = vadd.f32 %v5708, %v5868
      %v5870 = vpop.f32.mrf.mxu0
      %5871 = vmatprep.mubr.bf16.mxu0 %v4340
      %5872 = vmatmul.mubr.bf16.gmra.mxu0 %v4228
      %v5873 = vpop.f32.mrf.mxu0
      %v5874 = vadd.f32 %v5713, %v5873
      %v5875 = vpop.f32.mrf.mxu0
      %v5876 = vpop.f32.mrf.mxu0
      %v5877 = vadd.f32 %v5716, %v5876
      %v5878 = vpop.f32.mrf.mxu0
      %5879 = vdwg.mxu0
      %5880 = vmatprep.subr.bf16.mxu0 0
      %5881 = vmatpush1.bf16.msra.mxu0 %v5308
      %5882 = vmatprep.subr.bf16.mxu0 0
      %5883 = vmatpush1.bf16.msra.mxu0 %v5307
      %5884 = vmatprep.subr.bf16.mxu0 0
      %5885 = vmatpush1.bf16.msra.mxu0 %v5306
      %5886 = vmatprep.subr.bf16.mxu0 0
      %5887 = vmatpush1.bf16.msra.mxu0 %v5305
      %5888 = vmatprep.subr.bf16.mxu0 0
      %5889 = vmatpush1.bf16.msra.mxu0 %v5304
      %5890 = vmatprep.subr.bf16.mxu0 0
      %5891 = vmatpush1.bf16.msra.mxu0 %v5303
      %5892 = vmatprep.subr.bf16.mxu0 0
      %5893 = vmatpush1.bf16.msra.mxu0 %v5302
      %5894 = vmatprep.subr.bf16.mxu0 0
      %5895 = vmatpush1.bf16.msra.mxu0 %v5301
      %5896 = vmatprep.subr.bf16.mxu0 0
      %5897 = vmatpush2.bf16.msra.mxu0 %v5316
      %5898 = vmatprep.subr.bf16.mxu0 0
      %5899 = vmatpush2.bf16.msra.mxu0 %v5315
      %5900 = vmatprep.subr.bf16.mxu0 0
      %5901 = vmatpush2.bf16.msra.mxu0 %v5314
      %5902 = vmatprep.subr.bf16.mxu0 0
      %5903 = vmatpush2.bf16.msra.mxu0 %v5313
      %5904 = vmatprep.subr.bf16.mxu0 0
      %5905 = vmatpush2.bf16.msra.mxu0 %v5312
      %5906 = vmatprep.subr.bf16.mxu0 0
      %5907 = vmatpush2.bf16.msra.mxu0 %v5311
      %5908 = vmatprep.subr.bf16.mxu0 0
      %5909 = vmatpush2.bf16.msra.mxu0 %v5310
      %5910 = vmatprep.subr.bf16.mxu0 0
      %5911 = vmatpush2.bf16.msra.mxu0 %v5309
      %5912 = vmatprep.mubr.bf16.mxu0 %v4512
      %5913 = vmatmul.mubr.bf16.gmra.mxu0 %v4421
      %v5914 = vpop.f32.mrf.mxu0
      %v5915 = vadd.f32 %v5754, %v5914
      %v5916 = vpop.f32.mrf.mxu0
      %v5917 = vpop.f32.mrf.mxu0
      %v5918 = vadd.f32 %v5757, %v5917
      %v5919 = vpop.f32.mrf.mxu0
      %5920 = vmatprep.mubr.bf16.mxu0 %v4524
      %5921 = vmatmul.mubr.bf16.gmra.mxu0 %v4422
      %v5922 = vpop.f32.mrf.mxu0
      %v5923 = vadd.f32 %v5762, %v5922
      %v5924 = vpop.f32.mrf.mxu0
      %v5925 = vpop.f32.mrf.mxu0
      %v5926 = vadd.f32 %v5765, %v5925
      %v5927 = vpop.f32.mrf.mxu0
      %5928 = vmatprep.mubr.bf16.mxu0 %v4536
      %5929 = vmatmul.mubr.bf16.gmra.mxu0 %v4423
      %v5930 = vpop.f32.mrf.mxu0
      %v5931 = vadd.f32 %v5770, %v5930
      %v5932 = vpop.f32.mrf.mxu0
      %v5933 = vpop.f32.mrf.mxu0
      %v5934 = vadd.f32 %v5773, %v5933
      %v5935 = vpop.f32.mrf.mxu0
      %5936 = vmatprep.mubr.bf16.mxu0 %v4548
      %5937 = vmatmul.mubr.bf16.gmra.mxu0 %v4424
      %v5938 = vpop.f32.mrf.mxu0
      %v5939 = vadd.f32 %v5778, %v5938
      %v5940 = vpop.f32.mrf.mxu0
      %v5941 = vpop.f32.mrf.mxu0
      %v5942 = vadd.f32 %v5781, %v5941
      %v5943 = vpop.f32.mrf.mxu0
      %5944 = vmatprep.mubr.bf16.mxu0 %v4560
      %5945 = vmatmul.mubr.bf16.gmra.mxu0 %v4425
      %v5946 = vpop.f32.mrf.mxu0
      %v5947 = vadd.f32 %v5786, %v5946
      %v5948 = vpop.f32.mrf.mxu0
      %v5949 = vpop.f32.mrf.mxu0
      %v5950 = vadd.f32 %v5789, %v5949
      %v5951 = vpop.f32.mrf.mxu0
      %5952 = vmatprep.mubr.bf16.mxu0 %v4572
      %5953 = vmatmul.mubr.bf16.gmra.mxu0 %v4426
      %v5954 = vpop.f32.mrf.mxu0
      %v5955 = vadd.f32 %v5794, %v5954
      %v5956 = vpop.f32.mrf.mxu0
      %v5957 = vpop.f32.mrf.mxu0
      %v5958 = vadd.f32 %v5797, %v5957
      %v5959 = vpop.f32.mrf.mxu0
      %5960 = vmatprep.mubr.bf16.mxu0 %v4584
      %5961 = vmatmul.mubr.bf16.gmra.mxu0 %v4427
      %v5962 = vpop.f32.mrf.mxu0
      %v5963 = vadd.f32 %v5802, %v5962
      %v5964 = vpop.f32.mrf.mxu0
      %v5965 = vpop.f32.mrf.mxu0
      %v5966 = vadd.f32 %v5805, %v5965
      %v5967 = vpop.f32.mrf.mxu0
      %5968 = vmatprep.mubr.bf16.mxu0 %v4596
      %5969 = vmatmul.mubr.bf16.gmra.mxu0 %v4428
      %v5970 = vpop.f32.mrf.mxu0
      %v5971 = vadd.f32 %v5810, %v5970
      %v5972 = vpop.f32.mrf.mxu0
      %v5973 = vpop.f32.mrf.mxu0
      %v5974 = vadd.f32 %v5813, %v5973
      %v5975 = vpop.f32.mrf.mxu0
      %5976 = vmatprep.mubr.bf16.mxu0 %v4608
      %5977 = vmatmul.mubr.bf16.gmra.mxu0 %v4429
      %v5978 = vpop.f32.mrf.mxu0
      %v5979 = vadd.f32 %v5818, %v5978
      %v5980 = vpop.f32.mrf.mxu0
      %v5981 = vpop.f32.mrf.mxu0
      %v5982 = vadd.f32 %v5821, %v5981
      %v5983 = vpop.f32.mrf.mxu0
      %5984 = vmatprep.mubr.bf16.mxu0 %v4620
      %5985 = vmatmul.mubr.bf16.gmra.mxu0 %v4430
      %v5986 = vpop.f32.mrf.mxu0
      %v5987 = vadd.f32 %v5826, %v5986
      %v5988 = vpop.f32.mrf.mxu0
      %v5989 = vpop.f32.mrf.mxu0
      %v5990 = vadd.f32 %v5829, %v5989
      %v5991 = vpop.f32.mrf.mxu0
      %5992 = vmatprep.mubr.bf16.mxu0 %v4632
      %5993 = vmatmul.mubr.bf16.gmra.mxu0 %v4431
      %v5994 = vpop.f32.mrf.mxu0
      %v5995 = vadd.f32 %v5834, %v5994
      %v5996 = vpop.f32.mrf.mxu0
      %v5997 = vpop.f32.mrf.mxu0
      %v5998 = vadd.f32 %v5837, %v5997
      %v5999 = vpop.f32.mrf.mxu0
      %6000 = vmatprep.mubr.bf16.mxu0 %v4644
      %6001 = vmatmul.mubr.bf16.gmra.mxu0 %v4432
      %v6002 = vpop.f32.mrf.mxu0
      %v6003 = vadd.f32 %v5842, %v6002
      %v6004 = vpop.f32.mrf.mxu0
      %v6005 = vpop.f32.mrf.mxu0
      %v6006 = vadd.f32 %v5845, %v6005
      %v6007 = vpop.f32.mrf.mxu0
      %6008 = vmatprep.mubr.bf16.mxu0 %v4656
      %6009 = vmatmul.mubr.bf16.gmra.mxu0 %v4433
      %v6010 = vpop.f32.mrf.mxu0
      %v6011 = vadd.f32 %v5850, %v6010
      %v6012 = vpop.f32.mrf.mxu0
      %v6013 = vpop.f32.mrf.mxu0
      %v6014 = vadd.f32 %v5853, %v6013
      %v6015 = vpop.f32.mrf.mxu0
      %6016 = vmatprep.mubr.bf16.mxu0 %v4668
      %6017 = vmatmul.mubr.bf16.gmra.mxu0 %v4434
      %v6018 = vpop.f32.mrf.mxu0
      %v6019 = vadd.f32 %v5858, %v6018
      %v6020 = vpop.f32.mrf.mxu0
      %v6021 = vpop.f32.mrf.mxu0
      %v6022 = vadd.f32 %v5861, %v6021
      %v6023 = vpop.f32.mrf.mxu0
      %6024 = vmatprep.mubr.bf16.mxu0 %v4680
      %6025 = vmatmul.mubr.bf16.gmra.mxu0 %v4435
      %v6026 = vpop.f32.mrf.mxu0
      %v6027 = vadd.f32 %v5866, %v6026
      %v6028 = vpop.f32.mrf.mxu0
      %v6029 = vpop.f32.mrf.mxu0
      %v6030 = vadd.f32 %v5869, %v6029
      %v6031 = vpop.f32.mrf.mxu0
      %6032 = vmatprep.mubr.bf16.mxu0 %v4692
      %6033 = vmatmul.mubr.bf16.gmra.mxu0 %v4436
      %v6034 = vpop.f32.mrf.mxu0
      %v6035 = vadd.f32 %v5874, %v6034
      %v6036 = vpop.f32.mrf.mxu0
      %v6037 = vpop.f32.mrf.mxu0
      %v6038 = vadd.f32 %v5877, %v6037
      %v6039 = vpop.f32.mrf.mxu0
      %6040 = vdwg.mxu0
      %6041 = vmatprep.subr.bf16.mxu0 0
      %6042 = vmatpush1.bf16.msra.mxu0 %v5324
      %6043 = vmatprep.subr.bf16.mxu0 0
      %6044 = vmatpush1.bf16.msra.mxu0 %v5323
      %6045 = vmatprep.subr.bf16.mxu0 0
      %6046 = vmatpush1.bf16.msra.mxu0 %v5322
      %6047 = vmatprep.subr.bf16.mxu0 0
      %6048 = vmatpush1.bf16.msra.mxu0 %v5321
      %6049 = vmatprep.subr.bf16.mxu0 0
      %6050 = vmatpush1.bf16.msra.mxu0 %v5320
      %6051 = vmatprep.subr.bf16.mxu0 0
      %6052 = vmatpush1.bf16.msra.mxu0 %v5319
      %6053 = vmatprep.subr.bf16.mxu0 0
      %6054 = vmatpush1.bf16.msra.mxu0 %v5318
      %6055 = vmatprep.subr.bf16.mxu0 0
      %6056 = vmatpush1.bf16.msra.mxu0 %v5317
      %6057 = vmatprep.subr.bf16.mxu0 0
      %6058 = vmatpush2.bf16.msra.mxu0 0
      %6059 = vmatprep.subr.bf16.mxu0 0
      %6060 = vmatpush2.bf16.msra.mxu0 0
      %6061 = vmatprep.subr.bf16.mxu0 0
      %6062 = vmatpush2.bf16.msra.mxu0 0
      %6063 = vmatprep.subr.bf16.mxu0 0
      %6064 = vmatpush2.bf16.msra.mxu0 0
      %6065 = vmatprep.subr.bf16.mxu0 0
      %6066 = vmatpush2.bf16.msra.mxu0 0
      %6067 = vmatprep.subr.bf16.mxu0 0
      %6068 = vmatpush2.bf16.msra.mxu0 0
      %6069 = vmatprep.subr.bf16.mxu0 0
      %6070 = vmatpush2.bf16.msra.mxu0 0
      %6071 = vmatprep.subr.bf16.mxu0 0
      %6072 = vmatpush2.bf16.msra.mxu0 0
      %6073 = vmatprep.mubr.bf16.mxu0 0
      %6074 = vmatmul.mubr.bf16.gmra.mxu0 %v4759
      %v6075 = vpop.f32.mrf.mxu0
      %v6076 = vadd.f32 %v5915, %v6075
      %v6077 = vpop.f32.mrf.mxu0
      %v6078 = vpop.f32.mrf.mxu0
      %v6079 = vadd.f32 %v5918, %v6078
      %v6080 = vpop.f32.mrf.mxu0
      %6081 = vmatprep.mubr.bf16.mxu0 0
      %6082 = vmatmul.mubr.bf16.gmra.mxu0 %v4762
      %v6083 = vpop.f32.mrf.mxu0
      %v6084 = vadd.f32 %v5923, %v6083
      %v6085 = vpop.f32.mrf.mxu0
      %v6086 = vpop.f32.mrf.mxu0
      %v6087 = vadd.f32 %v5926, %v6086
      %v6088 = vpop.f32.mrf.mxu0
      %6089 = vmatprep.mubr.bf16.mxu0 0
      %6090 = vmatmul.mubr.bf16.gmra.mxu0 %v4765
      %v6091 = vpop.f32.mrf.mxu0
      %v6092 = vadd.f32 %v5931, %v6091
      %v6093 = vpop.f32.mrf.mxu0
      %v6094 = vpop.f32.mrf.mxu0
      %v6095 = vadd.f32 %v5934, %v6094
      %v6096 = vpop.f32.mrf.mxu0
      %6097 = vmatprep.mubr.bf16.mxu0 0
      %6098 = vmatmul.mubr.bf16.gmra.mxu0 %v4768
      %v6099 = vpop.f32.mrf.mxu0
      %v6100 = vadd.f32 %v5939, %v6099
      %v6101 = vpop.f32.mrf.mxu0
      %v6102 = vpop.f32.mrf.mxu0
      %v6103 = vadd.f32 %v5942, %v6102
      %v6104 = vpop.f32.mrf.mxu0
      %6105 = vmatprep.mubr.bf16.mxu0 0
      %6106 = vmatmul.mubr.bf16.gmra.mxu0 %v4771
      %v6107 = vpop.f32.mrf.mxu0
      %v6108 = vadd.f32 %v5947, %v6107
      %v6109 = vpop.f32.mrf.mxu0
      %v6110 = vpop.f32.mrf.mxu0
      %v6111 = vadd.f32 %v5950, %v6110
      %v6112 = vpop.f32.mrf.mxu0
      %6113 = vmatprep.mubr.bf16.mxu0 0
      %6114 = vmatmul.mubr.bf16.gmra.mxu0 %v4774
      %v6115 = vpop.f32.mrf.mxu0
      %v6116 = vadd.f32 %v5955, %v6115
      %v6117 = vpop.f32.mrf.mxu0
      %v6118 = vpop.f32.mrf.mxu0
      %v6119 = vadd.f32 %v5958, %v6118
      %v6120 = vpop.f32.mrf.mxu0
      %6121 = vmatprep.mubr.bf16.mxu0 0
      %6122 = vmatmul.mubr.bf16.gmra.mxu0 %v4777
      %v6123 = vpop.f32.mrf.mxu0
      %v6124 = vadd.f32 %v5963, %v6123
      %v6125 = vpop.f32.mrf.mxu0
      %v6126 = vpop.f32.mrf.mxu0
      %v6127 = vadd.f32 %v5966, %v6126
      %v6128 = vpop.f32.mrf.mxu0
      %6129 = vmatprep.mubr.bf16.mxu0 0
      %6130 = vmatmul.mubr.bf16.gmra.mxu0 %v4780
      %v6131 = vpop.f32.mrf.mxu0
      %v6132 = vadd.f32 %v5971, %v6131
      %v6133 = vpop.f32.mrf.mxu0
      %v6134 = vpop.f32.mrf.mxu0
      %v6135 = vadd.f32 %v5974, %v6134
      %v6136 = vpop.f32.mrf.mxu0
      %6137 = vmatprep.mubr.bf16.mxu0 0
      %6138 = vmatmul.mubr.bf16.gmra.mxu0 %v4783
      %v6139 = vpop.f32.mrf.mxu0
      %v6140 = vadd.f32 %v5979, %v6139
      %v6141 = vpop.f32.mrf.mxu0
      %v6142 = vpop.f32.mrf.mxu0
      %v6143 = vadd.f32 %v5982, %v6142
      %v6144 = vpop.f32.mrf.mxu0
      %6145 = vmatprep.mubr.bf16.mxu0 0
      %6146 = vmatmul.mubr.bf16.gmra.mxu0 %v4786
      %v6147 = vpop.f32.mrf.mxu0
      %v6148 = vadd.f32 %v5987, %v6147
      %v6149 = vpop.f32.mrf.mxu0
      %v6150 = vpop.f32.mrf.mxu0
      %v6151 = vadd.f32 %v5990, %v6150
      %v6152 = vpop.f32.mrf.mxu0
      %6153 = vmatprep.mubr.bf16.mxu0 0
      %6154 = vmatmul.mubr.bf16.gmra.mxu0 %v4789
      %v6155 = vpop.f32.mrf.mxu0
      %v6156 = vadd.f32 %v5995, %v6155
      %v6157 = vpop.f32.mrf.mxu0
      %v6158 = vpop.f32.mrf.mxu0
      %v6159 = vadd.f32 %v5998, %v6158
      %v6160 = vpop.f32.mrf.mxu0
      %6161 = vmatprep.mubr.bf16.mxu0 0
      %6162 = vmatmul.mubr.bf16.gmra.mxu0 %v4792
      %v6163 = vpop.f32.mrf.mxu0
      %v6164 = vadd.f32 %v6003, %v6163
      %v6165 = vpop.f32.mrf.mxu0
      %v6166 = vpop.f32.mrf.mxu0
      %v6167 = vadd.f32 %v6006, %v6166
      %v6168 = vpop.f32.mrf.mxu0
      %6169 = vmatprep.mubr.bf16.mxu0 0
      %6170 = vmatmul.mubr.bf16.gmra.mxu0 %v4795
      %v6171 = vpop.f32.mrf.mxu0
      %v6172 = vadd.f32 %v6011, %v6171
      %v6173 = vpop.f32.mrf.mxu0
      %v6174 = vpop.f32.mrf.mxu0
      %v6175 = vadd.f32 %v6014, %v6174
      %v6176 = vpop.f32.mrf.mxu0
      %6177 = vmatprep.mubr.bf16.mxu0 0
      %6178 = vmatmul.mubr.bf16.gmra.mxu0 %v4798
      %v6179 = vpop.f32.mrf.mxu0
      %v6180 = vadd.f32 %v6019, %v6179
      %v6181 = vpop.f32.mrf.mxu0
      %v6182 = vpop.f32.mrf.mxu0
      %v6183 = vadd.f32 %v6022, %v6182
      %v6184 = vpop.f32.mrf.mxu0
      %6185 = vmatprep.mubr.bf16.mxu0 0
      %6186 = vmatmul.mubr.bf16.gmra.mxu0 %v4801
      %v6187 = vpop.f32.mrf.mxu0
      %v6188 = vadd.f32 %v6027, %v6187
      %v6189 = vpop.f32.mrf.mxu0
      %v6190 = vpop.f32.mrf.mxu0
      %v6191 = vadd.f32 %v6030, %v6190
      %v6192 = vpop.f32.mrf.mxu0
      %6193 = vmatprep.mubr.bf16.mxu0 0
      %6194 = vmatmul.mubr.bf16.gmra.mxu0 %v4804
      %v6195 = vpop.f32.mrf.mxu0
      %v6196 = vadd.f32 %v6035, %v6195
      %v6197 = vpop.f32.mrf.mxu0
      %v6198 = vpop.f32.mrf.mxu0
      %v6199 = vadd.f32 %v6038, %v6198
      %v6200 = vpop.f32.mrf.mxu0
      %6201 = vdwg.mxu0
      %v6202 = vadd.f32 %v6076, %v6079
      %v6203 = vadd.f32 %v6202, %v6084
      %v6204 = vadd.f32 %v6203, %v6087
      %v6205 = vadd.f32 %v6204, %v6092
      %v6206 = vadd.f32 %v6205, %v6095
      %v6207 = vadd.f32 %v6206, %v6100
      %v6208 = vadd.f32 %v6207, %v6103
      %v6209 = vadd.f32 %v6208, %v6108
      %v6210 = vadd.f32 %v6209, %v6111
      %v6211 = vadd.f32 %v6210, %v6116
      %v6212 = vadd.f32 %v6211, %v6119
      %v6213 = vadd.f32 %v6212, %v6124
      %v6214 = vadd.f32 %v6213, %v6127
      %v6215 = vadd.f32 %v6214, %v6132
      %v6216 = vadd.f32 %v6215, %v6135
      %v6217 = vadd.f32 %v6216, %v6140
      %v6218 = vadd.f32 %v6217, %v6143
      %v6219 = vadd.f32 %v6218, %v6148
      %v6220 = vadd.f32 %v6219, %v6151
      %v6221 = vadd.f32 %v6220, %v6156
      %v6222 = vadd.f32 %v6221, %v6159
      %v6223 = vadd.f32 %v6222, %v6164
      %v6224 = vadd.f32 %v6223, %v6167
      %v6225 = vadd.f32 %v6224, %v6172
      %v6226 = vadd.f32 %v6225, %v6175
      %v6227 = vadd.f32 %v6226, %v6180
      %v6228 = vadd.f32 %v6227, %v6183
      %v6229 = vadd.f32 %v6228, %v6188
      %v6230 = vadd.f32 %v6229, %v6191
      %v6231 = vadd.f32 %v6230, %v6196
      %v6232 = vadd.f32 %v6231, %v6199
      %v6233 = vrot.slane %v6232, 4
      %v6234 = vadd.f32 %v6232, %v6233
      %v6235 = vrot.slane %v6234, 2
      %v6236 = vadd.f32 %v6234, %v6235
      %v6237 = vrot.slane %v6236, 1
      %v6238 = vadd.f32 %v6236, %v6237
      %v6239 = vmul.f32 %v6076, %v6076
      %v6240 = vmul.f32 %v6079, %v6079
      %v6241 = vmul.f32 %v6084, %v6084
      %v6242 = vmul.f32 %v6087, %v6087
      %v6243 = vmul.f32 %v6092, %v6092
      %v6244 = vmul.f32 %v6095, %v6095
      %v6245 = vmul.f32 %v6100, %v6100
      %v6246 = vmul.f32 %v6103, %v6103
      %v6247 = vmul.f32 %v6108, %v6108
      %v6248 = vmul.f32 %v6111, %v6111
      %v6249 = vmul.f32 %v6116, %v6116
      %v6250 = vmul.f32 %v6119, %v6119
      %v6251 = vmul.f32 %v6124, %v6124
      %v6252 = vmul.f32 %v6127, %v6127
      %v6253 = vmul.f32 %v6132, %v6132
      %v6254 = vmul.f32 %v6135, %v6135
      %v6255 = vmul.f32 %v6140, %v6140
      %v6256 = vmul.f32 %v6143, %v6143
      %v6257 = vmul.f32 %v6148, %v6148
      %v6258 = vmul.f32 %v6151, %v6151
      %v6259 = vmul.f32 %v6156, %v6156
      %v6260 = vmul.f32 %v6159, %v6159
      %v6261 = vmul.f32 %v6164, %v6164
      %v6262 = vmul.f32 %v6167, %v6167
      %v6263 = vmul.f32 %v6172, %v6172
      %v6264 = vmul.f32 %v6175, %v6175
      %v6265 = vmul.f32 %v6180, %v6180
      %v6266 = vmul.f32 %v6183, %v6183
      %v6267 = vmul.f32 %v6188, %v6188
      %v6268 = vmul.f32 %v6191, %v6191
      %v6269 = vmul.f32 %v6196, %v6196
      %v6270 = vmul.f32 %v6199, %v6199
      %v6271 = vadd.f32 %v6239, %v6240
      %v6272 = vadd.f32 %v6271, %v6241
      %v6273 = vadd.f32 %v6272, %v6242
      %v6274 = vadd.f32 %v6273, %v6243
      %v6275 = vadd.f32 %v6274, %v6244
      %v6276 = vadd.f32 %v6275, %v6245
      %v6277 = vadd.f32 %v6276, %v6246
      %v6278 = vadd.f32 %v6277, %v6247
      %v6279 = vadd.f32 %v6278, %v6248
      %v6280 = vadd.f32 %v6279, %v6249
      %v6281 = vadd.f32 %v6280, %v6250
      %v6282 = vadd.f32 %v6281, %v6251
      %v6283 = vadd.f32 %v6282, %v6252
      %v6284 = vadd.f32 %v6283, %v6253
      %v6285 = vadd.f32 %v6284, %v6254
      %v6286 = vadd.f32 %v6285, %v6255
      %v6287 = vadd.f32 %v6286, %v6256
      %v6288 = vadd.f32 %v6287, %v6257
      %v6289 = vadd.f32 %v6288, %v6258
      %v6290 = vadd.f32 %v6289, %v6259
      %v6291 = vadd.f32 %v6290, %v6260
      %v6292 = vadd.f32 %v6291, %v6261
      %v6293 = vadd.f32 %v6292, %v6262
      %v6294 = vadd.f32 %v6293, %v6263
      %v6295 = vadd.f32 %v6294, %v6264
      %v6296 = vadd.f32 %v6295, %v6265
      %v6297 = vadd.f32 %v6296, %v6266
      %v6298 = vadd.f32 %v6297, %v6267
      %v6299 = vadd.f32 %v6298, %v6268
      %v6300 = vadd.f32 %v6299, %v6269
      %v6301 = vadd.f32 %v6300, %v6270
      %v6302 = vrot.slane %v6301, 4
      %v6303 = vadd.f32 %v6301, %v6302
      %v6304 = vrot.slane %v6303, 2
      %v6305 = vadd.f32 %v6303, %v6304
      %v6306 = vrot.slane %v6305, 1
      %v6307 = vadd.f32 %v6305, %v6306
      %vm6308 = vcmask 1040384
      %v6309 = vsel %vm6308, %v6238, %v6307
      %vm6310 = vcmask 1041408
      %v6311 = vsel %vm6310, %v6309, 0.0
      %6312 = vst [vmem:[%s208] sm:$0xff] %v6311
      %v6313 = vpack.c.bf16 %v6079, %v6076
      %v6314 = vpack.c.bf16 %v6087, %v6084
      %v6315 = vpack.c.bf16 %v6095, %v6092
      %v6316 = vpack.c.bf16 %v6103, %v6100
      %v6317 = vpack.c.bf16 %v6111, %v6108
      %v6318 = vpack.c.bf16 %v6119, %v6116
      %v6319 = vpack.c.bf16 %v6127, %v6124
      %v6320 = vpack.c.bf16 %v6135, %v6132
      %v6321 = vpack.c.bf16 %v6143, %v6140
      %v6322 = vpack.c.bf16 %v6151, %v6148
      %v6323 = vpack.c.bf16 %v6159, %v6156
      %v6324 = vpack.c.bf16 %v6167, %v6164
      %v6325 = vpack.c.bf16 %v6175, %v6172
      %v6326 = vpack.c.bf16 %v6183, %v6180
      %v6327 = vpack.c.bf16 %v6191, %v6188
      %v6328 = vpack.c.bf16 %v6199, %v6196
      %v6345 = vunpack.c.l.b16 %v6313
      %v6346 = vunpack.c.h.b16 %v6313
      %v6347 = vunpack.c.l.b16 %v6314
      %v6348 = vunpack.c.h.b16 %v6314
      %v6349 = vunpack.c.l.b16 %v6315
      %v6350 = vunpack.c.h.b16 %v6315
      %v6351 = vunpack.c.l.b16 %v6316
      %v6352 = vunpack.c.h.b16 %v6316
      %v6353 = vunpack.c.l.b16 %v6317
      %v6354 = vunpack.c.h.b16 %v6317
      %v6355 = vunpack.c.l.b16 %v6318
      %v6356 = vunpack.c.h.b16 %v6318
      %v6357 = vunpack.c.l.b16 %v6319
      %v6358 = vunpack.c.h.b16 %v6319
      %v6359 = vunpack.c.l.b16 %v6320
      %v6360 = vunpack.c.h.b16 %v6320
      %v6361 = vunpack.c.l.b16 %v6321
      %v6362 = vunpack.c.h.b16 %v6321
      %v6363 = vunpack.c.l.b16 %v6322
      %v6364 = vunpack.c.h.b16 %v6322
      %v6365 = vunpack.c.l.b16 %v6323
      %v6366 = vunpack.c.h.b16 %v6323
      %v6367 = vunpack.c.l.b16 %v6324
      %v6368 = vunpack.c.h.b16 %v6324
      %v6369 = vunpack.c.l.b16 %v6325
      %v6370 = vunpack.c.h.b16 %v6325
      %v6371 = vunpack.c.l.b16 %v6326
      %v6372 = vunpack.c.h.b16 %v6326
      %v6373 = vunpack.c.l.b16 %v6327
      %v6374 = vunpack.c.h.b16 %v6327
      %v6375 = vunpack.c.l.b16 %v6328
      %v6376 = vunpack.c.h.b16 %v6328
      %v6377 = vpack.c.b16 %v6345, %v6345
      %v6378 = vpack.c.b16 %v6346, %v6346
      %v6379 = vpack.c.b16 %v6347, %v6347
      %v6380 = vpack.c.b16 %v6348, %v6348
      %v6381 = vpack.c.b16 %v6349, %v6349
      %v6382 = vpack.c.b16 %v6350, %v6350
      %v6383 = vpack.c.b16 %v6351, %v6351
      %v6384 = vpack.c.b16 %v6352, %v6352
      %v6385 = vpack.c.b16 %v6353, %v6353
      %v6386 = vpack.c.b16 %v6354, %v6354
      %v6387 = vpack.c.b16 %v6355, %v6355
      %v6388 = vpack.c.b16 %v6356, %v6356
      %v6389 = vpack.c.b16 %v6357, %v6357
      %v6390 = vpack.c.b16 %v6358, %v6358
      %v6391 = vpack.c.b16 %v6359, %v6359
      %v6392 = vpack.c.b16 %v6360, %v6360
      %v6393 = vpack.c.b16 %v6361, %v6361
      %v6394 = vpack.c.b16 %v6362, %v6362
      %v6395 = vpack.c.b16 %v6363, %v6363
      %v6396 = vpack.c.b16 %v6364, %v6364
      %v6397 = vpack.c.b16 %v6365, %v6365
      %v6398 = vpack.c.b16 %v6366, %v6366
      %v6399 = vpack.c.b16 %v6367, %v6367
      %v6400 = vpack.c.b16 %v6368, %v6368
      %v6401 = vpack.c.b16 %v6369, %v6369
      %v6402 = vpack.c.b16 %v6370, %v6370
      %v6403 = vpack.c.b16 %v6371, %v6371
      %v6404 = vpack.c.b16 %v6372, %v6372
      %v6405 = vpack.c.b16 %v6373, %v6373
      %v6406 = vpack.c.b16 %v6374, %v6374
      %v6407 = vpack.c.b16 %v6375, %v6375
      %v6408 = vpack.c.b16 %v6376, %v6376
      %6441 = vst [vmem:[%s204] sm:$0xf] %v6377
      %6442 = vst [vmem:[%s204 + $0x4] sm:$0xf] %v6378
      %6443 = vst [vmem:[%s204 + $0x8] sm:$0xf] %v6379
      %6444 = vst [vmem:[%s204 + $0xc] sm:$0xf] %v6380
      %6445 = vst [vmem:[%s204 + $0x10] sm:$0xf] %v6381
      %6446 = vst [vmem:[%s204 + $0x14] sm:$0xf] %v6382
      %6447 = vst [vmem:[%s204 + $0x18] sm:$0xf] %v6383
      %6448 = vst [vmem:[%s204 + $0x1c] sm:$0xf] %v6384
      %6449 = vst [vmem:[%s204 + $0x20] sm:$0xf] %v6385
      %6450 = vst [vmem:[%s204 + $0x24] sm:$0xf] %v6386
      %6451 = vst [vmem:[%s204 + $0x28] sm:$0xf] %v6387
      %6452 = vst [vmem:[%s204 + $0x2c] sm:$0xf] %v6388
      %6453 = vst [vmem:[%s204 + $0x30] sm:$0xf] %v6389
      %6454 = vst [vmem:[%s204 + $0x34] sm:$0xf] %v6390
      %6455 = vst [vmem:[%s204 + $0x38] sm:$0xf] %v6391
      %6456 = vst [vmem:[%s204 + $0x3c] sm:$0xf] %v6392
      %6457 = vst [vmem:[%s204 + $0x40] sm:$0xf] %v6393
      %6458 = vst [vmem:[%s204 + $0x44] sm:$0xf] %v6394
      %6459 = vst [vmem:[%s204 + $0x48] sm:$0xf] %v6395
      %6460 = vst [vmem:[%s204 + $0x4c] sm:$0xf] %v6396
      %6461 = vst [vmem:[%s204 + $0x50] sm:$0xf] %v6397
      %6462 = vst [vmem:[%s204 + $0x54] sm:$0xf] %v6398
      %6463 = vst [vmem:[%s204 + $0x58] sm:$0xf] %v6399
      %6464 = vst [vmem:[%s204 + $0x5c] sm:$0xf] %v6400
      %6465 = vst [vmem:[%s204 + $0x60] sm:$0xf] %v6401
      %6466 = vst [vmem:[%s204 + $0x64] sm:$0xf] %v6402
      %6467 = vst [vmem:[%s204 + $0x68] sm:$0xf] %v6403
      %6468 = vst [vmem:[%s204 + $0x6c] sm:$0xf] %v6404
      %6469 = vst [vmem:[%s204 + $0x70] sm:$0xf] %v6405
      %6470 = vst [vmem:[%s204 + $0x74] sm:$0xf] %v6406
      %6471 = vst [vmem:[%s204 + $0x78] sm:$0xf] %v6407
      %6472 = vst [vmem:[%s204 + $0x7c] sm:$0xf] %v6408
      %p6473 = scmp.lt.s32.totalorder %s16, 1
      %s6474 = scalar_select %p6473, %s16, 1
      %s6475 = smul.addr %s6474, 32
      %s6476 = smul.addr %s6475, 4
      %s6477 = scalar_lea.vmem %s3, %s6476
      %p6478 = scmp.lt.s32.totalorder %s16, 1
      %s6479 = scalar_select %p6478, %s16, 1
      %s6480 = smul.addr %s6479, 8
      %s6481 = scalar_lea.vmem %s4, %s6480
      // Predicated region
      $region33: #{basic_block_forward.2} parent=31 // pred_check
        %p6482 = pneg %p102
      $region34: #{basic_block_forward.2} parent=31 // pred_check_branch
        %6484 = sbr.rel (%p6482) target = $region36
      $region35: #{basic_block_forward.2} parent=31 // pred_region
        _
      $region36: #{basic_block_forward.2} parent=31 // pred_fallthru
        _
      // Predicated region
      $region37: #{basic_block_forward.2} parent=31 // pred_check
        %p6485 = pneg %p128
      $region38: #{basic_block_forward.2} parent=31 // pred_check_branch
        %6487 = sbr.rel (%p6485) target = $region40
      $region39: #{basic_block_forward.2} parent=31 // pred_region
        _
      $region40: #{basic_block_forward.2} parent=31 // pred_fallthru
        _
    $region32: #{basic_block_forward.2} parent=5 // pred_fallthru
      _
    %p6488 = scmp.le.s32.totalorder 2, %s11
    // Predicated region
    $region41: #{basic_block_forward.2} parent=5 // pred_check
      %p6489 = pneg %p6488
    $region42: #{basic_block_forward.2} parent=5 // pred_check_branch
      %6491 = sbr.rel (%p6489) target = $region44
    $region43: #{basic_block_forward.2} parent=5 // pred_region
      %s6492 = ssub.s32 %s11, 2
      // Predicated region
      $region45: #{basic_block_forward.2} parent=43 // pred_check
        %p6493 = pneg %p108
      $region46: #{basic_block_forward.2} parent=43 // pred_check_branch
        %6495 = sbr.rel (%p6493) target = $region48
      $region47: #{basic_block_forward.2} parent=43 // pred_region
        %p6496 = scmp.lt.s32.totalorder %s17, 1
        %s6497 = scalar_select %p6496, %s17, 1
        %s6498 = smul.addr %s6497, 32
        %s6499 = smul.addr %s6498, 4
        %s6500 = scalar_lea.vmem %s3, %s6499
      $region48: #{basic_block_forward.2} parent=43 // pred_fallthru
        _
      // Predicated region
      $region49: #{basic_block_forward.2} parent=43 // pred_check
        %p6501 = pneg %p134
      $region50: #{basic_block_forward.2} parent=43 // pred_check_branch
        %6503 = sbr.rel (%p6501) target = $region52
      $region51: #{basic_block_forward.2} parent=43 // pred_region
        %p6504 = scmp.lt.s32.totalorder %s17, 1
        %s6505 = scalar_select %p6504, %s17, 1
        %s6506 = smul.addr %s6505, 8
        %s6507 = scalar_lea.vmem %s4, %s6506
      $region52: #{basic_block_forward.2} parent=43 // pred_fallthru
        _
    $region44: #{basic_block_forward.2} parent=5 // pred_fallthru
      _
  $region6: #{basic_block_forward.2} parent=0 // loop_footer
    %s15 = sadd.s32 1, %s11
  $region7: #{basic_block_forward.2} parent=0 // loop_footer_branch
    %10 = sbr.rel target = $region3
  $region8: #{basic_block_forward.2} parent=0 // loop_exit
    _

</llo_original>
